<compile_context>
chip_gen: v7x
topology: tpu7x:2x2x1
jax: 0.10.0
libtpu: 0.0.40
codegen_flags: <defaults>
</compile_context>

<pallas_src>
import functools

import jax
import jax.numpy as jnp
from jax.experimental import pallas as pl
from jax.experimental.pallas import tpu as pltpu


_S = 8  # scratch head rows so conv2's "-1" corner tap stays in bounds


def _round_up(x, m):
    return (x + m - 1) // m * m


def _tpu_vmem_capacity():
    try:
        return int(pltpu.get_tpu_info().vmem_capacity_bytes)
    except Exception:
        return 64 * 1024 * 1024


def _step_footprint_bytes(th, Wp, cin, cm, cout):
    """Conservative per-grid-step VMEM estimate (lane-padded, double-buffered)."""
    lane = lambda c: _round_up(max(c, 1), 128)
    LT = _round_up((th + 5) * Wp, 8)
    Q1 = (th + 2) * Wp
    Q2 = th * Wp
    LM = _round_up(_S + Q1 + 8, 8)
    b = 0
    b += 2 * LT * lane(cin) * 2                                # input tile bf16
    b += 2 * Q2 * lane(cout) * 2                               # output tile bf16
    b += 2 * (9 * cin * lane(cm) + 9 * cm * lane(cout)) * 2    # weights bf16
    b += LM * lane(cm) * 2                                     # mid scratch bf16
    b += 3 * Q1 * lane(cm) * 4                                 # f32 conv1 temps
    b += 2 * Q2 * lane(cout) * 4                               # f32 conv2 temps
    return b


def _choose_tile_h(H, Wp, cin, cm, cout, tile_h=None):
    if tile_h is not None:
        th = max(8, (int(tile_h) // 8) * 8)
    else:
        cap = _tpu_vmem_capacity()
        budget = min(cap // 3, 24 * 1024 * 1024)
        th = 8
        for cand in (16, 32, 64):
            if _step_footprint_bytes(cand, Wp, cin, cm, cout) <= budget:
                th = cand
    return min(th, max(8, _round_up(H, 8)))


def _vmem_limit_bytes(est):
    cap = _tpu_vmem_capacity()
    return int(min(cap * 3 // 4, max(2 * est + (8 << 20), 32 << 20)))


# ---------------------------------------------------------------------------
# Fused kernel:  cat([x2, x1]) -> conv3x3+ReLU -> conv3x3+ReLU   (one H-tile)
# ---------------------------------------------------------------------------
def _up_block_kernel(x_ref, w1_ref, b1_ref, w2_ref, b2_ref, o_ref, mid_ref,
                     *, H, W, TH, n_tiles):
    # x_ref  : (LT, Cin)        bf16  flat zero-padded input slab for this tile
    #                                 (TH+5 padded rows x (W+2) cols, row-major)
    # w1_ref : (9*Cin, Cm)      bf16  conv1 weight, taps stacked along rows
    # w2_ref : (9*Cm, Cout)     bf16
    # b1/b2  : (1, Cm)/(1,Cout) f32
    # o_ref  : (TH*(W+2), Cout) bf16  output rows for this tile (2 junk cols/row)
    # mid_ref: (LM, Cm)         bf16  VMEM staging of the intermediate activation
    Wp = W + 2
    Q1 = (TH + 2) * Wp            # mid rows computed per tile (incl. +/-1 halo)
    Q2 = TH * Wp                  # output rows per tile
    cin = x_ref.shape[-1]
    cm = w1_ref.shape[-1]
    cout = w2_ref.shape[-1]
    t = pl.program_id(1)

    # ---- conv1: 9 taps, each a (Q1,Cin)x(Cin,Cm) MXU matmul, f32 accumulate.
    acc = jnp.zeros((Q1, cm), jnp.float32)
    for dy in range(3):
        for dx in range(3):
            k = dy * 3 + dx
            off = dy * Wp + dx
            acc = acc + jnp.dot(x_ref[pl.ds(off, Q1), :],
                                w1_ref[pl.ds(k * cin, cin), :],
                                preferred_element_type=jnp.float32)
    mid = jnp.maximum(acc + b1_ref[...], 0.0)

    # Stage the intermediate in VMEM (never written to HBM).
    mid_ref[pl.ds(_S, Q1), :] = mid.astype(mid_ref.dtype)

    # Zero the seam columns (they act as conv2's horizontal zero padding) plus
    # the single scratch cell on each side that conv2's corner taps touch.
    zero2 = jnp.zeros((2, cm), mid_ref.dtype)
    for k in range(TH + 3):
        mid_ref[pl.ds(_S - 1 + k * Wp, 2), :] = zero2

    # Vertical zero padding of conv2: the first tile's top halo row (gm == -1)
    # and every mid row with gm >= H (bottom halo / rows fabricated by the
    # ceil(H/TH) extension) must read as zero.
    @pl.when(t == 0)
    def _():
        mid_ref[pl.ds(_S, Wp), :] = jnp.zeros((Wp, cm), mid_ref.dtype)

    m0 = H - (n_tiles - 1) * TH + 1     # first invalid mid row of the last tile
    @pl.when(t == n_tiles - 1)
    def _():
        mid_ref[pl.ds(_S + m0 * Wp, (TH + 2 - m0) * Wp), :] = (
            jnp.zeros(((TH + 2 - m0) * Wp, cm), mid_ref.dtype))

    # ---- conv2
    acc2 = jnp.zeros((Q2, cout), jnp.float32)
    for dy in range(3):
        for dx in range(3):
            k = dy * 3 + dx
            off = _S - 1 + dy * Wp + dx
            acc2 = acc2 + jnp.dot(mid_ref[pl.ds(off, Q2), :],
                                  w2_ref[pl.ds(k * cm, cm), :],
                                  preferred_element_type=jnp.float32)
    o_ref[...] = jnp.maximum(acc2 + b2_ref[...], 0.0).astype(o_ref.dtype)


def up_double_conv(x2, x1u, params, tile_h=None):
    """Fused cat([x2, x1u], C) -> conv3x3+ReLU -> conv3x3+ReLU.  NHWC in/out."""
    N, H, W, C2 = x2.shape
    N1, H1, W1, C1 = x1u.shape
    assert (N1, H1, W1) == (N, H, W), (x2.shape, x1u.shape)
    cin = C2 + C1
    cm = params["b1"].shape[-1]
    cout = params["b2"].shape[-1]
    Wp = W + 2

    TH = _choose_tile_h(H, Wp, cin, cm, cout, tile_h)
    nt = -(-H // TH)
    Hp = nt * TH
    RT = TH + 5                       # padded input rows needed per tile
    LT = _round_up(RT * Wp, 8)
    Q2 = TH * Wp
    Q1 = (TH + 2) * Wp
    LM = _round_up(_S + Q1 + 8, 8)

    # Materialize the channel concat once (single lane-dense bf16 input stream).
    xcat = jnp.concatenate([x2, x1u], axis=-1)
    # Pad: 2 top rows, (Hp-H)+3 bottom rows, 2 left cols (wrap-around reads of
    # the flat row layout land on this zero padding).
    P = jnp.pad(xcat, ((0, 0), (2, Hp - H + 3), (2, 0), (0, 0))
                ).astype(jnp.bfloat16)
    slabs = jnp.stack([P[:, t * TH:t * TH + RT] for t in range(nt)], axis=1)
    xt = slabs.reshape(N, nt, RT * Wp, cin)
    if LT != RT * Wp:
        xt = jnp.pad(xt, ((0, 0), (0, 0), (0, LT - RT * Wp), (0, 0)))

    w1 = params["w1"].reshape(9 * cin, cm).astype(jnp.bfloat16)
    w2 = params["w2"].reshape(9 * cm, cout).astype(jnp.bfloat16)
    b1 = params["b1"].reshape(1, cm).astype(jnp.float32)
    b2 = params["b2"].reshape(1, cout).astype(jnp.float32)

    est = _step_footprint_bytes(TH, Wp, cin, cm, cout)
    kernel = functools.partial(_up_block_kernel, H=H, W=W, TH=TH, n_tiles=nt)
    out = pl.pallas_call(
        kernel,
        out_shape=jax.ShapeDtypeStruct((N, Hp * Wp, cout), jnp.bfloat16),
        grid_spec=pltpu.PrefetchScalarGridSpec(
            num_scalar_prefetch=0,
            grid=(N, nt),
            in_specs=[
                pl.BlockSpec((None, None, LT, cin), lambda n, t: (n, t, 0, 0)),
                pl.BlockSpec((9 * cin, cm), lambda n, t: (0, 0)),
                pl.BlockSpec((1, cm), lambda n, t: (0, 0)),
                pl.BlockSpec((9 * cm, cout), lambda n, t: (0, 0)),
                pl.BlockSpec((1, cout), lambda n, t: (0, 0)),
            ],
            out_specs=pl.BlockSpec((None, Q2, cout), lambda n, t: (n, t, 0)),
            scratch_shapes=[pltpu.VMEM((LM, cm), jnp.bfloat16)],
        ),
        compiler_params=pltpu.CompilerParams(
            dimension_semantics=("parallel", "parallel"),
            vmem_limit_bytes=_vmem_limit_bytes(est),
        ),
    )(xt, w1, b1, w2, b2)

    # Drop the Hp-H extra rows and the two junk columns of the flat row layout.
    out = out.reshape(N, Hp, Wp, cout)[:, :H, 1:W + 1, :]
    return out


# ---------------------------------------------------------------------------
# Gather-free bilinear x2 upsample (align_corners=True) — plain-JAX glue
# ---------------------------------------------------------------------------
def _interp_matrix(n_in, n_out):
    if n_in == 1:
        return jnp.ones((n_out, 1), jnp.float32)
    src = jnp.arange(n_out, dtype=jnp.float32) * ((n_in - 1) / (n_out - 1))
    lo = jnp.clip(jnp.floor(src).astype(jnp.int32), 0, n_in - 2)
    frac = src - lo.astype(jnp.float32)
    cols = jnp.arange(n_in, dtype=jnp.int32)[None, :]
    return ((cols == lo[:, None]).astype(jnp.float32) * (1.0 - frac)[:, None]
            + (cols == (lo + 1)[:, None]).astype(jnp.float32) * frac[:, None])


def upsample_bilinear_x2(x):
    """x2 bilinear upsample, align_corners=True, NHWC.  Matmuls, no gather."""
    _, H, W, _ = x.shape
    mh = _interp_matrix(H, 2 * H)
    mw = _interp_matrix(W, 2 * W)
    hi = jax.lax.Precision.HIGHEST
    y = jnp.einsum("oh,nhwc->nowc", mh, x, precision=hi)
    return jnp.einsum("pw,nowc->nopc", mw, y, precision=hi)


# ---------------------------------------------------------------------------
# `up` forward (NCHW in/out, matching the PyTorch module)
# ---------------------------------------------------------------------------
@functools.partial(jax.jit, static_argnames=("tile_h",))
def up_forward(x1_nchw, x2_nchw, params, tile_h=None):
    x1 = jnp.transpose(x1_nchw, (0, 2, 3, 1))
    x2 = jnp.transpose(x2_nchw, (0, 2, 3, 1))
    x1 = upsample_bilinear_x2(x1)
    dy = x2.shape[1] - x1.shape[1]
    dx = x2.shape[2] - x1.shape[2]
    x1 = jnp.pad(x1, ((0, 0), (dy // 2, dy - dy // 2),
                      (dx // 2, dx - dx // 2), (0, 0)))
    y = up_double_conv(x2, x1, params, tile_h=tile_h)
    return jnp.transpose(y, (0, 3, 1, 2)).astype(jnp.float32)


# ---------------------------------------------------------------------------
# Parameter init (PyTorch-like U(-1/sqrt(fan_in), 1/sqrt(fan_in)) bounds)
# ---------------------------------------------------------------------------
def init_up_params(key, c_skip, c_up, c_out):
    cin1 = c_skip + c_up
    k1w, k1b, k2w, k2b = jax.random.split(key, 4)
    bound1 = (cin1 * 9) ** -0.5
    w1 = jax.random.uniform(k1w, (9, cin1, c_out), jnp.float32, -bound1, bound1)
    b1 = jax.random.uniform(k1b, (1, c_out), jnp.float32, -bound1, bound1)
    bound2 = (c_out * 9) ** -0.5
    w2 = jax.random.uniform(k2w, (9, c_out, c_out), jnp.float32, -bound2, bound2)
    b2 = jax.random.uniform(k2b, (1, c_out), jnp.float32, -bound2, bound2)
    return {"w1": w1, "b1": b1, "w2": w2, "b2": b2}


# ---------------------------------------------------------------------------
# Pure-JAX reference (gather upsample + lax.conv) for the correctness check
# ---------------------------------------------------------------------------
def _reference_up(x1_nchw, x2_nchw, params):
    x1 = jnp.transpose(x1_nchw, (0, 2, 3, 1)).astype(jnp.float32)
    x2 = jnp.transpose(x2_nchw, (0, 2, 3, 1)).astype(jnp.float32)
    _, H, W, _ = x1.shape

    def coords(n_in, n_out):
        src = jnp.arange(n_out, dtype=jnp.float32) * ((n_in - 1) / (n_out - 1))
        lo = jnp.clip(jnp.floor(src).astype(jnp.int32), 0, n_in - 2)
        return lo, lo + 1, src - lo.astype(jnp.float32)

    y0, y1, fy = coords(H, 2 * H)
    x0, x1i, fx = coords(W, 2 * W)
    g = lambda yy, xx: x1[:, yy][:, :, xx]
    fy_ = fy[None, :, None, None]
    fx_ = fx[None, None, :, None]
    top = g(y0, x0) * (1 - fx_) + g(y0, x1i) * fx_
    bot = g(y1, x0) * (1 - fx_) + g(y1, x1i) * fx_
    u = top * (1 - fy_) + bot * fy_
    dyp = x2.shape[1] - u.shape[1]
    dxp = x2.shape[2] - u.shape[2]
    u = jnp.pad(u, ((0, 0), (dyp // 2, dyp - dyp // 2),
                    (dxp // 2, dxp - dxp // 2), (0, 0)))
    xcat = jnp.concatenate([x2, u], axis=-1)

    def conv(x, w9, b):
        w = w9.reshape(3, 3, w9.shape[1], w9.shape[2])
        y = jax.lax.conv_general_dilated(
            x, w, (1, 1), "SAME",
            dimension_numbers=("NHWC", "HWIO", "NHWC"),
            precision=jax.lax.Precision.HIGHEST)
        return jax.nn.relu(y + b.reshape(1, 1, 1, -1))

    y = conv(xcat, params["w1"], params["b1"])
    y = conv(y, params["w2"], params["b2"])
    return jnp.transpose(y, (0, 3, 1, 2))


# ---------------------------------------------------------------------------
if __name__ == "__main__":
    key = jax.random.PRNGKey(0)
    batch, c_skip, c_up, c_out = 2, 64, 64, 64    # == UNet `up(128, 64)` block
    params = init_up_params(key, c_skip, c_up, c_out)

    def run_case(seed, h1, w1_, h2, w2_, tile_h):
        kx1, kx2 = jax.random.split(jax.random.fold_in(key, seed))
        x1 = jax.random.normal(kx1, (batch, c_up, h1, w1_), jnp.float32)
        x2 = jax.random.normal(kx2, (batch, c_skip, h2, w2_), jnp.float32)
        y = jax.block_until_ready(up_forward(x1, x2, params, tile_h=tile_h))
        assert y.shape == (batch, c_out, h2, w2_), y.shape
        assert bool(jnp.all(jnp.isfinite(y)))
        y_ref = _reference_up(x1, x2, params)
        err = float(jnp.max(jnp.abs(y - y_ref)))
        assert err < 5e-2, f"max abs error vs reference: {err}"

    # H divisible by the tile -> 2 clean H-tiles per batch element.
    run_case(7, 8, 8, 16, 16, 8)
    # Ragged H (Hp > H), W != H, and a nonzero diffY/diffX pad path.
    run_case(11, 7, 9, 15, 19, 8)
    print("KERNEL_OK")
</pallas_src>

<mosaic_0001>
module attributes {stable_mosaic.version = 11 : i64} {
  func.func @_up_block_kernel(%arg0: i32, %arg1: i32, %arg2: memref<1x1x240x128xbf16, #tpu.memory_space<vmem>>, %arg3: memref<1152x64xbf16, #tpu.memory_space<vmem>>, %arg4: memref<1x64xf32, #tpu.memory_space<vmem>>, %arg5: memref<576x64xbf16, #tpu.memory_space<vmem>>, %arg6: memref<1x64xf32, #tpu.memory_space<vmem>>, %arg7: memref<1x144x64xbf16, #tpu.memory_space<vmem>>, %arg8: memref<200x64xbf16, #tpu.memory_space<vmem>>) attributes {dimension_semantics = [#tpu.dimension_semantics<parallel>, #tpu.dimension_semantics<parallel>], iteration_bounds = array<i64: 2, 2>, scalar_prefetch = 0 : i64, scratch_operands = 1 : i64, tpu.core_type = #tpu.core_type<tc>, window_params = [{transform_indices = @transform_0, window_bounds = array<i64: 1, 1, 240, 128>}, {pipeline_mode = #tpu.pipeline_mode<synchronous>, transform_indices = @transform_1, window_bounds = array<i64: 1152, 64>}, {pipeline_mode = #tpu.pipeline_mode<synchronous>, transform_indices = @transform_2, window_bounds = array<i64: 1, 64>}, {pipeline_mode = #tpu.pipeline_mode<synchronous>, transform_indices = @transform_3, window_bounds = array<i64: 576, 64>}, {pipeline_mode = #tpu.pipeline_mode<synchronous>, transform_indices = @transform_4, window_bounds = array<i64: 1, 64>}, {transform_indices = @transform_5, window_bounds = array<i64: 1, 144, 64>}]} {
    %cst = arith.constant 0.000000e+00 : f32
    %0 = vector.broadcast %cst : f32 to vector<180x64xf32>
    %c0 = arith.constant 0 : index
    %c0_0 = arith.constant 0 : index
    %c0_1 = arith.constant 0 : index
    %c0_2 = arith.constant 0 : index
    %1 = vector.load %arg2[%c0, %c0_0, %c0_1, %c0_2] : memref<1x1x240x128xbf16, #tpu.memory_space<vmem>>, vector<1x1x180x128xbf16>
    %2 = vector.shape_cast %1 : vector<1x1x180x128xbf16> to vector<180x128xbf16>
    %c0_3 = arith.constant 0 : index
    %c0_4 = arith.constant 0 : index
    %3 = vector.load %arg3[%c0_3, %c0_4] : memref<1152x64xbf16, #tpu.memory_space<vmem>>, vector<128x64xbf16>
    %cst_5 = arith.constant dense<0.000000e+00> : vector<180x64xf32>
    %4 = tpu.matmul %2, %3, %cst_5 {dimension_numbers = #tpu.dot_dimension_numbers<[1], [0], [0], [1], [0, 0, 1, 1], [], []>} : vector<180x128xbf16>, vector<128x64xbf16>, vector<180x64xf32> -> vector<180x64xf32>
    %5 = arith.addf %0, %4 : vector<180x64xf32>
    %c0_6 = arith.constant 0 : index
    %c0_7 = arith.constant 0 : index
    %c1 = arith.constant 1 : index
    %c0_8 = arith.constant 0 : index
    %6 = vector.load %arg2[%c0_6, %c0_7, %c1, %c0_8] : memref<1x1x240x128xbf16, #tpu.memory_space<vmem>>, vector<1x1x180x128xbf16>
    %7 = vector.shape_cast %6 : vector<1x1x180x128xbf16> to vector<180x128xbf16>
    %c128 = arith.constant 128 : index
    %c0_9 = arith.constant 0 : index
    %8 = vector.load %arg3[%c128, %c0_9] : memref<1152x64xbf16, #tpu.memory_space<vmem>>, vector<128x64xbf16>
    %cst_10 = arith.constant dense<0.000000e+00> : vector<180x64xf32>
    %9 = tpu.matmul %7, %8, %cst_10 {dimension_numbers = #tpu.dot_dimension_numbers<[1], [0], [0], [1], [0, 0, 1, 1], [], []>} : vector<180x128xbf16>, vector<128x64xbf16>, vector<180x64xf32> -> vector<180x64xf32>
    %10 = arith.addf %5, %9 : vector<180x64xf32>
    %c0_11 = arith.constant 0 : index
    %c0_12 = arith.constant 0 : index
    %c2 = arith.constant 2 : index
    %c0_13 = arith.constant 0 : index
    %11 = vector.load %arg2[%c0_11, %c0_12, %c2, %c0_13] : memref<1x1x240x128xbf16, #tpu.memory_space<vmem>>, vector<1x1x180x128xbf16>
    %12 = vector.shape_cast %11 : vector<1x1x180x128xbf16> to vector<180x128xbf16>
    %c256 = arith.constant 256 : index
    %c0_14 = arith.constant 0 : index
    %13 = vector.load %arg3[%c256, %c0_14] : memref<1152x64xbf16, #tpu.memory_space<vmem>>, vector<128x64xbf16>
    %cst_15 = arith.constant dense<0.000000e+00> : vector<180x64xf32>
    %14 = tpu.matmul %12, %13, %cst_15 {dimension_numbers = #tpu.dot_dimension_numbers<[1], [0], [0], [1], [0, 0, 1, 1], [], []>} : vector<180x128xbf16>, vector<128x64xbf16>, vector<180x64xf32> -> vector<180x64xf32>
    %15 = arith.addf %10, %14 : vector<180x64xf32>
    %c0_16 = arith.constant 0 : index
    %c0_17 = arith.constant 0 : index
    %c18 = arith.constant 18 : index
    %c0_18 = arith.constant 0 : index
    %16 = vector.load %arg2[%c0_16, %c0_17, %c18, %c0_18] : memref<1x1x240x128xbf16, #tpu.memory_space<vmem>>, vector<1x1x180x128xbf16>
    %17 = vector.shape_cast %16 : vector<1x1x180x128xbf16> to vector<180x128xbf16>
    %c384 = arith.constant 384 : index
    %c0_19 = arith.constant 0 : index
    %18 = vector.load %arg3[%c384, %c0_19] : memref<1152x64xbf16, #tpu.memory_space<vmem>>, vector<128x64xbf16>
    %cst_20 = arith.constant dense<0.000000e+00> : vector<180x64xf32>
    %19 = tpu.matmul %17, %18, %cst_20 {dimension_numbers = #tpu.dot_dimension_numbers<[1], [0], [0], [1], [0, 0, 1, 1], [], []>} : vector<180x128xbf16>, vector<128x64xbf16>, vector<180x64xf32> -> vector<180x64xf32>
    %20 = arith.addf %15, %19 : vector<180x64xf32>
    %c0_21 = arith.constant 0 : index
    %c0_22 = arith.constant 0 : index
    %c19 = arith.constant 19 : index
    %c0_23 = arith.constant 0 : index
    %21 = vector.load %arg2[%c0_21, %c0_22, %c19, %c0_23] : memref<1x1x240x128xbf16, #tpu.memory_space<vmem>>, vector<1x1x180x128xbf16>
    %22 = vector.shape_cast %21 : vector<1x1x180x128xbf16> to vector<180x128xbf16>
    %c512 = arith.constant 512 : index
    %c0_24 = arith.constant 0 : index
    %23 = vector.load %arg3[%c512, %c0_24] : memref<1152x64xbf16, #tpu.memory_space<vmem>>, vector<128x64xbf16>
    %cst_25 = arith.constant dense<0.000000e+00> : vector<180x64xf32>
    %24 = tpu.matmul %22, %23, %cst_25 {dimension_numbers = #tpu.dot_dimension_numbers<[1], [0], [0], [1], [0, 0, 1, 1], [], []>} : vector<180x128xbf16>, vector<128x64xbf16>, vector<180x64xf32> -> vector<180x64xf32>
    %25 = arith.addf %20, %24 : vector<180x64xf32>
    %c0_26 = arith.constant 0 : index
    %c0_27 = arith.constant 0 : index
    %c20 = arith.constant 20 : index
    %c0_28 = arith.constant 0 : index
    %26 = vector.load %arg2[%c0_26, %c0_27, %c20, %c0_28] : memref<1x1x240x128xbf16, #tpu.memory_space<vmem>>, vector<1x1x180x128xbf16>
    %27 = vector.shape_cast %26 : vector<1x1x180x128xbf16> to vector<180x128xbf16>
    %c640 = arith.constant 640 : index
    %c0_29 = arith.constant 0 : index
    %28 = vector.load %arg3[%c640, %c0_29] : memref<1152x64xbf16, #tpu.memory_space<vmem>>, vector<128x64xbf16>
    %cst_30 = arith.constant dense<0.000000e+00> : vector<180x64xf32>
    %29 = tpu.matmul %27, %28, %cst_30 {dimension_numbers = #tpu.dot_dimension_numbers<[1], [0], [0], [1], [0, 0, 1, 1], [], []>} : vector<180x128xbf16>, vector<128x64xbf16>, vector<180x64xf32> -> vector<180x64xf32>
    %30 = arith.addf %25, %29 : vector<180x64xf32>
    %c0_31 = arith.constant 0 : index
    %c0_32 = arith.constant 0 : index
    %c36 = arith.constant 36 : index
    %c0_33 = arith.constant 0 : index
    %31 = vector.load %arg2[%c0_31, %c0_32, %c36, %c0_33] : memref<1x1x240x128xbf16, #tpu.memory_space<vmem>>, vector<1x1x180x128xbf16>
    %32 = vector.shape_cast %31 : vector<1x1x180x128xbf16> to vector<180x128xbf16>
    %c768 = arith.constant 768 : index
    %c0_34 = arith.constant 0 : index
    %33 = vector.load %arg3[%c768, %c0_34] : memref<1152x64xbf16, #tpu.memory_space<vmem>>, vector<128x64xbf16>
    %cst_35 = arith.constant dense<0.000000e+00> : vector<180x64xf32>
    %34 = tpu.matmul %32, %33, %cst_35 {dimension_numbers = #tpu.dot_dimension_numbers<[1], [0], [0], [1], [0, 0, 1, 1], [], []>} : vector<180x128xbf16>, vector<128x64xbf16>, vector<180x64xf32> -> vector<180x64xf32>
    %35 = arith.addf %30, %34 : vector<180x64xf32>
    %c0_36 = arith.constant 0 : index
    %c0_37 = arith.constant 0 : index
    %c37 = arith.constant 37 : index
    %c0_38 = arith.constant 0 : index
    %36 = vector.load %arg2[%c0_36, %c0_37, %c37, %c0_38] : memref<1x1x240x128xbf16, #tpu.memory_space<vmem>>, vector<1x1x180x128xbf16>
    %37 = vector.shape_cast %36 : vector<1x1x180x128xbf16> to vector<180x128xbf16>
    %c896 = arith.constant 896 : index
    %c0_39 = arith.constant 0 : index
    %38 = vector.load %arg3[%c896, %c0_39] : memref<1152x64xbf16, #tpu.memory_space<vmem>>, vector<128x64xbf16>
    %cst_40 = arith.constant dense<0.000000e+00> : vector<180x64xf32>
    %39 = tpu.matmul %37, %38, %cst_40 {dimension_numbers = #tpu.dot_dimension_numbers<[1], [0], [0], [1], [0, 0, 1, 1], [], []>} : vector<180x128xbf16>, vector<128x64xbf16>, vector<180x64xf32> -> vector<180x64xf32>
    %40 = arith.addf %35, %39 : vector<180x64xf32>
    %c0_41 = arith.constant 0 : index
    %c0_42 = arith.constant 0 : index
    %c38 = arith.constant 38 : index
    %c0_43 = arith.constant 0 : index
    %41 = vector.load %arg2[%c0_41, %c0_42, %c38, %c0_43] : memref<1x1x240x128xbf16, #tpu.memory_space<vmem>>, vector<1x1x180x128xbf16>
    %42 = vector.shape_cast %41 : vector<1x1x180x128xbf16> to vector<180x128xbf16>
    %c1024 = arith.constant 1024 : index
    %c0_44 = arith.constant 0 : index
    %43 = vector.load %arg3[%c1024, %c0_44] : memref<1152x64xbf16, #tpu.memory_space<vmem>>, vector<128x64xbf16>
    %cst_45 = arith.constant dense<0.000000e+00> : vector<180x64xf32>
    %44 = tpu.matmul %42, %43, %cst_45 {dimension_numbers = #tpu.dot_dimension_numbers<[1], [0], [0], [1], [0, 0, 1, 1], [], []>} : vector<180x128xbf16>, vector<128x64xbf16>, vector<180x64xf32> -> vector<180x64xf32>
    %45 = arith.addf %40, %44 : vector<180x64xf32>
    %c0_46 = arith.constant 0 : index
    %c0_47 = arith.constant 0 : index
    %46 = vector.load %arg4[%c0_46, %c0_47] : memref<1x64xf32, #tpu.memory_space<vmem>>, vector<1x64xf32>
    %47 = vector.broadcast %46 : vector<1x64xf32> to vector<180x64xf32>
    %48 = arith.addf %45, %47 : vector<180x64xf32>
    %cst_48 = arith.constant 0.000000e+00 : f32
    %49 = vector.broadcast %cst_48 : f32 to vector<180x64xf32>
    %50 = arith.maximumf %48, %49 : vector<180x64xf32>
    %51 = arith.truncf %50 : vector<180x64xf32> to vector<180x64xbf16>
    %c8 = arith.constant 8 : index
    %c0_49 = arith.constant 0 : index
    %52 = vector.load %arg8[%c8, %c0_49] : memref<200x64xbf16, #tpu.memory_space<vmem>>, vector<180x64xbf16>
    tpu.vector_store %arg8[%c8, %c0_49], %51 {strides = array<i32>} : memref<200x64xbf16, #tpu.memory_space<vmem>>, vector<180x64xbf16>,
    %cst_50 = arith.constant 0.000000e+00 : bf16
    %53 = vector.broadcast %cst_50 : bf16 to vector<2x64xbf16>
    %c7 = arith.constant 7 : index
    %c0_51 = arith.constant 0 : index
    %54 = vector.load %arg8[%c7, %c0_51] : memref<200x64xbf16, #tpu.memory_space<vmem>>, vector<2x64xbf16>
    tpu.vector_store %arg8[%c7, %c0_51], %53 {strides = array<i32>} : memref<200x64xbf16, #tpu.memory_space<vmem>>, vector<2x64xbf16>,
    %c25 = arith.constant 25 : index
    %c0_52 = arith.constant 0 : index
    %55 = vector.load %arg8[%c25, %c0_52] : memref<200x64xbf16, #tpu.memory_space<vmem>>, vector<2x64xbf16>
    tpu.vector_store %arg8[%c25, %c0_52], %53 {strides = array<i32>} : memref<200x64xbf16, #tpu.memory_space<vmem>>, vector<2x64xbf16>,
    %c43 = arith.constant 43 : index
    %c0_53 = arith.constant 0 : index
    %56 = vector.load %arg8[%c43, %c0_53] : memref<200x64xbf16, #tpu.memory_space<vmem>>, vector<2x64xbf16>
    tpu.vector_store %arg8[%c43, %c0_53], %53 {strides = array<i32>} : memref<200x64xbf16, #tpu.memory_space<vmem>>, vector<2x64xbf16>,
    %c61 = arith.constant 61 : index
    %c0_54 = arith.constant 0 : index
    %57 = vector.load %arg8[%c61, %c0_54] : memref<200x64xbf16, #tpu.memory_space<vmem>>, vector<2x64xbf16>
    tpu.vector_store %arg8[%c61, %c0_54], %53 {strides = array<i32>} : memref<200x64xbf16, #tpu.memory_space<vmem>>, vector<2x64xbf16>,
    %c79 = arith.constant 79 : index
    %c0_55 = arith.constant 0 : index
    %58 = vector.load %arg8[%c79, %c0_55] : memref<200x64xbf16, #tpu.memory_space<vmem>>, vector<2x64xbf16>
    tpu.vector_store %arg8[%c79, %c0_55], %53 {strides = array<i32>} : memref<200x64xbf16, #tpu.memory_space<vmem>>, vector<2x64xbf16>,
    %c97 = arith.constant 97 : index
    %c0_56 = arith.constant 0 : index
    %59 = vector.load %arg8[%c97, %c0_56] : memref<200x64xbf16, #tpu.memory_space<vmem>>, vector<2x64xbf16>
    tpu.vector_store %arg8[%c97, %c0_56], %53 {strides = array<i32>} : memref<200x64xbf16, #tpu.memory_space<vmem>>, vector<2x64xbf16>,
    %c115 = arith.constant 115 : index
    %c0_57 = arith.constant 0 : index
    %60 = vector.load %arg8[%c115, %c0_57] : memref<200x64xbf16, #tpu.memory_space<vmem>>, vector<2x64xbf16>
    tpu.vector_store %arg8[%c115, %c0_57], %53 {strides = array<i32>} : memref<200x64xbf16, #tpu.memory_space<vmem>>, vector<2x64xbf16>,
    %c133 = arith.constant 133 : index
    %c0_58 = arith.constant 0 : index
    %61 = vector.load %arg8[%c133, %c0_58] : memref<200x64xbf16, #tpu.memory_space<vmem>>, vector<2x64xbf16>
    tpu.vector_store %arg8[%c133, %c0_58], %53 {strides = array<i32>} : memref<200x64xbf16, #tpu.memory_space<vmem>>, vector<2x64xbf16>,
    %c151 = arith.constant 151 : index
    %c0_59 = arith.constant 0 : index
    %62 = vector.load %arg8[%c151, %c0_59] : memref<200x64xbf16, #tpu.memory_space<vmem>>, vector<2x64xbf16>
    tpu.vector_store %arg8[%c151, %c0_59], %53 {strides = array<i32>} : memref<200x64xbf16, #tpu.memory_space<vmem>>, vector<2x64xbf16>,
    %c169 = arith.constant 169 : index
    %c0_60 = arith.constant 0 : index
    %63 = vector.load %arg8[%c169, %c0_60] : memref<200x64xbf16, #tpu.memory_space<vmem>>, vector<2x64xbf16>
    tpu.vector_store %arg8[%c169, %c0_60], %53 {strides = array<i32>} : memref<200x64xbf16, #tpu.memory_space<vmem>>, vector<2x64xbf16>,
    %c187 = arith.constant 187 : index
    %c0_61 = arith.constant 0 : index
    %64 = vector.load %arg8[%c187, %c0_61] : memref<200x64xbf16, #tpu.memory_space<vmem>>, vector<2x64xbf16>
    tpu.vector_store %arg8[%c187, %c0_61], %53 {strides = array<i32>} : memref<200x64xbf16, #tpu.memory_space<vmem>>, vector<2x64xbf16>,
    %c0_i32 = arith.constant 0 : i32
    %65 = arith.cmpi eq, %arg1, %c0_i32 : i32
    %66 = arith.extui %65 : i1 to i32
    %c0_i32_62 = arith.constant 0 : i32
    %67 = arith.cmpi ne, %66, %c0_i32_62 : i32
    scf.if %67 {
      %cst_107 = arith.constant 0.000000e+00 : bf16
      %117 = vector.broadcast %cst_107 : bf16 to vector<18x64xbf16>
      %c8_108 = arith.constant 8 : index
      %c0_109 = arith.constant 0 : index
      %118 = vector.load %arg8[%c8_108, %c0_109] : memref<200x64xbf16, #tpu.memory_space<vmem>>, vector<18x64xbf16>
      tpu.vector_store %arg8[%c8_108, %c0_109], %117 {strides = array<i32>} : memref<200x64xbf16, #tpu.memory_space<vmem>>, vector<18x64xbf16>,
    } else {
    }
    %c1_i32 = arith.constant 1 : i32
    %68 = arith.cmpi eq, %arg1, %c1_i32 : i32
    %69 = arith.extui %68 : i1 to i32
    %c0_i32_63 = arith.constant 0 : i32
    %70 = arith.cmpi ne, %69, %c0_i32_63 : i32
    scf.if %70 {
      %cst_107 = arith.constant 0.000000e+00 : bf16
      %117 = vector.broadcast %cst_107 : bf16 to vector<18x64xbf16>
      %c170 = arith.constant 170 : index
      %c0_108 = arith.constant 0 : index
      %118 = vector.load %arg8[%c170, %c0_108] : memref<200x64xbf16, #tpu.memory_space<vmem>>, vector<18x64xbf16>
      tpu.vector_store %arg8[%c170, %c0_108], %117 {strides = array<i32>} : memref<200x64xbf16, #tpu.memory_space<vmem>>, vector<18x64xbf16>,
    } else {
    }
    %cst_64 = arith.constant 0.000000e+00 : f32
    %71 = vector.broadcast %cst_64 : f32 to vector<144x64xf32>
    %c7_65 = arith.constant 7 : index
    %c0_66 = arith.constant 0 : index
    %72 = vector.load %arg8[%c7_65, %c0_66] : memref<200x64xbf16, #tpu.memory_space<vmem>>, vector<144x64xbf16>
    %c0_67 = arith.constant 0 : index
    %c0_68 = arith.constant 0 : index
    %73 = vector.load %arg5[%c0_67, %c0_68] : memref<576x64xbf16, #tpu.memory_space<vmem>>, vector<64x64xbf16>
    %cst_69 = arith.constant dense<0.000000e+00> : vector<144x64xf32>
    %74 = tpu.matmul %72, %73, %cst_69 {dimension_numbers = #tpu.dot_dimension_numbers<[1], [0], [0], [1], [0, 0, 1, 1], [], []>} : vector<144x64xbf16>, vector<64x64xbf16>, vector<144x64xf32> -> vector<144x64xf32>
    %75 = arith.addf %71, %74 : vector<144x64xf32>
    %c8_70 = arith.constant 8 : index
    %c0_71 = arith.constant 0 : index
    %76 = vector.load %arg8[%c8_70, %c0_71] : memref<200x64xbf16, #tpu.memory_space<vmem>>, vector<144x64xbf16>
    %c64 = arith.constant 64 : index
    %c0_72 = arith.constant 0 : index
    %77 = vector.load %arg5[%c64, %c0_72] : memref<576x64xbf16, #tpu.memory_space<vmem>>, vector<64x64xbf16>
    %cst_73 = arith.constant dense<0.000000e+00> : vector<144x64xf32>
    %78 = tpu.matmul %76, %77, %cst_73 {dimension_numbers = #tpu.dot_dimension_numbers<[1], [0], [0], [1], [0, 0, 1, 1], [], []>} : vector<144x64xbf16>, vector<64x64xbf16>, vector<144x64xf32> -> vector<144x64xf32>
    %79 = arith.addf %75, %78 : vector<144x64xf32>
    %c9 = arith.constant 9 : index
    %c0_74 = arith.constant 0 : index
    %80 = vector.load %arg8[%c9, %c0_74] : memref<200x64xbf16, #tpu.memory_space<vmem>>, vector<144x64xbf16>
    %c128_75 = arith.constant 128 : index
    %c0_76 = arith.constant 0 : index
    %81 = vector.load %arg5[%c128_75, %c0_76] : memref<576x64xbf16, #tpu.memory_space<vmem>>, vector<64x64xbf16>
    %cst_77 = arith.constant dense<0.000000e+00> : vector<144x64xf32>
    %82 = tpu.matmul %80, %81, %cst_77 {dimension_numbers = #tpu.dot_dimension_numbers<[1], [0], [0], [1], [0, 0, 1, 1], [], []>} : vector<144x64xbf16>, vector<64x64xbf16>, vector<144x64xf32> -> vector<144x64xf32>
    %83 = arith.addf %79, %82 : vector<144x64xf32>
    %c25_78 = arith.constant 25 : index
    %c0_79 = arith.constant 0 : index
    %84 = vector.load %arg8[%c25_78, %c0_79] : memref<200x64xbf16, #tpu.memory_space<vmem>>, vector<144x64xbf16>
    %c192 = arith.constant 192 : index
    %c0_80 = arith.constant 0 : index
    %85 = vector.load %arg5[%c192, %c0_80] : memref<576x64xbf16, #tpu.memory_space<vmem>>, vector<64x64xbf16>
    %cst_81 = arith.constant dense<0.000000e+00> : vector<144x64xf32>
    %86 = tpu.matmul %84, %85, %cst_81 {dimension_numbers = #tpu.dot_dimension_numbers<[1], [0], [0], [1], [0, 0, 1, 1], [], []>} : vector<144x64xbf16>, vector<64x64xbf16>, vector<144x64xf32> -> vector<144x64xf32>
    %87 = arith.addf %83, %86 : vector<144x64xf32>
    %c26 = arith.constant 26 : index
    %c0_82 = arith.constant 0 : index
    %88 = vector.load %arg8[%c26, %c0_82] : memref<200x64xbf16, #tpu.memory_space<vmem>>, vector<144x64xbf16>
    %c256_83 = arith.constant 256 : index
    %c0_84 = arith.constant 0 : index
    %89 = vector.load %arg5[%c256_83, %c0_84] : memref<576x64xbf16, #tpu.memory_space<vmem>>, vector<64x64xbf16>
    %cst_85 = arith.constant dense<0.000000e+00> : vector<144x64xf32>
    %90 = tpu.matmul %88, %89, %cst_85 {dimension_numbers = #tpu.dot_dimension_numbers<[1], [0], [0], [1], [0, 0, 1, 1], [], []>} : vector<144x64xbf16>, vector<64x64xbf16>, vector<144x64xf32> -> vector<144x64xf32>
    %91 = arith.addf %87, %90 : vector<144x64xf32>
    %c27 = arith.constant 27 : index
    %c0_86 = arith.constant 0 : index
    %92 = vector.load %arg8[%c27, %c0_86] : memref<200x64xbf16, #tpu.memory_space<vmem>>, vector<144x64xbf16>
    %c320 = arith.constant 320 : index
    %c0_87 = arith.constant 0 : index
    %93 = vector.load %arg5[%c320, %c0_87] : memref<576x64xbf16, #tpu.memory_space<vmem>>, vector<64x64xbf16>
    %cst_88 = arith.constant dense<0.000000e+00> : vector<144x64xf32>
    %94 = tpu.matmul %92, %93, %cst_88 {dimension_numbers = #tpu.dot_dimension_numbers<[1], [0], [0], [1], [0, 0, 1, 1], [], []>} : vector<144x64xbf16>, vector<64x64xbf16>, vector<144x64xf32> -> vector<144x64xf32>
    %95 = arith.addf %91, %94 : vector<144x64xf32>
    %c43_89 = arith.constant 43 : index
    %c0_90 = arith.constant 0 : index
    %96 = vector.load %arg8[%c43_89, %c0_90] : memref<200x64xbf16, #tpu.memory_space<vmem>>, vector<144x64xbf16>
    %c384_91 = arith.constant 384 : index
    %c0_92 = arith.constant 0 : index
    %97 = vector.load %arg5[%c384_91, %c0_92] : memref<576x64xbf16, #tpu.memory_space<vmem>>, vector<64x64xbf16>
    %cst_93 = arith.constant dense<0.000000e+00> : vector<144x64xf32>
    %98 = tpu.matmul %96, %97, %cst_93 {dimension_numbers = #tpu.dot_dimension_numbers<[1], [0], [0], [1], [0, 0, 1, 1], [], []>} : vector<144x64xbf16>, vector<64x64xbf16>, vector<144x64xf32> -> vector<144x64xf32>
    %99 = arith.addf %95, %98 : vector<144x64xf32>
    %c44 = arith.constant 44 : index
    %c0_94 = arith.constant 0 : index
    %100 = vector.load %arg8[%c44, %c0_94] : memref<200x64xbf16, #tpu.memory_space<vmem>>, vector<144x64xbf16>
    %c448 = arith.constant 448 : index
    %c0_95 = arith.constant 0 : index
    %101 = vector.load %arg5[%c448, %c0_95] : memref<576x64xbf16, #tpu.memory_space<vmem>>, vector<64x64xbf16>
    %cst_96 = arith.constant dense<0.000000e+00> : vector<144x64xf32>
    %102 = tpu.matmul %100, %101, %cst_96 {dimension_numbers = #tpu.dot_dimension_numbers<[1], [0], [0], [1], [0, 0, 1, 1], [], []>} : vector<144x64xbf16>, vector<64x64xbf16>, vector<144x64xf32> -> vector<144x64xf32>
    %103 = arith.addf %99, %102 : vector<144x64xf32>
    %c45 = arith.constant 45 : index
    %c0_97 = arith.constant 0 : index
    %104 = vector.load %arg8[%c45, %c0_97] : memref<200x64xbf16, #tpu.memory_space<vmem>>, vector<144x64xbf16>
    %c512_98 = arith.constant 512 : index
    %c0_99 = arith.constant 0 : index
    %105 = vector.load %arg5[%c512_98, %c0_99] : memref<576x64xbf16, #tpu.memory_space<vmem>>, vector<64x64xbf16>
    %cst_100 = arith.constant dense<0.000000e+00> : vector<144x64xf32>
    %106 = tpu.matmul %104, %105, %cst_100 {dimension_numbers = #tpu.dot_dimension_numbers<[1], [0], [0], [1], [0, 0, 1, 1], [], []>} : vector<144x64xbf16>, vector<64x64xbf16>, vector<144x64xf32> -> vector<144x64xf32>
    %107 = arith.addf %103, %106 : vector<144x64xf32>
    %c0_101 = arith.constant 0 : index
    %c0_102 = arith.constant 0 : index
    %108 = vector.load %arg6[%c0_101, %c0_102] : memref<1x64xf32, #tpu.memory_space<vmem>>, vector<1x64xf32>
    %109 = vector.broadcast %108 : vector<1x64xf32> to vector<144x64xf32>
    %110 = arith.addf %107, %109 : vector<144x64xf32>
    %cst_103 = arith.constant 0.000000e+00 : f32
    %111 = vector.broadcast %cst_103 : f32 to vector<144x64xf32>
    %112 = arith.maximumf %110, %111 : vector<144x64xf32>
    %113 = arith.truncf %112 : vector<144x64xf32> to vector<144x64xbf16>
    %c0_104 = arith.constant 0 : index
    %c0_105 = arith.constant 0 : index
    %c0_106 = arith.constant 0 : index
    %114 = vector.load %arg7[%c0_104, %c0_105, %c0_106] : memref<1x144x64xbf16, #tpu.memory_space<vmem>>, vector<1x144x64xbf16>
    %115 = vector.shape_cast %114 : vector<1x144x64xbf16> to vector<144x64xbf16>
    %116 = vector.shape_cast %113 : vector<144x64xbf16> to vector<1x144x64xbf16>
    tpu.vector_store %arg7[%c0_104, %c0_105, %c0_106], %116 {strides = array<i32>} : memref<1x144x64xbf16, #tpu.memory_space<vmem>>, vector<1x144x64xbf16>,
    return
  }
  func.func @transform_0(%arg0: i32, %arg1: i32) -> (i32, i32, i32, i32) {
    %c0_i32 = arith.constant 0 : i32
    %c0_i32_0 = arith.constant 0 : i32
    %c0_i32_1 = arith.constant 0 : i32
    return %arg0, %arg1, %c0_i32, %c0_i32_0 : i32, i32, i32, i32
  }
  func.func @transform_1(%arg0: i32, %arg1: i32) -> (i32, i32) {
    %c0_i32 = arith.constant 0 : i32
    %c0_i32_0 = arith.constant 0 : i32
    %c0_i32_1 = arith.constant 0 : i32
    return %c0_i32, %c0_i32_0 : i32, i32
  }
  func.func @transform_2(%arg0: i32, %arg1: i32) -> (i32, i32) {
    %c0_i32 = arith.constant 0 : i32
    %c0_i32_0 = arith.constant 0 : i32
    %c0_i32_1 = arith.constant 0 : i32
    return %c0_i32, %c0_i32_0 : i32, i32
  }
  func.func @transform_3(%arg0: i32, %arg1: i32) -> (i32, i32) {
    %c0_i32 = arith.constant 0 : i32
    %c0_i32_0 = arith.constant 0 : i32
    %c0_i32_1 = arith.constant 0 : i32
    return %c0_i32, %c0_i32_0 : i32, i32
  }
  func.func @transform_4(%arg0: i32, %arg1: i32) -> (i32, i32) {
    %c0_i32 = arith.constant 0 : i32
    %c0_i32_0 = arith.constant 0 : i32
    %c0_i32_1 = arith.constant 0 : i32
    return %c0_i32, %c0_i32_0 : i32, i32
  }
  func.func @transform_5(%arg0: i32, %arg1: i32) -> (i32, i32, i32) {
    %c0_i32 = arith.constant 0 : i32
    %c0_i32_0 = arith.constant 0 : i32
    return %arg0, %arg1, %c0_i32 : i32, i32, i32
  }
}

</mosaic_0001>

<llo_original>
// kernel: up_forward.1
$region0: #{up_forward.1}
  #allocation0 [shape = 'u32[]', space=smem, size = 0x4, offset = 0x4, fixed_abs, tag = 'smem constant byte address 0x4 - core index']
  #allocation1 [shape = 'u32[144,128]{1,0:T(1,128)}', space=vmem, size = 0x12000, scoped, tag = 'internal scratch']
  #allocation2 [shape = 'bf16[200,64]{1,0:T(8,128)(2,1)}', space=vmem, size = 0xc800, scoped, tag = 'scratch operand']
  %s0 = inlined_call_operand.vmem [shape: bf16[2,2,240,128], index: 0, kind: input, shape index: {}]
  %s1 = inlined_call_operand.vmem [shape: bf16[1152,64], index: 1, kind: input, shape index: {}]
  %s2 = inlined_call_operand.vmem [shape: f32[1,64], index: 2, kind: input, shape index: {}]
  %s3 = inlined_call_operand.vmem [shape: bf16[576,64], index: 3, kind: input, shape index: {}]
  %s4 = inlined_call_operand.vmem [shape: f32[1,64], index: 4, kind: input, shape index: {}]
  %s5 = inlined_call_operand.vmem [shape: bf16[2,288,64], index: 5, kind: output, shape index: {}]
  %s6 = sld [smem:[#allocation0]]
  $region61: #{up_forward.1} parent=0
    _
  %s8 = ssub.s32 1, %s6
  %s9 = scalar_select 0, %s8, %s6
  loop: start=0, step=1, limit=6
  $region2: #{up_forward.1} parent=0 // loop_pre_header
    _
  $region3: #{up_forward.1} parent=0 // loop_header
    %s11 = sphi 0, %s15
    %p12 = scmp.ge.s32.totalorder %s11, 6
    %s18 = sphi 0, %s30
    %s19 = sphi 0, %s26
    %s20 = sphi 0, %s18
    %s21 = sphi 0, %s19
    %s22 = sphi 0, %s20
    %s23 = sphi 0, %s21
    %s35 = sphi 0, %s37
    %s38 = sphi 0, %s35
    %s39 = sphi 0, %s38
    %s55 = sphi 0, %s39
    %s59 = sphi 0, %s59
    %s61 = sphi 0, %s59
    %s62 = sphi 0, %s61
    %s76 = sphi 0, %s62
    %s80 = sphi 0, %s80
    %s82 = sphi 0, %s80
    %s83 = sphi 0, %s82
    %s97 = sphi 0, %s83
    %s101 = sphi 0, %s101
    %s103 = sphi 0, %s101
    %s104 = sphi 0, %s103
    %s118 = sphi 0, %s104
    %s122 = sphi 0, %s122
    %s124 = sphi 0, %s122
    %s125 = sphi 0, %s124
    %s139 = sphi 0, %s125
    %s147 = sphi 0, %s149
    %s150 = sphi 0, %s147
    %s151 = sphi 0, %s150
    %s167 = sphi 0, %s151
  $region4: #{up_forward.1} parent=0 // loop_header_branch
    %14 = sbr.rel (%p12) target = $region8
  $region5: #{up_forward.1} parent=0 // loop_body
    %s16 = ssub.s32 %s11, 1
    %s17 = ssub.s32 %s11, 2
    %s24 = sadd.s32 1, %s19
    %p25 = scmp.ge.s32.totalorder %s24, 2
    %s26 = scalar_select %p25, 0, %s24
    %s27 = sadd.s32 1, %s18
    %s28 = scalar_select %p25, %s27, %s18
    %p29 = scmp.ge.s32.totalorder %s28, 2
    %s30 = scalar_select %p29, 0, %s28
    %s31 = ssub.s32 %s18, %s30
    %s32 = ssub.s32 %s19, %s26
    %s33 = sor.u32 %s31, %s32
    %p34 = scmp.eq.s32.totalorder %s33, 0
    %s36 = sadd.s32 %s35, 1
    %s37 = scalar_select %p34, %s35, %s36
    %p40 = pneg %p34
    %p41 = scmp.eq.s32.totalorder %s11, 3
    %p42 = por %p40, %p41
    %p43 = scmp.ne.s32.totalorder %s35, %s38
    %p44 = scmp.eq.s32.totalorder %s11, 0
    %p45 = por %p43, %p44
    %p46 = scmp.ne.s32.totalorder %s35, %s38
    %p47 = scmp.eq.s32.totalorder %s16, 3
    %p48 = por %p46, %p47
    %p49 = scmp.ne.s32.totalorder %s38, %s39
    %p50 = scmp.eq.s32.totalorder %s16, 0
    %p51 = por %p49, %p50
    %p52 = scmp.ne.s32.totalorder %s38, %s39
    %p53 = scmp.eq.s32.totalorder %s17, 3
    %p54 = por %p52, %p53
    %p56 = scmp.ne.s32.totalorder %s39, %s55
    %p57 = scmp.eq.s32.totalorder %s17, 0
    %p58 = por %p56, %p57
    %s60 = sadd.s32 %s59, 1
    %p63 = scmp.eq.s32.totalorder %s11, 3
    %p64 = scmp.ne.s32.totalorder %s59, %s61
    %p65 = scmp.eq.s32.totalorder %s11, 0
    %p66 = por %p64, %p65
    %p67 = scmp.ne.s32.totalorder %s59, %s61
    %p68 = scmp.eq.s32.totalorder %s16, 3
    %p69 = por %p67, %p68
    %p70 = scmp.ne.s32.totalorder %s61, %s62
    %p71 = scmp.eq.s32.totalorder %s16, 0
    %p72 = por %p70, %p71
    %p73 = scmp.ne.s32.totalorder %s61, %s62
    %p74 = scmp.eq.s32.totalorder %s17, 3
    %p75 = por %p73, %p74
    %p77 = scmp.ne.s32.totalorder %s62, %s76
    %p78 = scmp.eq.s32.totalorder %s17, 0
    %p79 = por %p77, %p78
    %s81 = sadd.s32 %s80, 1
    %p84 = scmp.eq.s32.totalorder %s11, 3
    %p85 = scmp.ne.s32.totalorder %s80, %s82
    %p86 = scmp.eq.s32.totalorder %s11, 0
    %p87 = por %p85, %p86
    %p88 = scmp.ne.s32.totalorder %s80, %s82
    %p89 = scmp.eq.s32.totalorder %s16, 3
    %p90 = por %p88, %p89
    %p91 = scmp.ne.s32.totalorder %s82, %s83
    %p92 = scmp.eq.s32.totalorder %s16, 0
    %p93 = por %p91, %p92
    %p94 = scmp.ne.s32.totalorder %s82, %s83
    %p95 = scmp.eq.s32.totalorder %s17, 3
    %p96 = por %p94, %p95
    %p98 = scmp.ne.s32.totalorder %s83, %s97
    %p99 = scmp.eq.s32.totalorder %s17, 0
    %p100 = por %p98, %p99
    %s102 = sadd.s32 %s101, 1
    %p105 = scmp.eq.s32.totalorder %s11, 3
    %p106 = scmp.ne.s32.totalorder %s101, %s103
    %p107 = scmp.eq.s32.totalorder %s11, 0
    %p108 = por %p106, %p107
    %p109 = scmp.ne.s32.totalorder %s101, %s103
    %p110 = scmp.eq.s32.totalorder %s16, 3
    %p111 = por %p109, %p110
    %p112 = scmp.ne.s32.totalorder %s103, %s104
    %p113 = scmp.eq.s32.totalorder %s16, 0
    %p114 = por %p112, %p113
    %p115 = scmp.ne.s32.totalorder %s103, %s104
    %p116 = scmp.eq.s32.totalorder %s17, 3
    %p117 = por %p115, %p116
    %p119 = scmp.ne.s32.totalorder %s104, %s118
    %p120 = scmp.eq.s32.totalorder %s17, 0
    %p121 = por %p119, %p120
    %s123 = sadd.s32 %s122, 1
    %p126 = scmp.eq.s32.totalorder %s11, 3
    %p127 = scmp.ne.s32.totalorder %s122, %s124
    %p128 = scmp.eq.s32.totalorder %s11, 0
    %p129 = por %p127, %p128
    %p130 = scmp.ne.s32.totalorder %s122, %s124
    %p131 = scmp.eq.s32.totalorder %s16, 3
    %p132 = por %p130, %p131
    %p133 = scmp.ne.s32.totalorder %s124, %s125
    %p134 = scmp.eq.s32.totalorder %s16, 0
    %p135 = por %p133, %p134
    %p136 = scmp.ne.s32.totalorder %s124, %s125
    %p137 = scmp.eq.s32.totalorder %s17, 3
    %p138 = por %p136, %p137
    %p140 = scmp.ne.s32.totalorder %s125, %s139
    %p141 = scmp.eq.s32.totalorder %s17, 0
    %p142 = por %p140, %p141
    %s143 = ssub.s32 %s18, %s30
    %s144 = ssub.s32 %s19, %s26
    %s145 = sor.u32 %s143, %s144
    %p146 = scmp.eq.s32.totalorder %s145, 0
    %s148 = sadd.s32 %s147, 1
    %s149 = scalar_select %p146, %s147, %s148
    %p152 = pneg %p146
    %p153 = scmp.eq.s32.totalorder %s11, 3
    %p154 = por %p152, %p153
    %p155 = scmp.ne.s32.totalorder %s147, %s150
    %p156 = scmp.eq.s32.totalorder %s11, 0
    %p157 = por %p155, %p156
    %p158 = scmp.ne.s32.totalorder %s147, %s150
    %p159 = scmp.eq.s32.totalorder %s16, 3
    %p160 = por %p158, %p159
    %p161 = scmp.ne.s32.totalorder %s150, %s151
    %p162 = scmp.eq.s32.totalorder %s16, 0
    %p163 = por %p161, %p162
    %p164 = scmp.ne.s32.totalorder %s150, %s151
    %p165 = scmp.eq.s32.totalorder %s17, 3
    %p166 = por %p164, %p165
    %p168 = scmp.ne.s32.totalorder %s151, %s167
    %p169 = scmp.eq.s32.totalorder %s17, 0
    %p170 = por %p168, %p169
    %p171 = scmp.le.s32.totalorder 1, %s11
    %p172 = scmp.lt.s32.totalorder %s11, 5
    %p173 = pnand %p171, %p172
    %p174 = pneg %p173
    // Predicated region
    $region9: #{up_forward.1} parent=5 // pred_check
      _
    $region10: #{up_forward.1} parent=5 // pred_check_branch
      %176 = sbr.rel (%p173) target = $region12
    $region11: #{up_forward.1} parent=5 // pred_region
      %s177 = ssub.s32 %s11, 1
      // Predicated region
      $region13: #{up_forward.1} parent=11 // pred_check
        %p178 = pneg %p72
      $region14: #{up_forward.1} parent=11 // pred_check_branch
        %180 = sbr.rel (%p178) target = $region16
      $region15: #{up_forward.1} parent=11 // pred_region
        _
      $region16: #{up_forward.1} parent=11 // pred_fallthru
        _
      // Predicated region
      $region17: #{up_forward.1} parent=11 // pred_check
        %p181 = pneg %p93
      $region18: #{up_forward.1} parent=11 // pred_check_branch
        %183 = sbr.rel (%p181) target = $region20
      $region19: #{up_forward.1} parent=11 // pred_region
        _
      $region20: #{up_forward.1} parent=11 // pred_fallthru
        _
      // Predicated region
      $region21: #{up_forward.1} parent=11 // pred_check
        %p184 = pneg %p114
      $region22: #{up_forward.1} parent=11 // pred_check_branch
        %186 = sbr.rel (%p184) target = $region24
      $region23: #{up_forward.1} parent=11 // pred_region
        _
      $region24: #{up_forward.1} parent=11 // pred_fallthru
        _
      // Predicated region
      $region25: #{up_forward.1} parent=11 // pred_check
        %p187 = pneg %p135
      $region26: #{up_forward.1} parent=11 // pred_check_branch
        %189 = sbr.rel (%p187) target = $region28
      $region27: #{up_forward.1} parent=11 // pred_region
        _
      $region28: #{up_forward.1} parent=11 // pred_fallthru
        _
    $region12: #{up_forward.1} parent=5 // pred_fallthru
      _
    %p190 = scmp.lt.s32.totalorder %s11, 4
    // Predicated region
    $region29: #{up_forward.1} parent=5 // pred_check
      %p191 = pneg %p190
    $region30: #{up_forward.1} parent=5 // pred_check_branch
      %193 = sbr.rel (%p191) target = $region32
    $region31: #{up_forward.1} parent=5 // pred_region
      // Predicated region
      $region33: #{up_forward.1} parent=31 // pred_check
        %p194 = pneg %p45
      $region34: #{up_forward.1} parent=31 // pred_check_branch
        %196 = sbr.rel (%p194) target = $region36
      $region35: #{up_forward.1} parent=31 // pred_region
        %p197 = scmp.lt.s32.totalorder %s18, 1
        %s198 = scalar_select %p197, %s18, 1
        %p199 = scmp.lt.s32.totalorder %s19, 1
        %s200 = scalar_select %p199, %s19, 1
        %s201 = smul.addr %s200, 30
        %s202 = smul.addr %s198, 60
        %s203 = sadd.s32 %s201, %s202
        %s204 = smul.addr %s203, 4
        %s205 = scalar_lea.vmem %s0, %s204
      $region36: #{up_forward.1} parent=31 // pred_fallthru
        _
    $region32: #{up_forward.1} parent=5 // pred_fallthru
      _
    %p206 = scmp.le.s32.totalorder 1, %s11
    %p207 = scmp.lt.s32.totalorder %s11, 5
    %p208 = pnand %p206, %p207
    %p209 = pneg %p208
    // Predicated region
    $region37: #{up_forward.1} parent=5 // pred_check
      _
    $region38: #{up_forward.1} parent=5 // pred_check_branch
      %211 = sbr.rel (%p208) target = $region40
    $region39: #{up_forward.1} parent=5 // pred_region
      %s212 = ssub.s32 %s11, 1
      %p213 = scmp.lt.s32.totalorder %s20, 1
      %s214 = scalar_select %p213, %s20, 1
      %p215 = scmp.lt.s32.totalorder %s21, 1
      %s216 = scalar_select %p215, %s21, 1
      %s217 = smul.addr %s216, 30
      %s218 = smul.addr %s214, 60
      %s219 = sadd.s32 %s217, %s218
      %s220 = smul.addr %s219, 4
      %s221 = scalar_lea.vmem %s0, %s220
      %p222 = pneg %p51
      %p223 = pneg %p48
      %p224 = pneg %p72
      %p225 = pneg %p69
      %p226 = pneg %p93
      %p227 = pneg %p90
      %p228 = pneg %p114
      %p229 = pneg %p111
      %p230 = pneg %p135
      %p231 = pneg %p132
      %p232 = pneg %p163
      %p233 = pneg %p160
      %s234 = smul.u32 18, %s21
      %p235 = scmp.lt.s32.totalorder %s20, 1
      %s236 = scalar_select %p235, %s20, 1
      %p237 = scmp.lt.s32.totalorder %s234, 35
      %s238 = scalar_select %p237, %s234, 35
      %s239 = smul.addr %s236, 36
      %s240 = sadd.s32 %s238, %s239
      %s241 = smul.addr %s240, 4
      %s242 = scalar_lea.vmem %s5, %s241
      %p243 = scmp.lt.s32.totalorder %s20, 1
      %s244 = scalar_select %p243, %s20, 1
      %p245 = scmp.lt.s32.totalorder %s21, 1
      %s246 = scalar_select %p245, %s21, 1
      %s247 = smul.addr %s246, 30
      %s248 = smul.addr %s244, 60
      %s249 = sadd.s32 %s247, %s248
      %s250 = smul.addr %s249, 4
      %s251 = scalar_lea.vmem %s0, %s250
      %s252 = smul.u32 18, %s21
      %p253 = scmp.lt.s32.totalorder %s20, 1
      %s254 = scalar_select %p253, %s20, 1
      %p255 = scmp.lt.s32.totalorder %s252, 35
      %s256 = scalar_select %p255, %s252, 35
      %s257 = smul.addr %s254, 36
      %s258 = sadd.s32 %s256, %s257
      %s259 = smul.addr %s258, 4
      %s260 = scalar_lea.vmem %s5, %s259
      %s261 = smul.u32 18, %s21
      %v263 = vld [vmem:[%s251] sm:$0xf]
      %v264 = vld [vmem:[%s251 + $0x4] sm:$0xf]
      %v265 = vld [vmem:[%s251 + $0x8] sm:$0xf]
      %v266 = vld [vmem:[%s251 + $0xc] sm:$0xf]
      %v267 = vld [vmem:[%s251 + $0x10] sm:$0xf]
      %v268 = vld [vmem:[%s251 + $0x14] sm:$0xf]
      %v269 = vld [vmem:[%s251 + $0x18] sm:$0xf]
      %v270 = vld [vmem:[%s251 + $0x1c] sm:$0xf]
      %v271 = vld [vmem:[%s251 + $0x20] sm:$0xf]
      %v272 = vld [vmem:[%s251 + $0x24] sm:$0xf]
      %v273 = vld [vmem:[%s251 + $0x28] sm:$0xf]
      %v274 = vld [vmem:[%s251 + $0x2c] sm:$0xf]
      %v275 = vld [vmem:[%s251 + $0x30] sm:$0xf]
      %v276 = vld [vmem:[%s251 + $0x34] sm:$0xf]
      %v277 = vld [vmem:[%s251 + $0x38] sm:$0xf]
      %v278 = vld [vmem:[%s251 + $0x3c] sm:$0xf]
      %v279 = vld [vmem:[%s251 + $0x40] sm:$0xf]
      %v280 = vld [vmem:[%s251 + $0x44] sm:$0xf]
      %v281 = vld [vmem:[%s251 + $0x48] sm:$0xf]
      %v282 = vld [vmem:[%s251 + $0x4c] sm:$0xf]
      %v283 = vld [vmem:[%s251 + $0x50] sm:$0xf]
      %v284 = vld [vmem:[%s251 + $0x54] sm:$0xf]
      %v285 = vld [vmem:[%s251 + $0x58] sm:$0x3]
      %v286 = vld [vmem:[%s1] sm:$0xf]
      %v287 = vld [vmem:[%s1 + $0x4] sm:$0xf]
      %v288 = vld [vmem:[%s1 + $0x8] sm:$0xf]
      %v289 = vld [vmem:[%s1 + $0xc] sm:$0xf]
      %v290 = vld [vmem:[%s1 + $0x10] sm:$0xf]
      %v291 = vld [vmem:[%s1 + $0x14] sm:$0xf]
      %v292 = vld [vmem:[%s1 + $0x18] sm:$0xf]
      %v293 = vld [vmem:[%s1 + $0x1c] sm:$0xf]
      %v294 = vld [vmem:[%s1 + $0x20] sm:$0xf]
      %v295 = vld [vmem:[%s1 + $0x24] sm:$0xf]
      %v296 = vld [vmem:[%s1 + $0x28] sm:$0xf]
      %v297 = vld [vmem:[%s1 + $0x2c] sm:$0xf]
      %v298 = vld [vmem:[%s1 + $0x30] sm:$0xf]
      %v299 = vld [vmem:[%s1 + $0x34] sm:$0xf]
      %v300 = vld [vmem:[%s1 + $0x38] sm:$0xf]
      %v301 = vld [vmem:[%s1 + $0x3c] sm:$0xf]
      %v302 = vld [vmem:[%s251 + $0x58] sm:$0x7]
      %v303 = vld [vmem:[%s1 + $0x40] sm:$0xf]
      %v304 = vld [vmem:[%s1 + $0x44] sm:$0xf]
      %v305 = vld [vmem:[%s1 + $0x48] sm:$0xf]
      %v306 = vld [vmem:[%s1 + $0x4c] sm:$0xf]
      %v307 = vld [vmem:[%s1 + $0x50] sm:$0xf]
      %v308 = vld [vmem:[%s1 + $0x54] sm:$0xf]
      %v309 = vld [vmem:[%s1 + $0x58] sm:$0xf]
      %v310 = vld [vmem:[%s1 + $0x5c] sm:$0xf]
      %v311 = vld [vmem:[%s1 + $0x60] sm:$0xf]
      %v312 = vld [vmem:[%s1 + $0x64] sm:$0xf]
      %v313 = vld [vmem:[%s1 + $0x68] sm:$0xf]
      %v314 = vld [vmem:[%s1 + $0x6c] sm:$0xf]
      %v315 = vld [vmem:[%s1 + $0x70] sm:$0xf]
      %v316 = vld [vmem:[%s1 + $0x74] sm:$0xf]
      %v317 = vld [vmem:[%s1 + $0x78] sm:$0xf]
      %v318 = vld [vmem:[%s1 + $0x7c] sm:$0xf]
      %v342 = vunpack.c.l.b16 %v263
      %v343 = vunpack.c.l.b16 %v264
      %v344 = vunpack.c.l.b16 %v265
      %v345 = vunpack.c.l.b16 %v266
      %v346 = vunpack.c.l.b16 %v267
      %v347 = vunpack.c.l.b16 %v268
      %v348 = vunpack.c.l.b16 %v269
      %v349 = vunpack.c.l.b16 %v270
      %v350 = vunpack.c.l.b16 %v271
      %v351 = vunpack.c.l.b16 %v272
      %v352 = vunpack.c.l.b16 %v273
      %v353 = vunpack.c.l.b16 %v274
      %v354 = vunpack.c.l.b16 %v275
      %v355 = vunpack.c.l.b16 %v276
      %v356 = vunpack.c.l.b16 %v277
      %v357 = vunpack.c.l.b16 %v278
      %v358 = vunpack.c.l.b16 %v279
      %v359 = vunpack.c.l.b16 %v280
      %v360 = vunpack.c.l.b16 %v281
      %v361 = vunpack.c.l.b16 %v282
      %v362 = vunpack.c.l.b16 %v283
      %v363 = vunpack.c.l.b16 %v284
      %v364 = vunpack.c.l.b16 %v302
      %v365 = vpack.c.b16 %v343, %v342
      %v366 = vpack.c.b16 %v345, %v344
      %v367 = vpack.c.b16 %v347, %v346
      %v368 = vpack.c.b16 %v349, %v348
      %v369 = vpack.c.b16 %v351, %v350
      %v370 = vpack.c.b16 %v353, %v352
      %v371 = vpack.c.b16 %v355, %v354
      %v372 = vpack.c.b16 %v357, %v356
      %v373 = vpack.c.b16 %v359, %v358
      %v374 = vpack.c.b16 %v361, %v360
      %v375 = vpack.c.b16 %v363, %v362
      %v376 = vpack.c.b16 %v364, %v364
      %vm377 = vsmask.f32 7424
      %v379 = vshrl.u32 %v365, 16
      %v381 = vshll.u32 %v365, 16
      %v383 = vrot.slane %v381, 1
      %v384 = vor.u32 %v379, %v383
      %v386 = vshll.u32 %v366, 16
      %v388 = vrot.slane %v386, 1
      %v389 = vsel %vm377, %v384, %v388
      %v390 = vshrl.u32 %v366, 16
      %v392 = vor.u32 %v390, %v388
      %v394 = vshll.u32 %v367, 16
      %v396 = vrot.slane %v394, 1
      %v397 = vsel %vm377, %v392, %v396
      %v398 = vshrl.u32 %v367, 16
      %v400 = vor.u32 %v398, %v396
      %v402 = vshll.u32 %v368, 16
      %v404 = vrot.slane %v402, 1
      %v405 = vsel %vm377, %v400, %v404
      %v406 = vshrl.u32 %v368, 16
      %v408 = vor.u32 %v406, %v404
      %v410 = vshll.u32 %v369, 16
      %v412 = vrot.slane %v410, 1
      %v413 = vsel %vm377, %v408, %v412
      %v414 = vshrl.u32 %v369, 16
      %v416 = vor.u32 %v414, %v412
      %v418 = vshll.u32 %v370, 16
      %v420 = vrot.slane %v418, 1
      %v421 = vsel %vm377, %v416, %v420
      %v422 = vshrl.u32 %v370, 16
      %v424 = vor.u32 %v422, %v420
      %v426 = vshll.u32 %v371, 16
      %v428 = vrot.slane %v426, 1
      %v429 = vsel %vm377, %v424, %v428
      %v430 = vshrl.u32 %v371, 16
      %v432 = vor.u32 %v430, %v428
      %v434 = vshll.u32 %v372, 16
      %v436 = vrot.slane %v434, 1
      %v437 = vsel %vm377, %v432, %v436
      %v438 = vshrl.u32 %v372, 16
      %v440 = vor.u32 %v438, %v436
      %v442 = vshll.u32 %v373, 16
      %v444 = vrot.slane %v442, 1
      %v445 = vsel %vm377, %v440, %v444
      %v446 = vshrl.u32 %v373, 16
      %v448 = vor.u32 %v446, %v444
      %v450 = vshll.u32 %v374, 16
      %v452 = vrot.slane %v450, 1
      %v453 = vsel %vm377, %v448, %v452
      %v454 = vshrl.u32 %v374, 16
      %v456 = vor.u32 %v454, %v452
      %v458 = vshll.u32 %v375, 16
      %v460 = vrot.slane %v458, 1
      %v461 = vsel %vm377, %v456, %v460
      %v462 = vshrl.u32 %v375, 16
      %v464 = vor.u32 %v462, %v460
      %v466 = vshll.u32 %v376, 16
      %v468 = vrot.slane %v466, 1
      %v469 = vsel %vm377, %v464, %v468
      %v470 = vshrl.u32 %v376, 16
      %v472 = vor.u32 %v470, %v468
      %v501 = vunpack.c.l.b16 %v303
      %v502 = vunpack.c.l.b16 %v304
      %v503 = vunpack.c.l.b16 %v305
      %v504 = vunpack.c.l.b16 %v306
      %v505 = vunpack.c.l.b16 %v307
      %v506 = vunpack.c.l.b16 %v308
      %v507 = vunpack.c.l.b16 %v309
      %v508 = vunpack.c.l.b16 %v310
      %v509 = vunpack.c.l.b16 %v311
      %v510 = vunpack.c.l.b16 %v312
      %v511 = vunpack.c.l.b16 %v313
      %v512 = vunpack.c.l.b16 %v314
      %v513 = vunpack.c.l.b16 %v315
      %v514 = vunpack.c.l.b16 %v316
      %v515 = vunpack.c.l.b16 %v317
      %v516 = vunpack.c.l.b16 %v318
      %v517 = vpack.c.b16 %v502, %v501
      %v518 = vpack.c.b16 %v504, %v503
      %v519 = vpack.c.b16 %v506, %v505
      %v520 = vpack.c.b16 %v508, %v507
      %v521 = vpack.c.b16 %v510, %v509
      %v522 = vpack.c.b16 %v512, %v511
      %v523 = vpack.c.b16 %v514, %v513
      %v524 = vpack.c.b16 %v516, %v515
      %533 = vmatprep.subr.bf16.mxu0 0
      %534 = vmatpush1.bf16.msra.mxu0 %v517
      %535 = vmatprep.subr.bf16.mxu0 0
      %536 = vmatpush1.bf16.msra.mxu0 %v518
      %537 = vmatprep.subr.bf16.mxu0 0
      %538 = vmatpush1.bf16.msra.mxu0 %v519
      %539 = vmatprep.subr.bf16.mxu0 0
      %540 = vmatpush1.bf16.msra.mxu0 %v520
      %541 = vmatprep.subr.bf16.mxu0 0
      %542 = vmatpush1.bf16.msra.mxu0 %v521
      %543 = vmatprep.subr.bf16.mxu0 0
      %544 = vmatpush1.bf16.msra.mxu0 %v522
      %545 = vmatprep.subr.bf16.mxu0 0
      %546 = vmatpush1.bf16.msra.mxu0 %v523
      %547 = vmatprep.subr.bf16.mxu0 0
      %548 = vmatpush1.bf16.msra.mxu0 %v524
      %549 = vmatprep.subr.bf16.mxu0 0
      %550 = vmatpush1.bf16.msra.mxu0 0
      %551 = vmatprep.subr.bf16.mxu0 0
      %552 = vmatpush1.bf16.msra.mxu0 0
      %553 = vmatprep.subr.bf16.mxu0 0
      %554 = vmatpush1.bf16.msra.mxu0 0
      %555 = vmatprep.subr.bf16.mxu0 0
      %556 = vmatpush1.bf16.msra.mxu0 0
      %557 = vmatprep.subr.bf16.mxu0 0
      %558 = vmatpush1.bf16.msra.mxu0 0
      %559 = vmatprep.subr.bf16.mxu0 0
      %560 = vmatpush1.bf16.msra.mxu0 0
      %561 = vmatprep.subr.bf16.mxu0 0
      %562 = vmatpush1.bf16.msra.mxu0 0
      %563 = vmatprep.subr.bf16.mxu0 0
      %564 = vmatpush1.bf16.msra.mxu0 0
      %565 = vmatprep.mubr.bf16.mxu0 0
      %566 = vmatmul.mubr.bf16.gmra.mrb[0].mxu0 %v389
      %v567 = vpop.f32.mrb[0].mxu0
      %v568 = vadd.f32 0.0, %v567
      %v569 = vpop.f32.mrb[0].mxu0
      %v570 = vpop.f32.mrb[0].mxu0
      %v571 = vadd.f32 0.0, %v570
      %v572 = vpop.f32.mrb[0].mxu0
      %573 = vmatprep.mubr.bf16.mxu0 0
      %574 = vmatmul.mubr.bf16.gmra.mrb[0].mxu0 %v397
      %v575 = vpop.f32.mrb[0].mxu0
      %v576 = vadd.f32 0.0, %v575
      %v577 = vpop.f32.mrb[0].mxu0
      %v578 = vpop.f32.mrb[0].mxu0
      %v579 = vadd.f32 0.0, %v578
      %v580 = vpop.f32.mrb[0].mxu0
      %581 = vmatprep.mubr.bf16.mxu0 0
      %582 = vmatmul.mubr.bf16.gmra.mrb[0].mxu0 %v405
      %v583 = vpop.f32.mrb[0].mxu0
      %v584 = vadd.f32 0.0, %v583
      %v585 = vpop.f32.mrb[0].mxu0
      %v586 = vpop.f32.mrb[0].mxu0
      %v587 = vadd.f32 0.0, %v586
      %v588 = vpop.f32.mrb[0].mxu0
      %589 = vmatprep.mubr.bf16.mxu0 0
      %590 = vmatmul.mubr.bf16.gmra.mrb[0].mxu0 %v413
      %v591 = vpop.f32.mrb[0].mxu0
      %v592 = vadd.f32 0.0, %v591
      %v593 = vpop.f32.mrb[0].mxu0
      %v594 = vpop.f32.mrb[0].mxu0
      %v595 = vadd.f32 0.0, %v594
      %v596 = vpop.f32.mrb[0].mxu0
      %597 = vmatprep.mubr.bf16.mxu0 0
      %598 = vmatmul.mubr.bf16.gmra.mrb[0].mxu0 %v421
      %v599 = vpop.f32.mrb[0].mxu0
      %v600 = vadd.f32 0.0, %v599
      %v601 = vpop.f32.mrb[0].mxu0
      %v602 = vpop.f32.mrb[0].mxu0
      %v603 = vadd.f32 0.0, %v602
      %v604 = vpop.f32.mrb[0].mxu0
      %605 = vmatprep.mubr.bf16.mxu0 0
      %606 = vmatmul.mubr.bf16.gmra.mrb[0].mxu0 %v429
      %v607 = vpop.f32.mrb[0].mxu0
      %v608 = vadd.f32 0.0, %v607
      %v609 = vpop.f32.mrb[0].mxu0
      %v610 = vpop.f32.mrb[0].mxu0
      %v611 = vadd.f32 0.0, %v610
      %v612 = vpop.f32.mrb[0].mxu0
      %613 = vmatprep.mubr.bf16.mxu0 0
      %614 = vmatmul.mubr.bf16.gmra.mrb[0].mxu0 %v437
      %v615 = vpop.f32.mrb[0].mxu0
      %v616 = vadd.f32 0.0, %v615
      %v617 = vpop.f32.mrb[0].mxu0
      %v618 = vpop.f32.mrb[0].mxu0
      %v619 = vadd.f32 0.0, %v618
      %v620 = vpop.f32.mrb[0].mxu0
      %621 = vmatprep.mubr.bf16.mxu0 0
      %622 = vmatmul.mubr.bf16.gmra.mrb[0].mxu0 %v445
      %v623 = vpop.f32.mrb[0].mxu0
      %v624 = vadd.f32 0.0, %v623
      %v625 = vpop.f32.mrb[0].mxu0
      %v626 = vpop.f32.mrb[0].mxu0
      %v627 = vadd.f32 0.0, %v626
      %v628 = vpop.f32.mrb[0].mxu0
      %629 = vmatprep.mubr.bf16.mxu0 0
      %630 = vmatmul.mubr.bf16.gmra.mrb[0].mxu0 %v453
      %v631 = vpop.f32.mrb[0].mxu0
      %v632 = vadd.f32 0.0, %v631
      %v633 = vpop.f32.mrb[0].mxu0
      %v634 = vpop.f32.mrb[0].mxu0
      %v635 = vadd.f32 0.0, %v634
      %v636 = vpop.f32.mrb[0].mxu0
      %637 = vmatprep.mubr.bf16.mxu0 0
      %638 = vmatmul.mubr.bf16.gmra.mrb[0].mxu0 %v461
      %v639 = vpop.f32.mrb[0].mxu0
      %v640 = vadd.f32 0.0, %v639
      %v641 = vpop.f32.mrb[0].mxu0
      %v642 = vpop.f32.mrb[0].mxu0
      %v643 = vadd.f32 0.0, %v642
      %v644 = vpop.f32.mrb[0].mxu0
      %645 = vmatprep.mubr.bf16.mxu0 0
      %646 = vmatmul.mubr.bf16.gmra.mrb[0].mxu0 %v469
      %v647 = vpop.f32.mrb[0].mxu0
      %v648 = vadd.f32 0.0, %v647
      %v649 = vpop.f32.mrb[0].mxu0
      %v650 = vpop.f32.mrb[0].mxu0
      %v651 = vadd.f32 0.0, %v650
      %v652 = vpop.f32.mrb[0].mxu0
      %653 = vmatprep.mubr.bf16.mxu0 0
      %654 = vmatmul.mubr.bf16.gmra.mrb[0].mxu0 %v472
      %v655 = vpop.f32.mrb[0].mxu0
      %v656 = vadd.f32 0.0, %v655
      %v657 = vpop.f32.mrb[0].mxu0
      %v658 = vpop.f32.mrb[0].mxu0
      %v659 = vpop.f32.mrb[0].mxu0
      %660 = vdwg.mxu0
      %v662 = vunpack.c.l.b16 %v285
      %v663 = vpack.c.b16 %v662, %v662
      %v692 = vunpack.c.l.b16 %v286
      %v693 = vunpack.c.l.b16 %v287
      %v694 = vunpack.c.l.b16 %v288
      %v695 = vunpack.c.l.b16 %v289
      %v696 = vunpack.c.l.b16 %v290
      %v697 = vunpack.c.l.b16 %v291
      %v698 = vunpack.c.l.b16 %v292
      %v699 = vunpack.c.l.b16 %v293
      %v700 = vunpack.c.l.b16 %v294
      %v701 = vunpack.c.l.b16 %v295
      %v702 = vunpack.c.l.b16 %v296
      %v703 = vunpack.c.l.b16 %v297
      %v704 = vunpack.c.l.b16 %v298
      %v705 = vunpack.c.l.b16 %v299
      %v706 = vunpack.c.l.b16 %v300
      %v707 = vunpack.c.l.b16 %v301
      %v708 = vpack.c.b16 %v693, %v692
      %v709 = vpack.c.b16 %v695, %v694
      %v710 = vpack.c.b16 %v697, %v696
      %v711 = vpack.c.b16 %v699, %v698
      %v712 = vpack.c.b16 %v701, %v700
      %v713 = vpack.c.b16 %v703, %v702
      %v714 = vpack.c.b16 %v705, %v704
      %v715 = vpack.c.b16 %v707, %v706
      %724 = vmatprep.subr.bf16.mxu0 0
      %725 = vmatpush1.bf16.msra.mxu0 %v708
      %726 = vmatprep.subr.bf16.mxu0 0
      %727 = vmatpush1.bf16.msra.mxu0 %v709
      %728 = vmatprep.subr.bf16.mxu0 0
      %729 = vmatpush1.bf16.msra.mxu0 %v710
      %730 = vmatprep.subr.bf16.mxu0 0
      %731 = vmatpush1.bf16.msra.mxu0 %v711
      %732 = vmatprep.subr.bf16.mxu0 0
      %733 = vmatpush1.bf16.msra.mxu0 %v712
      %734 = vmatprep.subr.bf16.mxu0 0
      %735 = vmatpush1.bf16.msra.mxu0 %v713
      %736 = vmatprep.subr.bf16.mxu0 0
      %737 = vmatpush1.bf16.msra.mxu0 %v714
      %738 = vmatprep.subr.bf16.mxu0 0
      %739 = vmatpush1.bf16.msra.mxu0 %v715
      %740 = vmatprep.subr.bf16.mxu0 0
      %741 = vmatpush1.bf16.msra.mxu0 0
      %742 = vmatprep.subr.bf16.mxu0 0
      %743 = vmatpush1.bf16.msra.mxu0 0
      %744 = vmatprep.subr.bf16.mxu0 0
      %745 = vmatpush1.bf16.msra.mxu0 0
      %746 = vmatprep.subr.bf16.mxu0 0
      %747 = vmatpush1.bf16.msra.mxu0 0
      %748 = vmatprep.subr.bf16.mxu0 0
      %749 = vmatpush1.bf16.msra.mxu0 0
      %750 = vmatprep.subr.bf16.mxu0 0
      %751 = vmatpush1.bf16.msra.mxu0 0
      %752 = vmatprep.subr.bf16.mxu0 0
      %753 = vmatpush1.bf16.msra.mxu0 0
      %754 = vmatprep.subr.bf16.mxu0 0
      %755 = vmatpush1.bf16.msra.mxu0 0
      %756 = vmatprep.mubr.bf16.mxu0 0
      %757 = vmatmul.mubr.bf16.gmra.mrb[0].mxu0 %v365
      %v758 = vpop.f32.mrb[0].mxu0
      %v759 = vadd.f32 %v568, %v758
      %v760 = vpop.f32.mrb[0].mxu0
      %v761 = vpop.f32.mrb[0].mxu0
      %v762 = vadd.f32 %v571, %v761
      %v763 = vpop.f32.mrb[0].mxu0
      %764 = vmatprep.mubr.bf16.mxu0 0
      %765 = vmatmul.mubr.bf16.gmra.mrb[0].mxu0 %v366
      %v766 = vpop.f32.mrb[0].mxu0
      %v767 = vadd.f32 %v576, %v766
      %v768 = vpop.f32.mrb[0].mxu0
      %v769 = vpop.f32.mrb[0].mxu0
      %v770 = vadd.f32 %v579, %v769
      %v771 = vpop.f32.mrb[0].mxu0
      %772 = vmatprep.mubr.bf16.mxu0 0
      %773 = vmatmul.mubr.bf16.gmra.mrb[0].mxu0 %v367
      %v774 = vpop.f32.mrb[0].mxu0
      %v775 = vadd.f32 %v584, %v774
      %v776 = vpop.f32.mrb[0].mxu0
      %v777 = vpop.f32.mrb[0].mxu0
      %v778 = vadd.f32 %v587, %v777
      %v779 = vpop.f32.mrb[0].mxu0
      %780 = vmatprep.mubr.bf16.mxu0 0
      %781 = vmatmul.mubr.bf16.gmra.mrb[0].mxu0 %v368
      %v782 = vpop.f32.mrb[0].mxu0
      %v783 = vadd.f32 %v592, %v782
      %v784 = vpop.f32.mrb[0].mxu0
      %v785 = vpop.f32.mrb[0].mxu0
      %v786 = vadd.f32 %v595, %v785
      %v787 = vpop.f32.mrb[0].mxu0
      %788 = vmatprep.mubr.bf16.mxu0 0
      %789 = vmatmul.mubr.bf16.gmra.mrb[0].mxu0 %v369
      %v790 = vpop.f32.mrb[0].mxu0
      %v791 = vadd.f32 %v600, %v790
      %v792 = vpop.f32.mrb[0].mxu0
      %v793 = vpop.f32.mrb[0].mxu0
      %v794 = vadd.f32 %v603, %v793
      %v795 = vpop.f32.mrb[0].mxu0
      %796 = vmatprep.mubr.bf16.mxu0 0
      %797 = vmatmul.mubr.bf16.gmra.mrb[0].mxu0 %v370
      %v798 = vpop.f32.mrb[0].mxu0
      %v799 = vadd.f32 %v608, %v798
      %v800 = vpop.f32.mrb[0].mxu0
      %v801 = vpop.f32.mrb[0].mxu0
      %v802 = vadd.f32 %v611, %v801
      %v803 = vpop.f32.mrb[0].mxu0
      %804 = vmatprep.mubr.bf16.mxu0 0
      %805 = vmatmul.mubr.bf16.gmra.mrb[0].mxu0 %v371
      %v806 = vpop.f32.mrb[0].mxu0
      %v807 = vadd.f32 %v616, %v806
      %v808 = vpop.f32.mrb[0].mxu0
      %v809 = vpop.f32.mrb[0].mxu0
      %v810 = vadd.f32 %v619, %v809
      %v811 = vpop.f32.mrb[0].mxu0
      %812 = vmatprep.mubr.bf16.mxu0 0
      %813 = vmatmul.mubr.bf16.gmra.mrb[0].mxu0 %v372
      %v814 = vpop.f32.mrb[0].mxu0
      %v815 = vadd.f32 %v624, %v814
      %v816 = vpop.f32.mrb[0].mxu0
      %v817 = vpop.f32.mrb[0].mxu0
      %v818 = vadd.f32 %v627, %v817
      %v819 = vpop.f32.mrb[0].mxu0
      %820 = vmatprep.mubr.bf16.mxu0 0
      %821 = vmatmul.mubr.bf16.gmra.mrb[0].mxu0 %v373
      %v822 = vpop.f32.mrb[0].mxu0
      %v823 = vadd.f32 %v632, %v822
      %v824 = vpop.f32.mrb[0].mxu0
      %v825 = vpop.f32.mrb[0].mxu0
      %v826 = vadd.f32 %v635, %v825
      %v827 = vpop.f32.mrb[0].mxu0
      %828 = vmatprep.mubr.bf16.mxu0 0
      %829 = vmatmul.mubr.bf16.gmra.mrb[0].mxu0 %v374
      %v830 = vpop.f32.mrb[0].mxu0
      %v831 = vadd.f32 %v640, %v830
      %v832 = vpop.f32.mrb[0].mxu0
      %v833 = vpop.f32.mrb[0].mxu0
      %v834 = vadd.f32 %v643, %v833
      %v835 = vpop.f32.mrb[0].mxu0
      %836 = vmatprep.mubr.bf16.mxu0 0
      %837 = vmatmul.mubr.bf16.gmra.mrb[0].mxu0 %v375
      %v838 = vpop.f32.mrb[0].mxu0
      %v839 = vadd.f32 %v648, %v838
      %v840 = vpop.f32.mrb[0].mxu0
      %v841 = vpop.f32.mrb[0].mxu0
      %v842 = vadd.f32 %v651, %v841
      %v843 = vpop.f32.mrb[0].mxu0
      %844 = vmatprep.mubr.bf16.mxu0 0
      %845 = vmatmul.mubr.bf16.gmra.mrb[0].mxu0 %v663
      %v846 = vpop.f32.mrb[0].mxu0
      %v847 = vadd.f32 %v656, %v846
      %v848 = vpop.f32.mrb[0].mxu0
      %v849 = vpop.f32.mrb[0].mxu0
      %v850 = vpop.f32.mrb[0].mxu0
      %851 = vdwg.mxu0
      %v852 = vld [vmem:[%s251] sm:$0xe]
      %v853 = vld [vmem:[%s1 + $0x80] sm:$0xf]
      %v854 = vld [vmem:[%s1 + $0x84] sm:$0xf]
      %v855 = vld [vmem:[%s1 + $0x88] sm:$0xf]
      %v856 = vld [vmem:[%s1 + $0x8c] sm:$0xf]
      %v857 = vld [vmem:[%s1 + $0x90] sm:$0xf]
      %v858 = vld [vmem:[%s1 + $0x94] sm:$0xf]
      %v859 = vld [vmem:[%s1 + $0x98] sm:$0xf]
      %v860 = vld [vmem:[%s1 + $0x9c] sm:$0xf]
      %v861 = vld [vmem:[%s1 + $0xa0] sm:$0xf]
      %v862 = vld [vmem:[%s1 + $0xa4] sm:$0xf]
      %v863 = vld [vmem:[%s1 + $0xa8] sm:$0xf]
      %v864 = vld [vmem:[%s1 + $0xac] sm:$0xf]
      %v865 = vld [vmem:[%s1 + $0xb0] sm:$0xf]
      %v866 = vld [vmem:[%s1 + $0xb4] sm:$0xf]
      %v867 = vld [vmem:[%s1 + $0xb8] sm:$0xf]
      %v868 = vld [vmem:[%s1 + $0xbc] sm:$0xf]
      %v870 = vunpack.c.l.b16 %v852
      %v871 = vpack.c.b16 %v343, %v870
      %vm872 = vcmask 1046528
      %v873 = vrot.slane %v871, 1
      %v874 = vrot.slane %v366, 1
      %v875 = vsel %vm872, %v873, %v874
      %v876 = vrot.slane %v367, 1
      %v877 = vsel %vm872, %v874, %v876
      %v878 = vrot.slane %v368, 1
      %v879 = vsel %vm872, %v876, %v878
      %v880 = vrot.slane %v369, 1
      %v881 = vsel %vm872, %v878, %v880
      %v882 = vrot.slane %v370, 1
      %v883 = vsel %vm872, %v880, %v882
      %v884 = vrot.slane %v371, 1
      %v885 = vsel %vm872, %v882, %v884
      %v886 = vrot.slane %v372, 1
      %v887 = vsel %vm872, %v884, %v886
      %v888 = vrot.slane %v373, 1
      %v889 = vsel %vm872, %v886, %v888
      %v890 = vrot.slane %v374, 1
      %v891 = vsel %vm872, %v888, %v890
      %v892 = vrot.slane %v375, 1
      %v893 = vsel %vm872, %v890, %v892
      %v894 = vrot.slane %v376, 1
      %v895 = vsel %vm872, %v892, %v894
      %v924 = vunpack.c.l.b16 %v853
      %v925 = vunpack.c.l.b16 %v854
      %v926 = vunpack.c.l.b16 %v855
      %v927 = vunpack.c.l.b16 %v856
      %v928 = vunpack.c.l.b16 %v857
      %v929 = vunpack.c.l.b16 %v858
      %v930 = vunpack.c.l.b16 %v859
      %v931 = vunpack.c.l.b16 %v860
      %v932 = vunpack.c.l.b16 %v861
      %v933 = vunpack.c.l.b16 %v862
      %v934 = vunpack.c.l.b16 %v863
      %v935 = vunpack.c.l.b16 %v864
      %v936 = vunpack.c.l.b16 %v865
      %v937 = vunpack.c.l.b16 %v866
      %v938 = vunpack.c.l.b16 %v867
      %v939 = vunpack.c.l.b16 %v868
      %v940 = vpack.c.b16 %v925, %v924
      %v941 = vpack.c.b16 %v927, %v926
      %v942 = vpack.c.b16 %v929, %v928
      %v943 = vpack.c.b16 %v931, %v930
      %v944 = vpack.c.b16 %v933, %v932
      %v945 = vpack.c.b16 %v935, %v934
      %v946 = vpack.c.b16 %v937, %v936
      %v947 = vpack.c.b16 %v939, %v938
      %956 = vmatprep.subr.bf16.mxu0 0
      %957 = vmatpush1.bf16.msra.mxu0 %v940
      %958 = vmatprep.subr.bf16.mxu0 0
      %959 = vmatpush1.bf16.msra.mxu0 %v941
      %960 = vmatprep.subr.bf16.mxu0 0
      %961 = vmatpush1.bf16.msra.mxu0 %v942
      %962 = vmatprep.subr.bf16.mxu0 0
      %963 = vmatpush1.bf16.msra.mxu0 %v943
      %964 = vmatprep.subr.bf16.mxu0 0
      %965 = vmatpush1.bf16.msra.mxu0 %v944
      %966 = vmatprep.subr.bf16.mxu0 0
      %967 = vmatpush1.bf16.msra.mxu0 %v945
      %968 = vmatprep.subr.bf16.mxu0 0
      %969 = vmatpush1.bf16.msra.mxu0 %v946
      %970 = vmatprep.subr.bf16.mxu0 0
      %971 = vmatpush1.bf16.msra.mxu0 %v947
      %972 = vmatprep.subr.bf16.mxu0 0
      %973 = vmatpush1.bf16.msra.mxu0 0
      %974 = vmatprep.subr.bf16.mxu0 0
      %975 = vmatpush1.bf16.msra.mxu0 0
      %976 = vmatprep.subr.bf16.mxu0 0
      %977 = vmatpush1.bf16.msra.mxu0 0
      %978 = vmatprep.subr.bf16.mxu0 0
      %979 = vmatpush1.bf16.msra.mxu0 0
      %980 = vmatprep.subr.bf16.mxu0 0
      %981 = vmatpush1.bf16.msra.mxu0 0
      %982 = vmatprep.subr.bf16.mxu0 0
      %983 = vmatpush1.bf16.msra.mxu0 0
      %984 = vmatprep.subr.bf16.mxu0 0
      %985 = vmatpush1.bf16.msra.mxu0 0
      %986 = vmatprep.subr.bf16.mxu0 0
      %987 = vmatpush1.bf16.msra.mxu0 0
      %988 = vmatprep.mubr.bf16.mxu0 0
      %989 = vmatmul.mubr.bf16.gmra.mrb[0].mxu0 %v875
      %v990 = vpop.f32.mrb[0].mxu0
      %v991 = vadd.f32 0.0, %v990
      %v992 = vpop.f32.mrb[0].mxu0
      %v993 = vpop.f32.mrb[0].mxu0
      %v994 = vadd.f32 0.0, %v993
      %v995 = vpop.f32.mrb[0].mxu0
      %996 = vmatprep.mubr.bf16.mxu0 0
      %997 = vmatmul.mubr.bf16.gmra.mrb[0].mxu0 %v877
      %v998 = vpop.f32.mrb[0].mxu0
      %v999 = vadd.f32 0.0, %v998
      %v1000 = vpop.f32.mrb[0].mxu0
      %v1001 = vpop.f32.mrb[0].mxu0
      %v1002 = vadd.f32 0.0, %v1001
      %v1003 = vpop.f32.mrb[0].mxu0
      %1004 = vmatprep.mubr.bf16.mxu0 0
      %1005 = vmatmul.mubr.bf16.gmra.mrb[0].mxu0 %v879
      %v1006 = vpop.f32.mrb[0].mxu0
      %v1007 = vadd.f32 0.0, %v1006
      %v1008 = vpop.f32.mrb[0].mxu0
      %v1009 = vpop.f32.mrb[0].mxu0
      %v1010 = vadd.f32 0.0, %v1009
      %v1011 = vpop.f32.mrb[0].mxu0
      %1012 = vmatprep.mubr.bf16.mxu0 0
      %1013 = vmatmul.mubr.bf16.gmra.mrb[0].mxu0 %v881
      %v1014 = vpop.f32.mrb[0].mxu0
      %v1015 = vadd.f32 0.0, %v1014
      %v1016 = vpop.f32.mrb[0].mxu0
      %v1017 = vpop.f32.mrb[0].mxu0
      %v1018 = vadd.f32 0.0, %v1017
      %v1019 = vpop.f32.mrb[0].mxu0
      %1020 = vmatprep.mubr.bf16.mxu0 0
      %1021 = vmatmul.mubr.bf16.gmra.mrb[0].mxu0 %v883
      %v1022 = vpop.f32.mrb[0].mxu0
      %v1023 = vadd.f32 0.0, %v1022
      %v1024 = vpop.f32.mrb[0].mxu0
      %v1025 = vpop.f32.mrb[0].mxu0
      %v1026 = vadd.f32 0.0, %v1025
      %v1027 = vpop.f32.mrb[0].mxu0
      %1028 = vmatprep.mubr.bf16.mxu0 0
      %1029 = vmatmul.mubr.bf16.gmra.mrb[0].mxu0 %v885
      %v1030 = vpop.f32.mrb[0].mxu0
      %v1031 = vadd.f32 0.0, %v1030
      %v1032 = vpop.f32.mrb[0].mxu0
      %v1033 = vpop.f32.mrb[0].mxu0
      %v1034 = vadd.f32 0.0, %v1033
      %v1035 = vpop.f32.mrb[0].mxu0
      %1036 = vmatprep.mubr.bf16.mxu0 0
      %1037 = vmatmul.mubr.bf16.gmra.mrb[0].mxu0 %v887
      %v1038 = vpop.f32.mrb[0].mxu0
      %v1039 = vadd.f32 0.0, %v1038
      %v1040 = vpop.f32.mrb[0].mxu0
      %v1041 = vpop.f32.mrb[0].mxu0
      %v1042 = vadd.f32 0.0, %v1041
      %v1043 = vpop.f32.mrb[0].mxu0
      %1044 = vmatprep.mubr.bf16.mxu0 0
      %1045 = vmatmul.mubr.bf16.gmra.mrb[0].mxu0 %v889
      %v1046 = vpop.f32.mrb[0].mxu0
      %v1047 = vadd.f32 0.0, %v1046
      %v1048 = vpop.f32.mrb[0].mxu0
      %v1049 = vpop.f32.mrb[0].mxu0
      %v1050 = vadd.f32 0.0, %v1049
      %v1051 = vpop.f32.mrb[0].mxu0
      %1052 = vmatprep.mubr.bf16.mxu0 0
      %1053 = vmatmul.mubr.bf16.gmra.mrb[0].mxu0 %v891
      %v1054 = vpop.f32.mrb[0].mxu0
      %v1055 = vadd.f32 0.0, %v1054
      %v1056 = vpop.f32.mrb[0].mxu0
      %v1057 = vpop.f32.mrb[0].mxu0
      %v1058 = vadd.f32 0.0, %v1057
      %v1059 = vpop.f32.mrb[0].mxu0
      %1060 = vmatprep.mubr.bf16.mxu0 0
      %1061 = vmatmul.mubr.bf16.gmra.mrb[0].mxu0 %v893
      %v1062 = vpop.f32.mrb[0].mxu0
      %v1063 = vadd.f32 0.0, %v1062
      %v1064 = vpop.f32.mrb[0].mxu0
      %v1065 = vpop.f32.mrb[0].mxu0
      %v1066 = vadd.f32 0.0, %v1065
      %v1067 = vpop.f32.mrb[0].mxu0
      %1068 = vmatprep.mubr.bf16.mxu0 0
      %1069 = vmatmul.mubr.bf16.gmra.mrb[0].mxu0 %v895
      %v1070 = vpop.f32.mrb[0].mxu0
      %v1071 = vadd.f32 0.0, %v1070
      %v1072 = vpop.f32.mrb[0].mxu0
      %v1073 = vpop.f32.mrb[0].mxu0
      %v1074 = vadd.f32 0.0, %v1073
      %v1075 = vpop.f32.mrb[0].mxu0
      %1076 = vmatprep.mubr.bf16.mxu0 0
      %1077 = vmatmul.mubr.bf16.gmra.mrb[0].mxu0 %v894
      %v1078 = vpop.f32.mrb[0].mxu0
      %v1079 = vadd.f32 0.0, %v1078
      %v1080 = vpop.f32.mrb[0].mxu0
      %v1081 = vpop.f32.mrb[0].mxu0
      %v1082 = vpop.f32.mrb[0].mxu0
      %1083 = vdwg.mxu0
      %v1084 = vadd.f32 %v759, %v991
      %v1085 = vadd.f32 %v762, %v994
      %v1086 = vadd.f32 %v767, %v999
      %v1087 = vadd.f32 %v770, %v1002
      %v1088 = vadd.f32 %v775, %v1007
      %v1089 = vadd.f32 %v778, %v1010
      %v1090 = vadd.f32 %v783, %v1015
      %v1091 = vadd.f32 %v786, %v1018
      %v1092 = vadd.f32 %v791, %v1023
      %v1093 = vadd.f32 %v794, %v1026
      %v1094 = vadd.f32 %v799, %v1031
      %v1095 = vadd.f32 %v802, %v1034
      %v1096 = vadd.f32 %v807, %v1039
      %v1097 = vadd.f32 %v810, %v1042
      %v1098 = vadd.f32 %v815, %v1047
      %v1099 = vadd.f32 %v818, %v1050
      %v1100 = vadd.f32 %v823, %v1055
      %v1101 = vadd.f32 %v826, %v1058
      %v1102 = vadd.f32 %v831, %v1063
      %v1103 = vadd.f32 %v834, %v1066
      %v1104 = vadd.f32 %v839, %v1071
      %v1105 = vadd.f32 %v842, %v1074
      %v1106 = vadd.f32 %v847, %v1079
      %v1107 = vld [vmem:[%s251 + $0x8] sm:$0xe]
      %v1108 = vld [vmem:[%s251 + $0xc] sm:$0xf]
      %v1109 = vld [vmem:[%s251 + $0x10] sm:$0xf]
      %v1110 = vld [vmem:[%s251 + $0x14] sm:$0xf]
      %v1111 = vld [vmem:[%s251 + $0x18] sm:$0xf]
      %v1112 = vld [vmem:[%s251 + $0x1c] sm:$0xf]
      %v1113 = vld [vmem:[%s251 + $0x20] sm:$0xf]
      %v1114 = vld [vmem:[%s251 + $0x24] sm:$0xf]
      %v1115 = vld [vmem:[%s251 + $0x28] sm:$0xf]
      %v1116 = vld [vmem:[%s251 + $0x2c] sm:$0xf]
      %v1117 = vld [vmem:[%s251 + $0x30] sm:$0xf]
      %v1118 = vld [vmem:[%s251 + $0x34] sm:$0xf]
      %v1119 = vld [vmem:[%s251 + $0x38] sm:$0xf]
      %v1120 = vld [vmem:[%s251 + $0x3c] sm:$0xf]
      %v1121 = vld [vmem:[%s251 + $0x40] sm:$0xf]
      %v1122 = vld [vmem:[%s251 + $0x44] sm:$0xf]
      %v1123 = vld [vmem:[%s251 + $0x48] sm:$0xf]
      %v1124 = vld [vmem:[%s251 + $0x4c] sm:$0xf]
      %v1125 = vld [vmem:[%s251 + $0x50] sm:$0xf]
      %v1126 = vld [vmem:[%s251 + $0x54] sm:$0xf]
      %v1127 = vld [vmem:[%s251 + $0x58] sm:$0xf]
      %v1128 = vld [vmem:[%s251 + $0x5c] sm:$0xf]
      %v1129 = vld [vmem:[%s251 + $0x60] sm:$0x7]
      %v1130 = vld [vmem:[%s1 + $0xc0] sm:$0xf]
      %v1131 = vld [vmem:[%s1 + $0xc4] sm:$0xf]
      %v1132 = vld [vmem:[%s1 + $0xc8] sm:$0xf]
      %v1133 = vld [vmem:[%s1 + $0xcc] sm:$0xf]
      %v1134 = vld [vmem:[%s1 + $0xd0] sm:$0xf]
      %v1135 = vld [vmem:[%s1 + $0xd4] sm:$0xf]
      %v1136 = vld [vmem:[%s1 + $0xd8] sm:$0xf]
      %v1137 = vld [vmem:[%s1 + $0xdc] sm:$0xf]
      %v1138 = vld [vmem:[%s1 + $0xe0] sm:$0xf]
      %v1139 = vld [vmem:[%s1 + $0xe4] sm:$0xf]
      %v1140 = vld [vmem:[%s1 + $0xe8] sm:$0xf]
      %v1141 = vld [vmem:[%s1 + $0xec] sm:$0xf]
      %v1142 = vld [vmem:[%s1 + $0xf0] sm:$0xf]
      %v1143 = vld [vmem:[%s1 + $0xf4] sm:$0xf]
      %v1144 = vld [vmem:[%s1 + $0xf8] sm:$0xf]
      %v1145 = vld [vmem:[%s1 + $0xfc] sm:$0xf]
      %v1169 = vunpack.c.l.b16 %v1107
      %v1170 = vunpack.c.l.b16 %v1108
      %v1171 = vunpack.c.l.b16 %v1109
      %v1172 = vunpack.c.l.b16 %v1110
      %v1173 = vunpack.c.l.b16 %v1111
      %v1174 = vunpack.c.l.b16 %v1112
      %v1175 = vunpack.c.l.b16 %v1113
      %v1176 = vunpack.c.l.b16 %v1114
      %v1177 = vunpack.c.l.b16 %v1115
      %v1178 = vunpack.c.l.b16 %v1116
      %v1179 = vunpack.c.l.b16 %v1117
      %v1180 = vunpack.c.l.b16 %v1118
      %v1181 = vunpack.c.l.b16 %v1119
      %v1182 = vunpack.c.l.b16 %v1120
      %v1183 = vunpack.c.l.b16 %v1121
      %v1184 = vunpack.c.l.b16 %v1122
      %v1185 = vunpack.c.l.b16 %v1123
      %v1186 = vunpack.c.l.b16 %v1124
      %v1187 = vunpack.c.l.b16 %v1125
      %v1188 = vunpack.c.l.b16 %v1126
      %v1189 = vunpack.c.l.b16 %v1127
      %v1190 = vunpack.c.l.b16 %v1128
      %v1191 = vunpack.c.l.b16 %v1129
      %v1192 = vpack.c.b16 %v1170, %v1169
      %v1193 = vpack.c.b16 %v1172, %v1171
      %v1194 = vpack.c.b16 %v1174, %v1173
      %v1195 = vpack.c.b16 %v1176, %v1175
      %v1196 = vpack.c.b16 %v1178, %v1177
      %v1197 = vpack.c.b16 %v1180, %v1179
      %v1198 = vpack.c.b16 %v1182, %v1181
      %v1199 = vpack.c.b16 %v1184, %v1183
      %v1200 = vpack.c.b16 %v1186, %v1185
      %v1201 = vpack.c.b16 %v1188, %v1187
      %v1202 = vpack.c.b16 %v1190, %v1189
      %v1203 = vpack.c.b16 %v1191, %v1191
      %v1204 = vrot.slane %v1192, 1
      %v1205 = vrot.slane %v1193, 1
      %v1206 = vsel %vm872, %v1204, %v1205
      %v1207 = vrot.slane %v1194, 1
      %v1208 = vsel %vm872, %v1205, %v1207
      %v1209 = vrot.slane %v1195, 1
      %v1210 = vsel %vm872, %v1207, %v1209
      %v1211 = vrot.slane %v1196, 1
      %v1212 = vsel %vm872, %v1209, %v1211
      %v1213 = vrot.slane %v1197, 1
      %v1214 = vsel %vm872, %v1211, %v1213
      %v1215 = vrot.slane %v1198, 1
      %v1216 = vsel %vm872, %v1213, %v1215
      %v1217 = vrot.slane %v1199, 1
      %v1218 = vsel %vm872, %v1215, %v1217
      %v1219 = vrot.slane %v1200, 1
      %v1220 = vsel %vm872, %v1217, %v1219
      %v1221 = vrot.slane %v1201, 1
      %v1222 = vsel %vm872, %v1219, %v1221
      %v1223 = vrot.slane %v1202, 1
      %v1224 = vsel %vm872, %v1221, %v1223
      %v1225 = vrot.slane %v1203, 1
      %v1226 = vsel %vm872, %v1223, %v1225
      %v1255 = vunpack.c.l.b16 %v1130
      %v1256 = vunpack.c.l.b16 %v1131
      %v1257 = vunpack.c.l.b16 %v1132
      %v1258 = vunpack.c.l.b16 %v1133
      %v1259 = vunpack.c.l.b16 %v1134
      %v1260 = vunpack.c.l.b16 %v1135
      %v1261 = vunpack.c.l.b16 %v1136
      %v1262 = vunpack.c.l.b16 %v1137
      %v1263 = vunpack.c.l.b16 %v1138
      %v1264 = vunpack.c.l.b16 %v1139
      %v1265 = vunpack.c.l.b16 %v1140
      %v1266 = vunpack.c.l.b16 %v1141
      %v1267 = vunpack.c.l.b16 %v1142
      %v1268 = vunpack.c.l.b16 %v1143
      %v1269 = vunpack.c.l.b16 %v1144
      %v1270 = vunpack.c.l.b16 %v1145
      %v1271 = vpack.c.b16 %v1256, %v1255
      %v1272 = vpack.c.b16 %v1258, %v1257
      %v1273 = vpack.c.b16 %v1260, %v1259
      %v1274 = vpack.c.b16 %v1262, %v1261
      %v1275 = vpack.c.b16 %v1264, %v1263
      %v1276 = vpack.c.b16 %v1266, %v1265
      %v1277 = vpack.c.b16 %v1268, %v1267
      %v1278 = vpack.c.b16 %v1270, %v1269
      %1287 = vmatprep.subr.bf16.mxu0 0
      %1288 = vmatpush1.bf16.msra.mxu0 %v1271
      %1289 = vmatprep.subr.bf16.mxu0 0
      %1290 = vmatpush1.bf16.msra.mxu0 %v1272
      %1291 = vmatprep.subr.bf16.mxu0 0
      %1292 = vmatpush1.bf16.msra.mxu0 %v1273
      %1293 = vmatprep.subr.bf16.mxu0 0
      %1294 = vmatpush1.bf16.msra.mxu0 %v1274
      %1295 = vmatprep.subr.bf16.mxu0 0
      %1296 = vmatpush1.bf16.msra.mxu0 %v1275
      %1297 = vmatprep.subr.bf16.mxu0 0
      %1298 = vmatpush1.bf16.msra.mxu0 %v1276
      %1299 = vmatprep.subr.bf16.mxu0 0
      %1300 = vmatpush1.bf16.msra.mxu0 %v1277
      %1301 = vmatprep.subr.bf16.mxu0 0
      %1302 = vmatpush1.bf16.msra.mxu0 %v1278
      %1303 = vmatprep.subr.bf16.mxu0 0
      %1304 = vmatpush1.bf16.msra.mxu0 0
      %1305 = vmatprep.subr.bf16.mxu0 0
      %1306 = vmatpush1.bf16.msra.mxu0 0
      %1307 = vmatprep.subr.bf16.mxu0 0
      %1308 = vmatpush1.bf16.msra.mxu0 0
      %1309 = vmatprep.subr.bf16.mxu0 0
      %1310 = vmatpush1.bf16.msra.mxu0 0
      %1311 = vmatprep.subr.bf16.mxu0 0
      %1312 = vmatpush1.bf16.msra.mxu0 0
      %1313 = vmatprep.subr.bf16.mxu0 0
      %1314 = vmatpush1.bf16.msra.mxu0 0
      %1315 = vmatprep.subr.bf16.mxu0 0
      %1316 = vmatpush1.bf16.msra.mxu0 0
      %1317 = vmatprep.subr.bf16.mxu0 0
      %1318 = vmatpush1.bf16.msra.mxu0 0
      %1319 = vmatprep.mubr.bf16.mxu0 0
      %1320 = vmatmul.mubr.bf16.gmra.mrb[0].mxu0 %v1206
      %v1321 = vpop.f32.mrb[0].mxu0
      %v1322 = vadd.f32 0.0, %v1321
      %v1323 = vpop.f32.mrb[0].mxu0
      %v1324 = vpop.f32.mrb[0].mxu0
      %v1325 = vadd.f32 0.0, %v1324
      %v1326 = vpop.f32.mrb[0].mxu0
      %1327 = vmatprep.mubr.bf16.mxu0 0
      %1328 = vmatmul.mubr.bf16.gmra.mrb[0].mxu0 %v1208
      %v1329 = vpop.f32.mrb[0].mxu0
      %v1330 = vadd.f32 0.0, %v1329
      %v1331 = vpop.f32.mrb[0].mxu0
      %v1332 = vpop.f32.mrb[0].mxu0
      %v1333 = vadd.f32 0.0, %v1332
      %v1334 = vpop.f32.mrb[0].mxu0
      %1335 = vmatprep.mubr.bf16.mxu0 0
      %1336 = vmatmul.mubr.bf16.gmra.mrb[0].mxu0 %v1210
      %v1337 = vpop.f32.mrb[0].mxu0
      %v1338 = vadd.f32 0.0, %v1337
      %v1339 = vpop.f32.mrb[0].mxu0
      %v1340 = vpop.f32.mrb[0].mxu0
      %v1341 = vadd.f32 0.0, %v1340
      %v1342 = vpop.f32.mrb[0].mxu0
      %1343 = vmatprep.mubr.bf16.mxu0 0
      %1344 = vmatmul.mubr.bf16.gmra.mrb[0].mxu0 %v1212
      %v1345 = vpop.f32.mrb[0].mxu0
      %v1346 = vadd.f32 0.0, %v1345
      %v1347 = vpop.f32.mrb[0].mxu0
      %v1348 = vpop.f32.mrb[0].mxu0
      %v1349 = vadd.f32 0.0, %v1348
      %v1350 = vpop.f32.mrb[0].mxu0
      %1351 = vmatprep.mubr.bf16.mxu0 0
      %1352 = vmatmul.mubr.bf16.gmra.mrb[0].mxu0 %v1214
      %v1353 = vpop.f32.mrb[0].mxu0
      %v1354 = vadd.f32 0.0, %v1353
      %v1355 = vpop.f32.mrb[0].mxu0
      %v1356 = vpop.f32.mrb[0].mxu0
      %v1357 = vadd.f32 0.0, %v1356
      %v1358 = vpop.f32.mrb[0].mxu0
      %1359 = vmatprep.mubr.bf16.mxu0 0
      %1360 = vmatmul.mubr.bf16.gmra.mrb[0].mxu0 %v1216
      %v1361 = vpop.f32.mrb[0].mxu0
      %v1362 = vadd.f32 0.0, %v1361
      %v1363 = vpop.f32.mrb[0].mxu0
      %v1364 = vpop.f32.mrb[0].mxu0
      %v1365 = vadd.f32 0.0, %v1364
      %v1366 = vpop.f32.mrb[0].mxu0
      %1367 = vmatprep.mubr.bf16.mxu0 0
      %1368 = vmatmul.mubr.bf16.gmra.mrb[0].mxu0 %v1218
      %v1369 = vpop.f32.mrb[0].mxu0
      %v1370 = vadd.f32 0.0, %v1369
      %v1371 = vpop.f32.mrb[0].mxu0
      %v1372 = vpop.f32.mrb[0].mxu0
      %v1373 = vadd.f32 0.0, %v1372
      %v1374 = vpop.f32.mrb[0].mxu0
      %1375 = vmatprep.mubr.bf16.mxu0 0
      %1376 = vmatmul.mubr.bf16.gmra.mrb[0].mxu0 %v1220
      %v1377 = vpop.f32.mrb[0].mxu0
      %v1378 = vadd.f32 0.0, %v1377
      %v1379 = vpop.f32.mrb[0].mxu0
      %v1380 = vpop.f32.mrb[0].mxu0
      %v1381 = vadd.f32 0.0, %v1380
      %v1382 = vpop.f32.mrb[0].mxu0
      %1383 = vmatprep.mubr.bf16.mxu0 0
      %1384 = vmatmul.mubr.bf16.gmra.mrb[0].mxu0 %v1222
      %v1385 = vpop.f32.mrb[0].mxu0
      %v1386 = vadd.f32 0.0, %v1385
      %v1387 = vpop.f32.mrb[0].mxu0
      %v1388 = vpop.f32.mrb[0].mxu0
      %v1389 = vadd.f32 0.0, %v1388
      %v1390 = vpop.f32.mrb[0].mxu0
      %1391 = vmatprep.mubr.bf16.mxu0 0
      %1392 = vmatmul.mubr.bf16.gmra.mrb[0].mxu0 %v1224
      %v1393 = vpop.f32.mrb[0].mxu0
      %v1394 = vadd.f32 0.0, %v1393
      %v1395 = vpop.f32.mrb[0].mxu0
      %v1396 = vpop.f32.mrb[0].mxu0
      %v1397 = vadd.f32 0.0, %v1396
      %v1398 = vpop.f32.mrb[0].mxu0
      %1399 = vmatprep.mubr.bf16.mxu0 0
      %1400 = vmatmul.mubr.bf16.gmra.mrb[0].mxu0 %v1226
      %v1401 = vpop.f32.mrb[0].mxu0
      %v1402 = vadd.f32 0.0, %v1401
      %v1403 = vpop.f32.mrb[0].mxu0
      %v1404 = vpop.f32.mrb[0].mxu0
      %v1405 = vadd.f32 0.0, %v1404
      %v1406 = vpop.f32.mrb[0].mxu0
      %1407 = vmatprep.mubr.bf16.mxu0 0
      %1408 = vmatmul.mubr.bf16.gmra.mrb[0].mxu0 %v1225
      %v1409 = vpop.f32.mrb[0].mxu0
      %v1410 = vadd.f32 0.0, %v1409
      %v1411 = vpop.f32.mrb[0].mxu0
      %v1412 = vpop.f32.mrb[0].mxu0
      %v1413 = vpop.f32.mrb[0].mxu0
      %1414 = vdwg.mxu0
      %v1415 = vadd.f32 %v1084, %v1322
      %v1416 = vadd.f32 %v1085, %v1325
      %v1417 = vadd.f32 %v1086, %v1330
      %v1418 = vadd.f32 %v1087, %v1333
      %v1419 = vadd.f32 %v1088, %v1338
      %v1420 = vadd.f32 %v1089, %v1341
      %v1421 = vadd.f32 %v1090, %v1346
      %v1422 = vadd.f32 %v1091, %v1349
      %v1423 = vadd.f32 %v1092, %v1354
      %v1424 = vadd.f32 %v1093, %v1357
      %v1425 = vadd.f32 %v1094, %v1362
      %v1426 = vadd.f32 %v1095, %v1365
      %v1427 = vadd.f32 %v1096, %v1370
      %v1428 = vadd.f32 %v1097, %v1373
      %v1429 = vadd.f32 %v1098, %v1378
      %v1430 = vadd.f32 %v1099, %v1381
      %v1431 = vadd.f32 %v1100, %v1386
      %v1432 = vadd.f32 %v1101, %v1389
      %v1433 = vadd.f32 %v1102, %v1394
      %v1434 = vadd.f32 %v1103, %v1397
      %v1435 = vadd.f32 %v1104, %v1402
      %v1436 = vadd.f32 %v1105, %v1405
      %v1437 = vadd.f32 %v1106, %v1410
      %v1438 = vld [vmem:[%s251 + $0x60] sm:$0xf]
      %v1439 = vld [vmem:[%s1 + $0x100] sm:$0xf]
      %v1440 = vld [vmem:[%s1 + $0x104] sm:$0xf]
      %v1441 = vld [vmem:[%s1 + $0x108] sm:$0xf]
      %v1442 = vld [vmem:[%s1 + $0x10c] sm:$0xf]
      %v1443 = vld [vmem:[%s1 + $0x110] sm:$0xf]
      %v1444 = vld [vmem:[%s1 + $0x114] sm:$0xf]
      %v1445 = vld [vmem:[%s1 + $0x118] sm:$0xf]
      %v1446 = vld [vmem:[%s1 + $0x11c] sm:$0xf]
      %v1447 = vld [vmem:[%s1 + $0x120] sm:$0xf]
      %v1448 = vld [vmem:[%s1 + $0x124] sm:$0xf]
      %v1449 = vld [vmem:[%s1 + $0x128] sm:$0xf]
      %v1450 = vld [vmem:[%s1 + $0x12c] sm:$0xf]
      %v1451 = vld [vmem:[%s1 + $0x130] sm:$0xf]
      %v1452 = vld [vmem:[%s1 + $0x134] sm:$0xf]
      %v1453 = vld [vmem:[%s1 + $0x138] sm:$0xf]
      %v1454 = vld [vmem:[%s1 + $0x13c] sm:$0xf]
      %v1456 = vunpack.c.l.b16 %v1438
      %v1457 = vpack.c.b16 %v1456, %v1456
      %vm1458 = vsmask.f32 6400
      %v1460 = vshrl.u32 %v1192, 16
      %v1462 = vrot.slane %v1460, 1
      %v1463 = vshll.u32 %v1192, 16
      %v1465 = vrot.slane %v1463, 2
      %v1466 = vor.u32 %v1462, %v1465
      %v1468 = vshrl.u32 %v1193, 16
      %v1470 = vrot.slane %v1468, 1
      %v1471 = vshll.u32 %v1193, 16
      %v1473 = vrot.slane %v1471, 2
      %v1474 = vor.u32 %v1470, %v1473
      %v1475 = vsel %vm1458, %v1466, %v1474
      %v1477 = vshrl.u32 %v1194, 16
      %v1479 = vrot.slane %v1477, 1
      %v1480 = vshll.u32 %v1194, 16
      %v1482 = vrot.slane %v1480, 2
      %v1483 = vor.u32 %v1479, %v1482
      %v1484 = vsel %vm1458, %v1474, %v1483
      %v1486 = vshrl.u32 %v1195, 16
      %v1488 = vrot.slane %v1486, 1
      %v1489 = vshll.u32 %v1195, 16
      %v1491 = vrot.slane %v1489, 2
      %v1492 = vor.u32 %v1488, %v1491
      %v1493 = vsel %vm1458, %v1483, %v1492
      %v1495 = vshrl.u32 %v1196, 16
      %v1497 = vrot.slane %v1495, 1
      %v1498 = vshll.u32 %v1196, 16
      %v1500 = vrot.slane %v1498, 2
      %v1501 = vor.u32 %v1497, %v1500
      %v1502 = vsel %vm1458, %v1492, %v1501
      %v1504 = vshrl.u32 %v1197, 16
      %v1506 = vrot.slane %v1504, 1
      %v1507 = vshll.u32 %v1197, 16
      %v1509 = vrot.slane %v1507, 2
      %v1510 = vor.u32 %v1506, %v1509
      %v1511 = vsel %vm1458, %v1501, %v1510
      %v1513 = vshrl.u32 %v1198, 16
      %v1515 = vrot.slane %v1513, 1
      %v1516 = vshll.u32 %v1198, 16
      %v1518 = vrot.slane %v1516, 2
      %v1519 = vor.u32 %v1515, %v1518
      %v1520 = vsel %vm1458, %v1510, %v1519
      %v1522 = vshrl.u32 %v1199, 16
      %v1524 = vrot.slane %v1522, 1
      %v1525 = vshll.u32 %v1199, 16
      %v1527 = vrot.slane %v1525, 2
      %v1528 = vor.u32 %v1524, %v1527
      %v1529 = vsel %vm1458, %v1519, %v1528
      %v1531 = vshrl.u32 %v1200, 16
      %v1533 = vrot.slane %v1531, 1
      %v1534 = vshll.u32 %v1200, 16
      %v1536 = vrot.slane %v1534, 2
      %v1537 = vor.u32 %v1533, %v1536
      %v1538 = vsel %vm1458, %v1528, %v1537
      %v1540 = vshrl.u32 %v1201, 16
      %v1542 = vrot.slane %v1540, 1
      %v1543 = vshll.u32 %v1201, 16
      %v1545 = vrot.slane %v1543, 2
      %v1546 = vor.u32 %v1542, %v1545
      %v1547 = vsel %vm1458, %v1537, %v1546
      %v1549 = vshrl.u32 %v1202, 16
      %v1551 = vrot.slane %v1549, 1
      %v1552 = vshll.u32 %v1202, 16
      %v1554 = vrot.slane %v1552, 2
      %v1555 = vor.u32 %v1551, %v1554
      %v1556 = vsel %vm1458, %v1546, %v1555
      %v1558 = vshrl.u32 %v1457, 16
      %v1560 = vrot.slane %v1558, 1
      %v1561 = vshll.u32 %v1457, 16
      %v1563 = vrot.slane %v1561, 2
      %v1564 = vor.u32 %v1560, %v1563
      %v1565 = vsel %vm1458, %v1555, %v1564
      %v1594 = vunpack.c.l.b16 %v1439
      %v1595 = vunpack.c.l.b16 %v1440
      %v1596 = vunpack.c.l.b16 %v1441
      %v1597 = vunpack.c.l.b16 %v1442
      %v1598 = vunpack.c.l.b16 %v1443
      %v1599 = vunpack.c.l.b16 %v1444
      %v1600 = vunpack.c.l.b16 %v1445
      %v1601 = vunpack.c.l.b16 %v1446
      %v1602 = vunpack.c.l.b16 %v1447
      %v1603 = vunpack.c.l.b16 %v1448
      %v1604 = vunpack.c.l.b16 %v1449
      %v1605 = vunpack.c.l.b16 %v1450
      %v1606 = vunpack.c.l.b16 %v1451
      %v1607 = vunpack.c.l.b16 %v1452
      %v1608 = vunpack.c.l.b16 %v1453
      %v1609 = vunpack.c.l.b16 %v1454
      %v1610 = vpack.c.b16 %v1595, %v1594
      %v1611 = vpack.c.b16 %v1597, %v1596
      %v1612 = vpack.c.b16 %v1599, %v1598
      %v1613 = vpack.c.b16 %v1601, %v1600
      %v1614 = vpack.c.b16 %v1603, %v1602
      %v1615 = vpack.c.b16 %v1605, %v1604
      %v1616 = vpack.c.b16 %v1607, %v1606
      %v1617 = vpack.c.b16 %v1609, %v1608
      %1626 = vmatprep.subr.bf16.mxu0 0
      %1627 = vmatpush1.bf16.msra.mxu0 %v1610
      %1628 = vmatprep.subr.bf16.mxu0 0
      %1629 = vmatpush1.bf16.msra.mxu0 %v1611
      %1630 = vmatprep.subr.bf16.mxu0 0
      %1631 = vmatpush1.bf16.msra.mxu0 %v1612
      %1632 = vmatprep.subr.bf16.mxu0 0
      %1633 = vmatpush1.bf16.msra.mxu0 %v1613
      %1634 = vmatprep.subr.bf16.mxu0 0
      %1635 = vmatpush1.bf16.msra.mxu0 %v1614
      %1636 = vmatprep.subr.bf16.mxu0 0
      %1637 = vmatpush1.bf16.msra.mxu0 %v1615
      %1638 = vmatprep.subr.bf16.mxu0 0
      %1639 = vmatpush1.bf16.msra.mxu0 %v1616
      %1640 = vmatprep.subr.bf16.mxu0 0
      %1641 = vmatpush1.bf16.msra.mxu0 %v1617
      %1642 = vmatprep.subr.bf16.mxu0 0
      %1643 = vmatpush1.bf16.msra.mxu0 0
      %1644 = vmatprep.subr.bf16.mxu0 0
      %1645 = vmatpush1.bf16.msra.mxu0 0
      %1646 = vmatprep.subr.bf16.mxu0 0
      %1647 = vmatpush1.bf16.msra.mxu0 0
      %1648 = vmatprep.subr.bf16.mxu0 0
      %1649 = vmatpush1.bf16.msra.mxu0 0
      %1650 = vmatprep.subr.bf16.mxu0 0
      %1651 = vmatpush1.bf16.msra.mxu0 0
      %1652 = vmatprep.subr.bf16.mxu0 0
      %1653 = vmatpush1.bf16.msra.mxu0 0
      %1654 = vmatprep.subr.bf16.mxu0 0
      %1655 = vmatpush1.bf16.msra.mxu0 0
      %1656 = vmatprep.subr.bf16.mxu0 0
      %1657 = vmatpush1.bf16.msra.mxu0 0
      %1658 = vmatprep.mubr.bf16.mxu0 0
      %1659 = vmatmul.mubr.bf16.gmra.mrb[0].mxu0 %v1475
      %v1660 = vpop.f32.mrb[0].mxu0
      %v1661 = vadd.f32 0.0, %v1660
      %v1662 = vpop.f32.mrb[0].mxu0
      %v1663 = vpop.f32.mrb[0].mxu0
      %v1664 = vadd.f32 0.0, %v1663
      %v1665 = vpop.f32.mrb[0].mxu0
      %1666 = vmatprep.mubr.bf16.mxu0 0
      %1667 = vmatmul.mubr.bf16.gmra.mrb[0].mxu0 %v1484
      %v1668 = vpop.f32.mrb[0].mxu0
      %v1669 = vadd.f32 0.0, %v1668
      %v1670 = vpop.f32.mrb[0].mxu0
      %v1671 = vpop.f32.mrb[0].mxu0
      %v1672 = vadd.f32 0.0, %v1671
      %v1673 = vpop.f32.mrb[0].mxu0
      %1674 = vmatprep.mubr.bf16.mxu0 0
      %1675 = vmatmul.mubr.bf16.gmra.mrb[0].mxu0 %v1493
      %v1676 = vpop.f32.mrb[0].mxu0
      %v1677 = vadd.f32 0.0, %v1676
      %v1678 = vpop.f32.mrb[0].mxu0
      %v1679 = vpop.f32.mrb[0].mxu0
      %v1680 = vadd.f32 0.0, %v1679
      %v1681 = vpop.f32.mrb[0].mxu0
      %1682 = vmatprep.mubr.bf16.mxu0 0
      %1683 = vmatmul.mubr.bf16.gmra.mrb[0].mxu0 %v1502
      %v1684 = vpop.f32.mrb[0].mxu0
      %v1685 = vadd.f32 0.0, %v1684
      %v1686 = vpop.f32.mrb[0].mxu0
      %v1687 = vpop.f32.mrb[0].mxu0
      %v1688 = vadd.f32 0.0, %v1687
      %v1689 = vpop.f32.mrb[0].mxu0
      %1690 = vmatprep.mubr.bf16.mxu0 0
      %1691 = vmatmul.mubr.bf16.gmra.mrb[0].mxu0 %v1511
      %v1692 = vpop.f32.mrb[0].mxu0
      %v1693 = vadd.f32 0.0, %v1692
      %v1694 = vpop.f32.mrb[0].mxu0
      %v1695 = vpop.f32.mrb[0].mxu0
      %v1696 = vadd.f32 0.0, %v1695
      %v1697 = vpop.f32.mrb[0].mxu0
      %1698 = vmatprep.mubr.bf16.mxu0 0
      %1699 = vmatmul.mubr.bf16.gmra.mrb[0].mxu0 %v1520
      %v1700 = vpop.f32.mrb[0].mxu0
      %v1701 = vadd.f32 0.0, %v1700
      %v1702 = vpop.f32.mrb[0].mxu0
      %v1703 = vpop.f32.mrb[0].mxu0
      %v1704 = vadd.f32 0.0, %v1703
      %v1705 = vpop.f32.mrb[0].mxu0
      %1706 = vmatprep.mubr.bf16.mxu0 0
      %1707 = vmatmul.mubr.bf16.gmra.mrb[0].mxu0 %v1529
      %v1708 = vpop.f32.mrb[0].mxu0
      %v1709 = vadd.f32 0.0, %v1708
      %v1710 = vpop.f32.mrb[0].mxu0
      %v1711 = vpop.f32.mrb[0].mxu0
      %v1712 = vadd.f32 0.0, %v1711
      %v1713 = vpop.f32.mrb[0].mxu0
      %1714 = vmatprep.mubr.bf16.mxu0 0
      %1715 = vmatmul.mubr.bf16.gmra.mrb[0].mxu0 %v1538
      %v1716 = vpop.f32.mrb[0].mxu0
      %v1717 = vadd.f32 0.0, %v1716
      %v1718 = vpop.f32.mrb[0].mxu0
      %v1719 = vpop.f32.mrb[0].mxu0
      %v1720 = vadd.f32 0.0, %v1719
      %v1721 = vpop.f32.mrb[0].mxu0
      %1722 = vmatprep.mubr.bf16.mxu0 0
      %1723 = vmatmul.mubr.bf16.gmra.mrb[0].mxu0 %v1547
      %v1724 = vpop.f32.mrb[0].mxu0
      %v1725 = vadd.f32 0.0, %v1724
      %v1726 = vpop.f32.mrb[0].mxu0
      %v1727 = vpop.f32.mrb[0].mxu0
      %v1728 = vadd.f32 0.0, %v1727
      %v1729 = vpop.f32.mrb[0].mxu0
      %1730 = vmatprep.mubr.bf16.mxu0 0
      %1731 = vmatmul.mubr.bf16.gmra.mrb[0].mxu0 %v1556
      %v1732 = vpop.f32.mrb[0].mxu0
      %v1733 = vadd.f32 0.0, %v1732
      %v1734 = vpop.f32.mrb[0].mxu0
      %v1735 = vpop.f32.mrb[0].mxu0
      %v1736 = vadd.f32 0.0, %v1735
      %v1737 = vpop.f32.mrb[0].mxu0
      %1738 = vmatprep.mubr.bf16.mxu0 0
      %1739 = vmatmul.mubr.bf16.gmra.mrb[0].mxu0 %v1565
      %v1740 = vpop.f32.mrb[0].mxu0
      %v1741 = vadd.f32 0.0, %v1740
      %v1742 = vpop.f32.mrb[0].mxu0
      %v1743 = vpop.f32.mrb[0].mxu0
      %v1744 = vadd.f32 0.0, %v1743
      %v1745 = vpop.f32.mrb[0].mxu0
      %1746 = vmatprep.mubr.bf16.mxu0 0
      %1747 = vmatmul.mubr.bf16.gmra.mrb[0].mxu0 %v1564
      %v1748 = vpop.f32.mrb[0].mxu0
      %v1749 = vadd.f32 0.0, %v1748
      %v1750 = vpop.f32.mrb[0].mxu0
      %v1751 = vpop.f32.mrb[0].mxu0
      %v1752 = vpop.f32.mrb[0].mxu0
      %1753 = vdwg.mxu0
      %v1754 = vadd.f32 %v1415, %v1661
      %v1755 = vadd.f32 %v1416, %v1664
      %v1756 = vadd.f32 %v1417, %v1669
      %v1757 = vadd.f32 %v1418, %v1672
      %v1758 = vadd.f32 %v1419, %v1677
      %v1759 = vadd.f32 %v1420, %v1680
      %v1760 = vadd.f32 %v1421, %v1685
      %v1761 = vadd.f32 %v1422, %v1688
      %v1762 = vadd.f32 %v1423, %v1693
      %v1763 = vadd.f32 %v1424, %v1696
      %v1764 = vadd.f32 %v1425, %v1701
      %v1765 = vadd.f32 %v1426, %v1704
      %v1766 = vadd.f32 %v1427, %v1709
      %v1767 = vadd.f32 %v1428, %v1712
      %v1768 = vadd.f32 %v1429, %v1717
      %v1769 = vadd.f32 %v1430, %v1720
      %v1770 = vadd.f32 %v1431, %v1725
      %v1771 = vadd.f32 %v1432, %v1728
      %v1772 = vadd.f32 %v1433, %v1733
      %v1773 = vadd.f32 %v1434, %v1736
      %v1774 = vadd.f32 %v1435, %v1741
      %v1775 = vadd.f32 %v1436, %v1744
      %v1776 = vadd.f32 %v1437, %v1749
      %v1777 = vld [vmem:[%s251 + $0x8] sm:$0xc]
      %v1778 = vld [vmem:[%s1 + $0x140] sm:$0xf]
      %v1779 = vld [vmem:[%s1 + $0x144] sm:$0xf]
      %v1780 = vld [vmem:[%s1 + $0x148] sm:$0xf]
      %v1781 = vld [vmem:[%s1 + $0x14c] sm:$0xf]
      %v1782 = vld [vmem:[%s1 + $0x150] sm:$0xf]
      %v1783 = vld [vmem:[%s1 + $0x154] sm:$0xf]
      %v1784 = vld [vmem:[%s1 + $0x158] sm:$0xf]
      %v1785 = vld [vmem:[%s1 + $0x15c] sm:$0xf]
      %v1786 = vld [vmem:[%s1 + $0x160] sm:$0xf]
      %v1787 = vld [vmem:[%s1 + $0x164] sm:$0xf]
      %v1788 = vld [vmem:[%s1 + $0x168] sm:$0xf]
      %v1789 = vld [vmem:[%s1 + $0x16c] sm:$0xf]
      %v1790 = vld [vmem:[%s1 + $0x170] sm:$0xf]
      %v1791 = vld [vmem:[%s1 + $0x174] sm:$0xf]
      %v1792 = vld [vmem:[%s1 + $0x178] sm:$0xf]
      %v1793 = vld [vmem:[%s1 + $0x17c] sm:$0xf]
      %v1795 = vunpack.c.l.b16 %v1777
      %v1796 = vpack.c.b16 %v1170, %v1795
      %vm1797 = vcmask 1045504
      %v1798 = vrot.slane %v1796, 2
      %v1799 = vrot.slane %v1193, 2
      %v1800 = vsel %vm1797, %v1798, %v1799
      %v1801 = vrot.slane %v1194, 2
      %v1802 = vsel %vm1797, %v1799, %v1801
      %v1803 = vrot.slane %v1195, 2
      %v1804 = vsel %vm1797, %v1801, %v1803
      %v1805 = vrot.slane %v1196, 2
      %v1806 = vsel %vm1797, %v1803, %v1805
      %v1807 = vrot.slane %v1197, 2
      %v1808 = vsel %vm1797, %v1805, %v1807
      %v1809 = vrot.slane %v1198, 2
      %v1810 = vsel %vm1797, %v1807, %v1809
      %v1811 = vrot.slane %v1199, 2
      %v1812 = vsel %vm1797, %v1809, %v1811
      %v1813 = vrot.slane %v1200, 2
      %v1814 = vsel %vm1797, %v1811, %v1813
      %v1815 = vrot.slane %v1201, 2
      %v1816 = vsel %vm1797, %v1813, %v1815
      %v1817 = vrot.slane %v1202, 2
      %v1818 = vsel %vm1797, %v1815, %v1817
      %v1819 = vrot.slane %v1457, 2
      %v1820 = vsel %vm1797, %v1817, %v1819
      %v1849 = vunpack.c.l.b16 %v1778
      %v1850 = vunpack.c.l.b16 %v1779
      %v1851 = vunpack.c.l.b16 %v1780
      %v1852 = vunpack.c.l.b16 %v1781
      %v1853 = vunpack.c.l.b16 %v1782
      %v1854 = vunpack.c.l.b16 %v1783
      %v1855 = vunpack.c.l.b16 %v1784
      %v1856 = vunpack.c.l.b16 %v1785
      %v1857 = vunpack.c.l.b16 %v1786
      %v1858 = vunpack.c.l.b16 %v1787
      %v1859 = vunpack.c.l.b16 %v1788
      %v1860 = vunpack.c.l.b16 %v1789
      %v1861 = vunpack.c.l.b16 %v1790
      %v1862 = vunpack.c.l.b16 %v1791
      %v1863 = vunpack.c.l.b16 %v1792
      %v1864 = vunpack.c.l.b16 %v1793
      %v1865 = vpack.c.b16 %v1850, %v1849
      %v1866 = vpack.c.b16 %v1852, %v1851
      %v1867 = vpack.c.b16 %v1854, %v1853
      %v1868 = vpack.c.b16 %v1856, %v1855
      %v1869 = vpack.c.b16 %v1858, %v1857
      %v1870 = vpack.c.b16 %v1860, %v1859
      %v1871 = vpack.c.b16 %v1862, %v1861
      %v1872 = vpack.c.b16 %v1864, %v1863
      %1881 = vmatprep.subr.bf16.mxu0 0
      %1882 = vmatpush1.bf16.msra.mxu0 %v1865
      %1883 = vmatprep.subr.bf16.mxu0 0
      %1884 = vmatpush1.bf16.msra.mxu0 %v1866
      %1885 = vmatprep.subr.bf16.mxu0 0
      %1886 = vmatpush1.bf16.msra.mxu0 %v1867
      %1887 = vmatprep.subr.bf16.mxu0 0
      %1888 = vmatpush1.bf16.msra.mxu0 %v1868
      %1889 = vmatprep.subr.bf16.mxu0 0
      %1890 = vmatpush1.bf16.msra.mxu0 %v1869
      %1891 = vmatprep.subr.bf16.mxu0 0
      %1892 = vmatpush1.bf16.msra.mxu0 %v1870
      %1893 = vmatprep.subr.bf16.mxu0 0
      %1894 = vmatpush1.bf16.msra.mxu0 %v1871
      %1895 = vmatprep.subr.bf16.mxu0 0
      %1896 = vmatpush1.bf16.msra.mxu0 %v1872
      %1897 = vmatprep.subr.bf16.mxu0 0
      %1898 = vmatpush1.bf16.msra.mxu0 0
      %1899 = vmatprep.subr.bf16.mxu0 0
      %1900 = vmatpush1.bf16.msra.mxu0 0
      %1901 = vmatprep.subr.bf16.mxu0 0
      %1902 = vmatpush1.bf16.msra.mxu0 0
      %1903 = vmatprep.subr.bf16.mxu0 0
      %1904 = vmatpush1.bf16.msra.mxu0 0
      %1905 = vmatprep.subr.bf16.mxu0 0
      %1906 = vmatpush1.bf16.msra.mxu0 0
      %1907 = vmatprep.subr.bf16.mxu0 0
      %1908 = vmatpush1.bf16.msra.mxu0 0
      %1909 = vmatprep.subr.bf16.mxu0 0
      %1910 = vmatpush1.bf16.msra.mxu0 0
      %1911 = vmatprep.subr.bf16.mxu0 0
      %1912 = vmatpush1.bf16.msra.mxu0 0
      %1913 = vmatprep.mubr.bf16.mxu0 0
      %1914 = vmatmul.mubr.bf16.gmra.mrb[0].mxu0 %v1800
      %v1915 = vpop.f32.mrb[0].mxu0
      %v1916 = vadd.f32 0.0, %v1915
      %v1917 = vpop.f32.mrb[0].mxu0
      %v1918 = vpop.f32.mrb[0].mxu0
      %v1919 = vadd.f32 0.0, %v1918
      %v1920 = vpop.f32.mrb[0].mxu0
      %1921 = vmatprep.mubr.bf16.mxu0 0
      %1922 = vmatmul.mubr.bf16.gmra.mrb[0].mxu0 %v1802
      %v1923 = vpop.f32.mrb[0].mxu0
      %v1924 = vadd.f32 0.0, %v1923
      %v1925 = vpop.f32.mrb[0].mxu0
      %v1926 = vpop.f32.mrb[0].mxu0
      %v1927 = vadd.f32 0.0, %v1926
      %v1928 = vpop.f32.mrb[0].mxu0
      %1929 = vmatprep.mubr.bf16.mxu0 0
      %1930 = vmatmul.mubr.bf16.gmra.mrb[0].mxu0 %v1804
      %v1931 = vpop.f32.mrb[0].mxu0
      %v1932 = vadd.f32 0.0, %v1931
      %v1933 = vpop.f32.mrb[0].mxu0
      %v1934 = vpop.f32.mrb[0].mxu0
      %v1935 = vadd.f32 0.0, %v1934
      %v1936 = vpop.f32.mrb[0].mxu0
      %1937 = vmatprep.mubr.bf16.mxu0 0
      %1938 = vmatmul.mubr.bf16.gmra.mrb[0].mxu0 %v1806
      %v1939 = vpop.f32.mrb[0].mxu0
      %v1940 = vadd.f32 0.0, %v1939
      %v1941 = vpop.f32.mrb[0].mxu0
      %v1942 = vpop.f32.mrb[0].mxu0
      %v1943 = vadd.f32 0.0, %v1942
      %v1944 = vpop.f32.mrb[0].mxu0
      %1945 = vmatprep.mubr.bf16.mxu0 0
      %1946 = vmatmul.mubr.bf16.gmra.mrb[0].mxu0 %v1808
      %v1947 = vpop.f32.mrb[0].mxu0
      %v1948 = vadd.f32 0.0, %v1947
      %v1949 = vpop.f32.mrb[0].mxu0
      %v1950 = vpop.f32.mrb[0].mxu0
      %v1951 = vadd.f32 0.0, %v1950
      %v1952 = vpop.f32.mrb[0].mxu0
      %1953 = vmatprep.mubr.bf16.mxu0 0
      %1954 = vmatmul.mubr.bf16.gmra.mrb[0].mxu0 %v1810
      %v1955 = vpop.f32.mrb[0].mxu0
      %v1956 = vadd.f32 0.0, %v1955
      %v1957 = vpop.f32.mrb[0].mxu0
      %v1958 = vpop.f32.mrb[0].mxu0
      %v1959 = vadd.f32 0.0, %v1958
      %v1960 = vpop.f32.mrb[0].mxu0
      %1961 = vmatprep.mubr.bf16.mxu0 0
      %1962 = vmatmul.mubr.bf16.gmra.mrb[0].mxu0 %v1812
      %v1963 = vpop.f32.mrb[0].mxu0
      %v1964 = vadd.f32 0.0, %v1963
      %v1965 = vpop.f32.mrb[0].mxu0
      %v1966 = vpop.f32.mrb[0].mxu0
      %v1967 = vadd.f32 0.0, %v1966
      %v1968 = vpop.f32.mrb[0].mxu0
      %1969 = vmatprep.mubr.bf16.mxu0 0
      %1970 = vmatmul.mubr.bf16.gmra.mrb[0].mxu0 %v1814
      %v1971 = vpop.f32.mrb[0].mxu0
      %v1972 = vadd.f32 0.0, %v1971
      %v1973 = vpop.f32.mrb[0].mxu0
      %v1974 = vpop.f32.mrb[0].mxu0
      %v1975 = vadd.f32 0.0, %v1974
      %v1976 = vpop.f32.mrb[0].mxu0
      %1977 = vmatprep.mubr.bf16.mxu0 0
      %1978 = vmatmul.mubr.bf16.gmra.mrb[0].mxu0 %v1816
      %v1979 = vpop.f32.mrb[0].mxu0
      %v1980 = vadd.f32 0.0, %v1979
      %v1981 = vpop.f32.mrb[0].mxu0
      %v1982 = vpop.f32.mrb[0].mxu0
      %v1983 = vadd.f32 0.0, %v1982
      %v1984 = vpop.f32.mrb[0].mxu0
      %1985 = vmatprep.mubr.bf16.mxu0 0
      %1986 = vmatmul.mubr.bf16.gmra.mrb[0].mxu0 %v1818
      %v1987 = vpop.f32.mrb[0].mxu0
      %v1988 = vadd.f32 0.0, %v1987
      %v1989 = vpop.f32.mrb[0].mxu0
      %v1990 = vpop.f32.mrb[0].mxu0
      %v1991 = vadd.f32 0.0, %v1990
      %v1992 = vpop.f32.mrb[0].mxu0
      %1993 = vmatprep.mubr.bf16.mxu0 0
      %1994 = vmatmul.mubr.bf16.gmra.mrb[0].mxu0 %v1820
      %v1995 = vpop.f32.mrb[0].mxu0
      %v1996 = vadd.f32 0.0, %v1995
      %v1997 = vpop.f32.mrb[0].mxu0
      %v1998 = vpop.f32.mrb[0].mxu0
      %v1999 = vadd.f32 0.0, %v1998
      %v2000 = vpop.f32.mrb[0].mxu0
      %2001 = vmatprep.mubr.bf16.mxu0 0
      %2002 = vmatmul.mubr.bf16.gmra.mrb[0].mxu0 %v1819
      %v2003 = vpop.f32.mrb[0].mxu0
      %v2004 = vadd.f32 0.0, %v2003
      %v2005 = vpop.f32.mrb[0].mxu0
      %v2006 = vpop.f32.mrb[0].mxu0
      %v2007 = vpop.f32.mrb[0].mxu0
      %2008 = vdwg.mxu0
      %v2009 = vadd.f32 %v1754, %v1916
      %v2010 = vadd.f32 %v1755, %v1919
      %v2011 = vadd.f32 %v1756, %v1924
      %v2012 = vadd.f32 %v1757, %v1927
      %v2013 = vadd.f32 %v1758, %v1932
      %v2014 = vadd.f32 %v1759, %v1935
      %v2015 = vadd.f32 %v1760, %v1940
      %v2016 = vadd.f32 %v1761, %v1943
      %v2017 = vadd.f32 %v1762, %v1948
      %v2018 = vadd.f32 %v1763, %v1951
      %v2019 = vadd.f32 %v1764, %v1956
      %v2020 = vadd.f32 %v1765, %v1959
      %v2021 = vadd.f32 %v1766, %v1964
      %v2022 = vadd.f32 %v1767, %v1967
      %v2023 = vadd.f32 %v1768, %v1972
      %v2024 = vadd.f32 %v1769, %v1975
      %v2025 = vadd.f32 %v1770, %v1980
      %v2026 = vadd.f32 %v1771, %v1983
      %v2027 = vadd.f32 %v1772, %v1988
      %v2028 = vadd.f32 %v1773, %v1991
      %v2029 = vadd.f32 %v1774, %v1996
      %v2030 = vadd.f32 %v1775, %v1999
      %v2031 = vadd.f32 %v1776, %v2004
      %v2032 = vld [vmem:[%s251 + $0x10] sm:$0xc]
      %v2033 = vld [vmem:[%s251 + $0x14] sm:$0xf]
      %v2034 = vld [vmem:[%s251 + $0x18] sm:$0xf]
      %v2035 = vld [vmem:[%s251 + $0x1c] sm:$0xf]
      %v2036 = vld [vmem:[%s251 + $0x20] sm:$0xf]
      %v2037 = vld [vmem:[%s251 + $0x24] sm:$0xf]
      %v2038 = vld [vmem:[%s251 + $0x28] sm:$0xf]
      %v2039 = vld [vmem:[%s251 + $0x2c] sm:$0xf]
      %v2040 = vld [vmem:[%s251 + $0x30] sm:$0xf]
      %v2041 = vld [vmem:[%s251 + $0x34] sm:$0xf]
      %v2042 = vld [vmem:[%s251 + $0x38] sm:$0xf]
      %v2043 = vld [vmem:[%s251 + $0x3c] sm:$0xf]
      %v2044 = vld [vmem:[%s251 + $0x40] sm:$0xf]
      %v2045 = vld [vmem:[%s251 + $0x44] sm:$0xf]
      %v2046 = vld [vmem:[%s251 + $0x48] sm:$0xf]
      %v2047 = vld [vmem:[%s251 + $0x4c] sm:$0xf]
      %v2048 = vld [vmem:[%s251 + $0x50] sm:$0xf]
      %v2049 = vld [vmem:[%s251 + $0x54] sm:$0xf]
      %v2050 = vld [vmem:[%s251 + $0x58] sm:$0xf]
      %v2051 = vld [vmem:[%s251 + $0x5c] sm:$0xf]
      %v2052 = vld [vmem:[%s251 + $0x60] sm:$0xf]
      %v2053 = vld [vmem:[%s251 + $0x64] sm:$0xf]
      %v2054 = vld [vmem:[%s251 + $0x68] sm:$0xf]
      %v2055 = vld [vmem:[%s1 + $0x180] sm:$0xf]
      %v2056 = vld [vmem:[%s1 + $0x184] sm:$0xf]
      %v2057 = vld [vmem:[%s1 + $0x188] sm:$0xf]
      %v2058 = vld [vmem:[%s1 + $0x18c] sm:$0xf]
      %v2059 = vld [vmem:[%s1 + $0x190] sm:$0xf]
      %v2060 = vld [vmem:[%s1 + $0x194] sm:$0xf]
      %v2061 = vld [vmem:[%s1 + $0x198] sm:$0xf]
      %v2062 = vld [vmem:[%s1 + $0x19c] sm:$0xf]
      %v2063 = vld [vmem:[%s1 + $0x1a0] sm:$0xf]
      %v2064 = vld [vmem:[%s1 + $0x1a4] sm:$0xf]
      %v2065 = vld [vmem:[%s1 + $0x1a8] sm:$0xf]
      %v2066 = vld [vmem:[%s1 + $0x1ac] sm:$0xf]
      %v2067 = vld [vmem:[%s1 + $0x1b0] sm:$0xf]
      %v2068 = vld [vmem:[%s1 + $0x1b4] sm:$0xf]
      %v2069 = vld [vmem:[%s1 + $0x1b8] sm:$0xf]
      %v2070 = vld [vmem:[%s1 + $0x1bc] sm:$0xf]
      %v2094 = vunpack.c.l.b16 %v2032
      %v2095 = vunpack.c.l.b16 %v2033
      %v2096 = vunpack.c.l.b16 %v2034
      %v2097 = vunpack.c.l.b16 %v2035
      %v2098 = vunpack.c.l.b16 %v2036
      %v2099 = vunpack.c.l.b16 %v2037
      %v2100 = vunpack.c.l.b16 %v2038
      %v2101 = vunpack.c.l.b16 %v2039
      %v2102 = vunpack.c.l.b16 %v2040
      %v2103 = vunpack.c.l.b16 %v2041
      %v2104 = vunpack.c.l.b16 %v2042
      %v2105 = vunpack.c.l.b16 %v2043
      %v2106 = vunpack.c.l.b16 %v2044
      %v2107 = vunpack.c.l.b16 %v2045
      %v2108 = vunpack.c.l.b16 %v2046
      %v2109 = vunpack.c.l.b16 %v2047
      %v2110 = vunpack.c.l.b16 %v2048
      %v2111 = vunpack.c.l.b16 %v2049
      %v2112 = vunpack.c.l.b16 %v2050
      %v2113 = vunpack.c.l.b16 %v2051
      %v2114 = vunpack.c.l.b16 %v2052
      %v2115 = vunpack.c.l.b16 %v2053
      %v2116 = vunpack.c.l.b16 %v2054
      %v2117 = vpack.c.b16 %v2095, %v2094
      %v2118 = vpack.c.b16 %v2097, %v2096
      %v2119 = vpack.c.b16 %v2099, %v2098
      %v2120 = vpack.c.b16 %v2101, %v2100
      %v2121 = vpack.c.b16 %v2103, %v2102
      %v2122 = vpack.c.b16 %v2105, %v2104
      %v2123 = vpack.c.b16 %v2107, %v2106
      %v2124 = vpack.c.b16 %v2109, %v2108
      %v2125 = vpack.c.b16 %v2111, %v2110
      %v2126 = vpack.c.b16 %v2113, %v2112
      %v2127 = vpack.c.b16 %v2115, %v2114
      %v2128 = vpack.c.b16 %v2116, %v2116
      %v2129 = vrot.slane %v2117, 2
      %v2130 = vrot.slane %v2118, 2
      %v2131 = vsel %vm1797, %v2129, %v2130
      %v2132 = vrot.slane %v2119, 2
      %v2133 = vsel %vm1797, %v2130, %v2132
      %v2134 = vrot.slane %v2120, 2
      %v2135 = vsel %vm1797, %v2132, %v2134
      %v2136 = vrot.slane %v2121, 2
      %v2137 = vsel %vm1797, %v2134, %v2136
      %v2138 = vrot.slane %v2122, 2
      %v2139 = vsel %vm1797, %v2136, %v2138
      %v2140 = vrot.slane %v2123, 2
      %v2141 = vsel %vm1797, %v2138, %v2140
      %v2142 = vrot.slane %v2124, 2
      %v2143 = vsel %vm1797, %v2140, %v2142
      %v2144 = vrot.slane %v2125, 2
      %v2145 = vsel %vm1797, %v2142, %v2144
      %v2146 = vrot.slane %v2126, 2
      %v2147 = vsel %vm1797, %v2144, %v2146
      %v2148 = vrot.slane %v2127, 2
      %v2149 = vsel %vm1797, %v2146, %v2148
      %v2150 = vrot.slane %v2128, 2
      %v2151 = vsel %vm1797, %v2148, %v2150
      %v2180 = vunpack.c.l.b16 %v2055
      %v2181 = vunpack.c.l.b16 %v2056
      %v2182 = vunpack.c.l.b16 %v2057
      %v2183 = vunpack.c.l.b16 %v2058
      %v2184 = vunpack.c.l.b16 %v2059
      %v2185 = vunpack.c.l.b16 %v2060
      %v2186 = vunpack.c.l.b16 %v2061
      %v2187 = vunpack.c.l.b16 %v2062
      %v2188 = vunpack.c.l.b16 %v2063
      %v2189 = vunpack.c.l.b16 %v2064
      %v2190 = vunpack.c.l.b16 %v2065
      %v2191 = vunpack.c.l.b16 %v2066
      %v2192 = vunpack.c.l.b16 %v2067
      %v2193 = vunpack.c.l.b16 %v2068
      %v2194 = vunpack.c.l.b16 %v2069
      %v2195 = vunpack.c.l.b16 %v2070
      %v2196 = vpack.c.b16 %v2181, %v2180
      %v2197 = vpack.c.b16 %v2183, %v2182
      %v2198 = vpack.c.b16 %v2185, %v2184
      %v2199 = vpack.c.b16 %v2187, %v2186
      %v2200 = vpack.c.b16 %v2189, %v2188
      %v2201 = vpack.c.b16 %v2191, %v2190
      %v2202 = vpack.c.b16 %v2193, %v2192
      %v2203 = vpack.c.b16 %v2195, %v2194
      %2212 = vmatprep.subr.bf16.mxu0 0
      %2213 = vmatpush1.bf16.msra.mxu0 %v2196
      %2214 = vmatprep.subr.bf16.mxu0 0
      %2215 = vmatpush1.bf16.msra.mxu0 %v2197
      %2216 = vmatprep.subr.bf16.mxu0 0
      %2217 = vmatpush1.bf16.msra.mxu0 %v2198
      %2218 = vmatprep.subr.bf16.mxu0 0
      %2219 = vmatpush1.bf16.msra.mxu0 %v2199
      %2220 = vmatprep.subr.bf16.mxu0 0
      %2221 = vmatpush1.bf16.msra.mxu0 %v2200
      %2222 = vmatprep.subr.bf16.mxu0 0
      %2223 = vmatpush1.bf16.msra.mxu0 %v2201
      %2224 = vmatprep.subr.bf16.mxu0 0
      %2225 = vmatpush1.bf16.msra.mxu0 %v2202
      %2226 = vmatprep.subr.bf16.mxu0 0
      %2227 = vmatpush1.bf16.msra.mxu0 %v2203
      %2228 = vmatprep.subr.bf16.mxu0 0
      %2229 = vmatpush1.bf16.msra.mxu0 0
      %2230 = vmatprep.subr.bf16.mxu0 0
      %2231 = vmatpush1.bf16.msra.mxu0 0
      %2232 = vmatprep.subr.bf16.mxu0 0
      %2233 = vmatpush1.bf16.msra.mxu0 0
      %2234 = vmatprep.subr.bf16.mxu0 0
      %2235 = vmatpush1.bf16.msra.mxu0 0
      %2236 = vmatprep.subr.bf16.mxu0 0
      %2237 = vmatpush1.bf16.msra.mxu0 0
      %2238 = vmatprep.subr.bf16.mxu0 0
      %2239 = vmatpush1.bf16.msra.mxu0 0
      %2240 = vmatprep.subr.bf16.mxu0 0
      %2241 = vmatpush1.bf16.msra.mxu0 0
      %2242 = vmatprep.subr.bf16.mxu0 0
      %2243 = vmatpush1.bf16.msra.mxu0 0
      %2244 = vmatprep.mubr.bf16.mxu0 0
      %2245 = vmatmul.mubr.bf16.gmra.mrb[0].mxu0 %v2131
      %v2246 = vpop.f32.mrb[0].mxu0
      %v2247 = vadd.f32 0.0, %v2246
      %v2248 = vpop.f32.mrb[0].mxu0
      %v2249 = vpop.f32.mrb[0].mxu0
      %v2250 = vadd.f32 0.0, %v2249
      %v2251 = vpop.f32.mrb[0].mxu0
      %2252 = vmatprep.mubr.bf16.mxu0 0
      %2253 = vmatmul.mubr.bf16.gmra.mrb[0].mxu0 %v2133
      %v2254 = vpop.f32.mrb[0].mxu0
      %v2255 = vadd.f32 0.0, %v2254
      %v2256 = vpop.f32.mrb[0].mxu0
      %v2257 = vpop.f32.mrb[0].mxu0
      %v2258 = vadd.f32 0.0, %v2257
      %v2259 = vpop.f32.mrb[0].mxu0
      %2260 = vmatprep.mubr.bf16.mxu0 0
      %2261 = vmatmul.mubr.bf16.gmra.mrb[0].mxu0 %v2135
      %v2262 = vpop.f32.mrb[0].mxu0
      %v2263 = vadd.f32 0.0, %v2262
      %v2264 = vpop.f32.mrb[0].mxu0
      %v2265 = vpop.f32.mrb[0].mxu0
      %v2266 = vadd.f32 0.0, %v2265
      %v2267 = vpop.f32.mrb[0].mxu0
      %2268 = vmatprep.mubr.bf16.mxu0 0
      %2269 = vmatmul.mubr.bf16.gmra.mrb[0].mxu0 %v2137
      %v2270 = vpop.f32.mrb[0].mxu0
      %v2271 = vadd.f32 0.0, %v2270
      %v2272 = vpop.f32.mrb[0].mxu0
      %v2273 = vpop.f32.mrb[0].mxu0
      %v2274 = vadd.f32 0.0, %v2273
      %v2275 = vpop.f32.mrb[0].mxu0
      %2276 = vmatprep.mubr.bf16.mxu0 0
      %2277 = vmatmul.mubr.bf16.gmra.mrb[0].mxu0 %v2139
      %v2278 = vpop.f32.mrb[0].mxu0
      %v2279 = vadd.f32 0.0, %v2278
      %v2280 = vpop.f32.mrb[0].mxu0
      %v2281 = vpop.f32.mrb[0].mxu0
      %v2282 = vadd.f32 0.0, %v2281
      %v2283 = vpop.f32.mrb[0].mxu0
      %2284 = vmatprep.mubr.bf16.mxu0 0
      %2285 = vmatmul.mubr.bf16.gmra.mrb[0].mxu0 %v2141
      %v2286 = vpop.f32.mrb[0].mxu0
      %v2287 = vadd.f32 0.0, %v2286
      %v2288 = vpop.f32.mrb[0].mxu0
      %v2289 = vpop.f32.mrb[0].mxu0
      %v2290 = vadd.f32 0.0, %v2289
      %v2291 = vpop.f32.mrb[0].mxu0
      %2292 = vmatprep.mubr.bf16.mxu0 0
      %2293 = vmatmul.mubr.bf16.gmra.mrb[0].mxu0 %v2143
      %v2294 = vpop.f32.mrb[0].mxu0
      %v2295 = vadd.f32 0.0, %v2294
      %v2296 = vpop.f32.mrb[0].mxu0
      %v2297 = vpop.f32.mrb[0].mxu0
      %v2298 = vadd.f32 0.0, %v2297
      %v2299 = vpop.f32.mrb[0].mxu0
      %2300 = vmatprep.mubr.bf16.mxu0 0
      %2301 = vmatmul.mubr.bf16.gmra.mrb[0].mxu0 %v2145
      %v2302 = vpop.f32.mrb[0].mxu0
      %v2303 = vadd.f32 0.0, %v2302
      %v2304 = vpop.f32.mrb[0].mxu0
      %v2305 = vpop.f32.mrb[0].mxu0
      %v2306 = vadd.f32 0.0, %v2305
      %v2307 = vpop.f32.mrb[0].mxu0
      %2308 = vmatprep.mubr.bf16.mxu0 0
      %2309 = vmatmul.mubr.bf16.gmra.mrb[0].mxu0 %v2147
      %v2310 = vpop.f32.mrb[0].mxu0
      %v2311 = vadd.f32 0.0, %v2310
      %v2312 = vpop.f32.mrb[0].mxu0
      %v2313 = vpop.f32.mrb[0].mxu0
      %v2314 = vadd.f32 0.0, %v2313
      %v2315 = vpop.f32.mrb[0].mxu0
      %2316 = vmatprep.mubr.bf16.mxu0 0
      %2317 = vmatmul.mubr.bf16.gmra.mrb[0].mxu0 %v2149
      %v2318 = vpop.f32.mrb[0].mxu0
      %v2319 = vadd.f32 0.0, %v2318
      %v2320 = vpop.f32.mrb[0].mxu0
      %v2321 = vpop.f32.mrb[0].mxu0
      %v2322 = vadd.f32 0.0, %v2321
      %v2323 = vpop.f32.mrb[0].mxu0
      %2324 = vmatprep.mubr.bf16.mxu0 0
      %2325 = vmatmul.mubr.bf16.gmra.mrb[0].mxu0 %v2151
      %v2326 = vpop.f32.mrb[0].mxu0
      %v2327 = vadd.f32 0.0, %v2326
      %v2328 = vpop.f32.mrb[0].mxu0
      %v2329 = vpop.f32.mrb[0].mxu0
      %v2330 = vadd.f32 0.0, %v2329
      %v2331 = vpop.f32.mrb[0].mxu0
      %2332 = vmatprep.mubr.bf16.mxu0 0
      %2333 = vmatmul.mubr.bf16.gmra.mrb[0].mxu0 %v2150
      %v2334 = vpop.f32.mrb[0].mxu0
      %v2335 = vadd.f32 0.0, %v2334
      %v2336 = vpop.f32.mrb[0].mxu0
      %v2337 = vpop.f32.mrb[0].mxu0
      %v2338 = vpop.f32.mrb[0].mxu0
      %2339 = vdwg.mxu0
      %v2340 = vadd.f32 %v2009, %v2247
      %v2341 = vadd.f32 %v2010, %v2250
      %v2342 = vadd.f32 %v2011, %v2255
      %v2343 = vadd.f32 %v2012, %v2258
      %v2344 = vadd.f32 %v2013, %v2263
      %v2345 = vadd.f32 %v2014, %v2266
      %v2346 = vadd.f32 %v2015, %v2271
      %v2347 = vadd.f32 %v2016, %v2274
      %v2348 = vadd.f32 %v2017, %v2279
      %v2349 = vadd.f32 %v2018, %v2282
      %v2350 = vadd.f32 %v2019, %v2287
      %v2351 = vadd.f32 %v2020, %v2290
      %v2352 = vadd.f32 %v2021, %v2295
      %v2353 = vadd.f32 %v2022, %v2298
      %v2354 = vadd.f32 %v2023, %v2303
      %v2355 = vadd.f32 %v2024, %v2306
      %v2356 = vadd.f32 %v2025, %v2311
      %v2357 = vadd.f32 %v2026, %v2314
      %v2358 = vadd.f32 %v2027, %v2319
      %v2359 = vadd.f32 %v2028, %v2322
      %v2360 = vadd.f32 %v2029, %v2327
      %v2361 = vadd.f32 %v2030, %v2330
      %v2362 = vadd.f32 %v2031, %v2335
      %v2363 = vld [vmem:[%s251 + $0x10] sm:$0xc]
      %v2364 = vld [vmem:[%s251 + $0x14] sm:$0xf]
      %v2365 = vld [vmem:[%s251 + $0x18] sm:$0xf]
      %v2366 = vld [vmem:[%s251 + $0x1c] sm:$0xf]
      %v2367 = vld [vmem:[%s251 + $0x20] sm:$0xf]
      %v2368 = vld [vmem:[%s251 + $0x24] sm:$0xf]
      %v2369 = vld [vmem:[%s251 + $0x28] sm:$0xf]
      %v2370 = vld [vmem:[%s251 + $0x2c] sm:$0xf]
      %v2371 = vld [vmem:[%s251 + $0x30] sm:$0xf]
      %v2372 = vld [vmem:[%s251 + $0x34] sm:$0xf]
      %v2373 = vld [vmem:[%s251 + $0x38] sm:$0xf]
      %v2374 = vld [vmem:[%s251 + $0x3c] sm:$0xf]
      %v2375 = vld [vmem:[%s251 + $0x40] sm:$0xf]
      %v2376 = vld [vmem:[%s251 + $0x44] sm:$0xf]
      %v2377 = vld [vmem:[%s251 + $0x48] sm:$0xf]
      %v2378 = vld [vmem:[%s251 + $0x4c] sm:$0xf]
      %v2379 = vld [vmem:[%s251 + $0x50] sm:$0xf]
      %v2380 = vld [vmem:[%s251 + $0x54] sm:$0xf]
      %v2381 = vld [vmem:[%s251 + $0x58] sm:$0xf]
      %v2382 = vld [vmem:[%s251 + $0x5c] sm:$0xf]
      %v2383 = vld [vmem:[%s251 + $0x60] sm:$0xf]
      %v2384 = vld [vmem:[%s251 + $0x64] sm:$0xf]
      %v2385 = vld [vmem:[%s251 + $0x68] sm:$0xf]
      %v2386 = vld [vmem:[%s251 + $0x6c] sm:$0x1]
      %v2387 = vld [vmem:[%s1 + $0x1c0] sm:$0xf]
      %v2388 = vld [vmem:[%s1 + $0x1c4] sm:$0xf]
      %v2389 = vld [vmem:[%s1 + $0x1c8] sm:$0xf]
      %v2390 = vld [vmem:[%s1 + $0x1cc] sm:$0xf]
      %v2391 = vld [vmem:[%s1 + $0x1d0] sm:$0xf]
      %v2392 = vld [vmem:[%s1 + $0x1d4] sm:$0xf]
      %v2393 = vld [vmem:[%s1 + $0x1d8] sm:$0xf]
      %v2394 = vld [vmem:[%s1 + $0x1dc] sm:$0xf]
      %v2395 = vld [vmem:[%s1 + $0x1e0] sm:$0xf]
      %v2396 = vld [vmem:[%s1 + $0x1e4] sm:$0xf]
      %v2397 = vld [vmem:[%s1 + $0x1e8] sm:$0xf]
      %v2398 = vld [vmem:[%s1 + $0x1ec] sm:$0xf]
      %v2399 = vld [vmem:[%s1 + $0x1f0] sm:$0xf]
      %v2400 = vld [vmem:[%s1 + $0x1f4] sm:$0xf]
      %v2401 = vld [vmem:[%s1 + $0x1f8] sm:$0xf]
      %v2402 = vld [vmem:[%s1 + $0x1fc] sm:$0xf]
      %v2427 = vunpack.c.l.b16 %v2363
      %v2428 = vunpack.c.l.b16 %v2364
      %v2429 = vunpack.c.l.b16 %v2365
      %v2430 = vunpack.c.l.b16 %v2366
      %v2431 = vunpack.c.l.b16 %v2367
      %v2432 = vunpack.c.l.b16 %v2368
      %v2433 = vunpack.c.l.b16 %v2369
      %v2434 = vunpack.c.l.b16 %v2370
      %v2435 = vunpack.c.l.b16 %v2371
      %v2436 = vunpack.c.l.b16 %v2372
      %v2437 = vunpack.c.l.b16 %v2373
      %v2438 = vunpack.c.l.b16 %v2374
      %v2439 = vunpack.c.l.b16 %v2375
      %v2440 = vunpack.c.l.b16 %v2376
      %v2441 = vunpack.c.l.b16 %v2377
      %v2442 = vunpack.c.l.b16 %v2378
      %v2443 = vunpack.c.l.b16 %v2379
      %v2444 = vunpack.c.l.b16 %v2380
      %v2445 = vunpack.c.l.b16 %v2381
      %v2446 = vunpack.c.l.b16 %v2382
      %v2447 = vunpack.c.l.b16 %v2383
      %v2448 = vunpack.c.l.b16 %v2384
      %v2449 = vunpack.c.l.b16 %v2385
      %v2450 = vunpack.c.l.b16 %v2386
      %v2451 = vpack.c.b16 %v2428, %v2427
      %v2452 = vpack.c.b16 %v2430, %v2429
      %v2453 = vpack.c.b16 %v2432, %v2431
      %v2454 = vpack.c.b16 %v2434, %v2433
      %v2455 = vpack.c.b16 %v2436, %v2435
      %v2456 = vpack.c.b16 %v2438, %v2437
      %v2457 = vpack.c.b16 %v2440, %v2439
      %v2458 = vpack.c.b16 %v2442, %v2441
      %v2459 = vpack.c.b16 %v2444, %v2443
      %v2460 = vpack.c.b16 %v2446, %v2445
      %v2461 = vpack.c.b16 %v2448, %v2447
      %v2462 = vpack.c.b16 %v2450, %v2449
      %vm2463 = vsmask.f32 5376
      %v2465 = vshrl.u32 %v2451, 16
      %v2467 = vrot.slane %v2465, 2
      %v2468 = vshll.u32 %v2451, 16
      %v2470 = vrot.slane %v2468, 3
      %v2471 = vor.u32 %v2467, %v2470
      %v2473 = vshrl.u32 %v2452, 16
      %v2475 = vrot.slane %v2473, 2
      %v2476 = vshll.u32 %v2452, 16
      %v2478 = vrot.slane %v2476, 3
      %v2479 = vor.u32 %v2475, %v2478
      %v2480 = vsel %vm2463, %v2471, %v2479
      %v2482 = vshrl.u32 %v2453, 16
      %v2484 = vrot.slane %v2482, 2
      %v2485 = vshll.u32 %v2453, 16
      %v2487 = vrot.slane %v2485, 3
      %v2488 = vor.u32 %v2484, %v2487
      %v2489 = vsel %vm2463, %v2479, %v2488
      %v2491 = vshrl.u32 %v2454, 16
      %v2493 = vrot.slane %v2491, 2
      %v2494 = vshll.u32 %v2454, 16
      %v2496 = vrot.slane %v2494, 3
      %v2497 = vor.u32 %v2493, %v2496
      %v2498 = vsel %vm2463, %v2488, %v2497
      %v2500 = vshrl.u32 %v2455, 16
      %v2502 = vrot.slane %v2500, 2
      %v2503 = vshll.u32 %v2455, 16
      %v2505 = vrot.slane %v2503, 3
      %v2506 = vor.u32 %v2502, %v2505
      %v2507 = vsel %vm2463, %v2497, %v2506
      %v2509 = vshrl.u32 %v2456, 16
      %v2511 = vrot.slane %v2509, 2
      %v2512 = vshll.u32 %v2456, 16
      %v2514 = vrot.slane %v2512, 3
      %v2515 = vor.u32 %v2511, %v2514
      %v2516 = vsel %vm2463, %v2506, %v2515
      %v2518 = vshrl.u32 %v2457, 16
      %v2520 = vrot.slane %v2518, 2
      %v2521 = vshll.u32 %v2457, 16
      %v2523 = vrot.slane %v2521, 3
      %v2524 = vor.u32 %v2520, %v2523
      %v2525 = vsel %vm2463, %v2515, %v2524
      %v2527 = vshrl.u32 %v2458, 16
      %v2529 = vrot.slane %v2527, 2
      %v2530 = vshll.u32 %v2458, 16
      %v2532 = vrot.slane %v2530, 3
      %v2533 = vor.u32 %v2529, %v2532
      %v2534 = vsel %vm2463, %v2524, %v2533
      %v2536 = vshrl.u32 %v2459, 16
      %v2538 = vrot.slane %v2536, 2
      %v2539 = vshll.u32 %v2459, 16
      %v2541 = vrot.slane %v2539, 3
      %v2542 = vor.u32 %v2538, %v2541
      %v2543 = vsel %vm2463, %v2533, %v2542
      %v2545 = vshrl.u32 %v2460, 16
      %v2547 = vrot.slane %v2545, 2
      %v2548 = vshll.u32 %v2460, 16
      %v2550 = vrot.slane %v2548, 3
      %v2551 = vor.u32 %v2547, %v2550
      %v2552 = vsel %vm2463, %v2542, %v2551
      %v2554 = vshrl.u32 %v2461, 16
      %v2556 = vrot.slane %v2554, 2
      %v2557 = vshll.u32 %v2461, 16
      %v2559 = vrot.slane %v2557, 3
      %v2560 = vor.u32 %v2556, %v2559
      %v2561 = vsel %vm2463, %v2551, %v2560
      %v2563 = vshrl.u32 %v2462, 16
      %v2565 = vrot.slane %v2563, 2
      %v2566 = vshll.u32 %v2462, 16
      %v2568 = vrot.slane %v2566, 3
      %v2569 = vor.u32 %v2565, %v2568
      %v2570 = vsel %vm2463, %v2560, %v2569
      %v2599 = vunpack.c.l.b16 %v2387
      %v2600 = vunpack.c.l.b16 %v2388
      %v2601 = vunpack.c.l.b16 %v2389
      %v2602 = vunpack.c.l.b16 %v2390
      %v2603 = vunpack.c.l.b16 %v2391
      %v2604 = vunpack.c.l.b16 %v2392
      %v2605 = vunpack.c.l.b16 %v2393
      %v2606 = vunpack.c.l.b16 %v2394
      %v2607 = vunpack.c.l.b16 %v2395
      %v2608 = vunpack.c.l.b16 %v2396
      %v2609 = vunpack.c.l.b16 %v2397
      %v2610 = vunpack.c.l.b16 %v2398
      %v2611 = vunpack.c.l.b16 %v2399
      %v2612 = vunpack.c.l.b16 %v2400
      %v2613 = vunpack.c.l.b16 %v2401
      %v2614 = vunpack.c.l.b16 %v2402
      %v2615 = vpack.c.b16 %v2600, %v2599
      %v2616 = vpack.c.b16 %v2602, %v2601
      %v2617 = vpack.c.b16 %v2604, %v2603
      %v2618 = vpack.c.b16 %v2606, %v2605
      %v2619 = vpack.c.b16 %v2608, %v2607
      %v2620 = vpack.c.b16 %v2610, %v2609
      %v2621 = vpack.c.b16 %v2612, %v2611
      %v2622 = vpack.c.b16 %v2614, %v2613
      %2631 = vmatprep.subr.bf16.mxu0 0
      %2632 = vmatpush1.bf16.msra.mxu0 %v2615
      %2633 = vmatprep.subr.bf16.mxu0 0
      %2634 = vmatpush1.bf16.msra.mxu0 %v2616
      %2635 = vmatprep.subr.bf16.mxu0 0
      %2636 = vmatpush1.bf16.msra.mxu0 %v2617
      %2637 = vmatprep.subr.bf16.mxu0 0
      %2638 = vmatpush1.bf16.msra.mxu0 %v2618
      %2639 = vmatprep.subr.bf16.mxu0 0
      %2640 = vmatpush1.bf16.msra.mxu0 %v2619
      %2641 = vmatprep.subr.bf16.mxu0 0
      %2642 = vmatpush1.bf16.msra.mxu0 %v2620
      %2643 = vmatprep.subr.bf16.mxu0 0
      %2644 = vmatpush1.bf16.msra.mxu0 %v2621
      %2645 = vmatprep.subr.bf16.mxu0 0
      %2646 = vmatpush1.bf16.msra.mxu0 %v2622
      %2647 = vmatprep.subr.bf16.mxu0 0
      %2648 = vmatpush1.bf16.msra.mxu0 0
      %2649 = vmatprep.subr.bf16.mxu0 0
      %2650 = vmatpush1.bf16.msra.mxu0 0
      %2651 = vmatprep.subr.bf16.mxu0 0
      %2652 = vmatpush1.bf16.msra.mxu0 0
      %2653 = vmatprep.subr.bf16.mxu0 0
      %2654 = vmatpush1.bf16.msra.mxu0 0
      %2655 = vmatprep.subr.bf16.mxu0 0
      %2656 = vmatpush1.bf16.msra.mxu0 0
      %2657 = vmatprep.subr.bf16.mxu0 0
      %2658 = vmatpush1.bf16.msra.mxu0 0
      %2659 = vmatprep.subr.bf16.mxu0 0
      %2660 = vmatpush1.bf16.msra.mxu0 0
      %2661 = vmatprep.subr.bf16.mxu0 0
      %2662 = vmatpush1.bf16.msra.mxu0 0
      %2663 = vmatprep.mubr.bf16.mxu0 0
      %2664 = vmatmul.mubr.bf16.gmra.mrb[0].mxu0 %v2480
      %v2665 = vpop.f32.mrb[0].mxu0
      %v2666 = vadd.f32 0.0, %v2665
      %v2667 = vpop.f32.mrb[0].mxu0
      %v2668 = vpop.f32.mrb[0].mxu0
      %v2669 = vadd.f32 0.0, %v2668
      %v2670 = vpop.f32.mrb[0].mxu0
      %2671 = vmatprep.mubr.bf16.mxu0 0
      %2672 = vmatmul.mubr.bf16.gmra.mrb[0].mxu0 %v2489
      %v2673 = vpop.f32.mrb[0].mxu0
      %v2674 = vadd.f32 0.0, %v2673
      %v2675 = vpop.f32.mrb[0].mxu0
      %v2676 = vpop.f32.mrb[0].mxu0
      %v2677 = vadd.f32 0.0, %v2676
      %v2678 = vpop.f32.mrb[0].mxu0
      %2679 = vmatprep.mubr.bf16.mxu0 0
      %2680 = vmatmul.mubr.bf16.gmra.mrb[0].mxu0 %v2498
      %v2681 = vpop.f32.mrb[0].mxu0
      %v2682 = vadd.f32 0.0, %v2681
      %v2683 = vpop.f32.mrb[0].mxu0
      %v2684 = vpop.f32.mrb[0].mxu0
      %v2685 = vadd.f32 0.0, %v2684
      %v2686 = vpop.f32.mrb[0].mxu0
      %2687 = vmatprep.mubr.bf16.mxu0 0
      %2688 = vmatmul.mubr.bf16.gmra.mrb[0].mxu0 %v2507
      %v2689 = vpop.f32.mrb[0].mxu0
      %v2690 = vadd.f32 0.0, %v2689
      %v2691 = vpop.f32.mrb[0].mxu0
      %v2692 = vpop.f32.mrb[0].mxu0
      %v2693 = vadd.f32 0.0, %v2692
      %v2694 = vpop.f32.mrb[0].mxu0
      %2695 = vmatprep.mubr.bf16.mxu0 0
      %2696 = vmatmul.mubr.bf16.gmra.mrb[0].mxu0 %v2516
      %v2697 = vpop.f32.mrb[0].mxu0
      %v2698 = vadd.f32 0.0, %v2697
      %v2699 = vpop.f32.mrb[0].mxu0
      %v2700 = vpop.f32.mrb[0].mxu0
      %v2701 = vadd.f32 0.0, %v2700
      %v2702 = vpop.f32.mrb[0].mxu0
      %2703 = vmatprep.mubr.bf16.mxu0 0
      %2704 = vmatmul.mubr.bf16.gmra.mrb[0].mxu0 %v2525
      %v2705 = vpop.f32.mrb[0].mxu0
      %v2706 = vadd.f32 0.0, %v2705
      %v2707 = vpop.f32.mrb[0].mxu0
      %v2708 = vpop.f32.mrb[0].mxu0
      %v2709 = vadd.f32 0.0, %v2708
      %v2710 = vpop.f32.mrb[0].mxu0
      %2711 = vmatprep.mubr.bf16.mxu0 0
      %2712 = vmatmul.mubr.bf16.gmra.mrb[0].mxu0 %v2534
      %v2713 = vpop.f32.mrb[0].mxu0
      %v2714 = vadd.f32 0.0, %v2713
      %v2715 = vpop.f32.mrb[0].mxu0
      %v2716 = vpop.f32.mrb[0].mxu0
      %v2717 = vadd.f32 0.0, %v2716
      %v2718 = vpop.f32.mrb[0].mxu0
      %2719 = vmatprep.mubr.bf16.mxu0 0
      %2720 = vmatmul.mubr.bf16.gmra.mrb[0].mxu0 %v2543
      %v2721 = vpop.f32.mrb[0].mxu0
      %v2722 = vadd.f32 0.0, %v2721
      %v2723 = vpop.f32.mrb[0].mxu0
      %v2724 = vpop.f32.mrb[0].mxu0
      %v2725 = vadd.f32 0.0, %v2724
      %v2726 = vpop.f32.mrb[0].mxu0
      %2727 = vmatprep.mubr.bf16.mxu0 0
      %2728 = vmatmul.mubr.bf16.gmra.mrb[0].mxu0 %v2552
      %v2729 = vpop.f32.mrb[0].mxu0
      %v2730 = vadd.f32 0.0, %v2729
      %v2731 = vpop.f32.mrb[0].mxu0
      %v2732 = vpop.f32.mrb[0].mxu0
      %v2733 = vadd.f32 0.0, %v2732
      %v2734 = vpop.f32.mrb[0].mxu0
      %2735 = vmatprep.mubr.bf16.mxu0 0
      %2736 = vmatmul.mubr.bf16.gmra.mrb[0].mxu0 %v2561
      %v2737 = vpop.f32.mrb[0].mxu0
      %v2738 = vadd.f32 0.0, %v2737
      %v2739 = vpop.f32.mrb[0].mxu0
      %v2740 = vpop.f32.mrb[0].mxu0
      %v2741 = vadd.f32 0.0, %v2740
      %v2742 = vpop.f32.mrb[0].mxu0
      %2743 = vmatprep.mubr.bf16.mxu0 0
      %2744 = vmatmul.mubr.bf16.gmra.mrb[0].mxu0 %v2570
      %v2745 = vpop.f32.mrb[0].mxu0
      %v2746 = vadd.f32 0.0, %v2745
      %v2747 = vpop.f32.mrb[0].mxu0
      %v2748 = vpop.f32.mrb[0].mxu0
      %v2749 = vadd.f32 0.0, %v2748
      %v2750 = vpop.f32.mrb[0].mxu0
      %2751 = vmatprep.mubr.bf16.mxu0 0
      %2752 = vmatmul.mubr.bf16.gmra.mrb[0].mxu0 %v2569
      %v2753 = vpop.f32.mrb[0].mxu0
      %v2754 = vadd.f32 0.0, %v2753
      %v2755 = vpop.f32.mrb[0].mxu0
      %v2756 = vpop.f32.mrb[0].mxu0
      %v2757 = vpop.f32.mrb[0].mxu0
      %2758 = vdwg.mxu0
      %v2759 = vadd.f32 %v2340, %v2666
      %v2760 = vadd.f32 %v2341, %v2669
      %v2761 = vadd.f32 %v2342, %v2674
      %v2762 = vadd.f32 %v2343, %v2677
      %v2763 = vadd.f32 %v2344, %v2682
      %v2764 = vadd.f32 %v2345, %v2685
      %v2765 = vadd.f32 %v2346, %v2690
      %v2766 = vadd.f32 %v2347, %v2693
      %v2767 = vadd.f32 %v2348, %v2698
      %v2768 = vadd.f32 %v2349, %v2701
      %v2769 = vadd.f32 %v2350, %v2706
      %v2770 = vadd.f32 %v2351, %v2709
      %v2771 = vadd.f32 %v2352, %v2714
      %v2772 = vadd.f32 %v2353, %v2717
      %v2773 = vadd.f32 %v2354, %v2722
      %v2774 = vadd.f32 %v2355, %v2725
      %v2775 = vadd.f32 %v2356, %v2730
      %v2776 = vadd.f32 %v2357, %v2733
      %v2777 = vadd.f32 %v2358, %v2738
      %v2778 = vadd.f32 %v2359, %v2741
      %v2779 = vadd.f32 %v2360, %v2746
      %v2780 = vadd.f32 %v2361, %v2749
      %v2781 = vadd.f32 %v2362, %v2754
      %v2782 = vld [vmem:[%s251 + $0x10] sm:$0x8]
      %v2783 = vld [vmem:[%s1 + $0x200] sm:$0xf]
      %v2784 = vld [vmem:[%s1 + $0x204] sm:$0xf]
      %v2785 = vld [vmem:[%s1 + $0x208] sm:$0xf]
      %v2786 = vld [vmem:[%s1 + $0x20c] sm:$0xf]
      %v2787 = vld [vmem:[%s1 + $0x210] sm:$0xf]
      %v2788 = vld [vmem:[%s1 + $0x214] sm:$0xf]
      %v2789 = vld [vmem:[%s1 + $0x218] sm:$0xf]
      %v2790 = vld [vmem:[%s1 + $0x21c] sm:$0xf]
      %v2791 = vld [vmem:[%s1 + $0x220] sm:$0xf]
      %v2792 = vld [vmem:[%s1 + $0x224] sm:$0xf]
      %v2793 = vld [vmem:[%s1 + $0x228] sm:$0xf]
      %v2794 = vld [vmem:[%s1 + $0x22c] sm:$0xf]
      %v2795 = vld [vmem:[%s1 + $0x230] sm:$0xf]
      %v2796 = vld [vmem:[%s1 + $0x234] sm:$0xf]
      %v2797 = vld [vmem:[%s1 + $0x238] sm:$0xf]
      %v2798 = vld [vmem:[%s1 + $0x23c] sm:$0xf]
      %v2800 = vunpack.c.l.b16 %v2782
      %v2801 = vpack.c.b16 %v2428, %v2800
      %vm2802 = vcmask 1044480
      %v2803 = vrot.slane %v2801, 3
      %v2804 = vrot.slane %v2452, 3
      %v2805 = vsel %vm2802, %v2803, %v2804
      %v2806 = vrot.slane %v2453, 3
      %v2807 = vsel %vm2802, %v2804, %v2806
      %v2808 = vrot.slane %v2454, 3
      %v2809 = vsel %vm2802, %v2806, %v2808
      %v2810 = vrot.slane %v2455, 3
      %v2811 = vsel %vm2802, %v2808, %v2810
      %v2812 = vrot.slane %v2456, 3
      %v2813 = vsel %vm2802, %v2810, %v2812
      %v2814 = vrot.slane %v2457, 3
      %v2815 = vsel %vm2802, %v2812, %v2814
      %v2816 = vrot.slane %v2458, 3
      %v2817 = vsel %vm2802, %v2814, %v2816
      %v2818 = vrot.slane %v2459, 3
      %v2819 = vsel %vm2802, %v2816, %v2818
      %v2820 = vrot.slane %v2460, 3
      %v2821 = vsel %vm2802, %v2818, %v2820
      %v2822 = vrot.slane %v2461, 3
      %v2823 = vsel %vm2802, %v2820, %v2822
      %v2824 = vrot.slane %v2462, 3
      %v2825 = vsel %vm2802, %v2822, %v2824
      %v2854 = vunpack.c.l.b16 %v2783
      %v2855 = vunpack.c.l.b16 %v2784
      %v2856 = vunpack.c.l.b16 %v2785
      %v2857 = vunpack.c.l.b16 %v2786
      %v2858 = vunpack.c.l.b16 %v2787
      %v2859 = vunpack.c.l.b16 %v2788
      %v2860 = vunpack.c.l.b16 %v2789
      %v2861 = vunpack.c.l.b16 %v2790
      %v2862 = vunpack.c.l.b16 %v2791
      %v2863 = vunpack.c.l.b16 %v2792
      %v2864 = vunpack.c.l.b16 %v2793
      %v2865 = vunpack.c.l.b16 %v2794
      %v2866 = vunpack.c.l.b16 %v2795
      %v2867 = vunpack.c.l.b16 %v2796
      %v2868 = vunpack.c.l.b16 %v2797
      %v2869 = vunpack.c.l.b16 %v2798
      %v2870 = vpack.c.b16 %v2855, %v2854
      %v2871 = vpack.c.b16 %v2857, %v2856
      %v2872 = vpack.c.b16 %v2859, %v2858
      %v2873 = vpack.c.b16 %v2861, %v2860
      %v2874 = vpack.c.b16 %v2863, %v2862
      %v2875 = vpack.c.b16 %v2865, %v2864
      %v2876 = vpack.c.b16 %v2867, %v2866
      %v2877 = vpack.c.b16 %v2869, %v2868
      %2886 = vmatprep.subr.bf16.mxu0 0
      %2887 = vmatpush1.bf16.msra.mxu0 %v2870
      %2888 = vmatprep.subr.bf16.mxu0 0
      %2889 = vmatpush1.bf16.msra.mxu0 %v2871
      %2890 = vmatprep.subr.bf16.mxu0 0
      %2891 = vmatpush1.bf16.msra.mxu0 %v2872
      %2892 = vmatprep.subr.bf16.mxu0 0
      %2893 = vmatpush1.bf16.msra.mxu0 %v2873
      %2894 = vmatprep.subr.bf16.mxu0 0
      %2895 = vmatpush1.bf16.msra.mxu0 %v2874
      %2896 = vmatprep.subr.bf16.mxu0 0
      %2897 = vmatpush1.bf16.msra.mxu0 %v2875
      %2898 = vmatprep.subr.bf16.mxu0 0
      %2899 = vmatpush1.bf16.msra.mxu0 %v2876
      %2900 = vmatprep.subr.bf16.mxu0 0
      %2901 = vmatpush1.bf16.msra.mxu0 %v2877
      %2902 = vmatprep.subr.bf16.mxu0 0
      %2903 = vmatpush1.bf16.msra.mxu0 0
      %2904 = vmatprep.subr.bf16.mxu0 0
      %2905 = vmatpush1.bf16.msra.mxu0 0
      %2906 = vmatprep.subr.bf16.mxu0 0
      %2907 = vmatpush1.bf16.msra.mxu0 0
      %2908 = vmatprep.subr.bf16.mxu0 0
      %2909 = vmatpush1.bf16.msra.mxu0 0
      %2910 = vmatprep.subr.bf16.mxu0 0
      %2911 = vmatpush1.bf16.msra.mxu0 0
      %2912 = vmatprep.subr.bf16.mxu0 0
      %2913 = vmatpush1.bf16.msra.mxu0 0
      %2914 = vmatprep.subr.bf16.mxu0 0
      %2915 = vmatpush1.bf16.msra.mxu0 0
      %2916 = vmatprep.subr.bf16.mxu0 0
      %2917 = vmatpush1.bf16.msra.mxu0 0
      %2918 = vmatprep.mubr.bf16.mxu0 0
      %2919 = vmatmul.mubr.bf16.gmra.mrb[0].mxu0 %v2805
      %v2920 = vpop.f32.mrb[0].mxu0
      %v2921 = vadd.f32 0.0, %v2920
      %v2922 = vpop.f32.mrb[0].mxu0
      %v2923 = vpop.f32.mrb[0].mxu0
      %v2924 = vadd.f32 0.0, %v2923
      %v2925 = vpop.f32.mrb[0].mxu0
      %2926 = vmatprep.mubr.bf16.mxu0 0
      %2927 = vmatmul.mubr.bf16.gmra.mrb[0].mxu0 %v2807
      %v2928 = vpop.f32.mrb[0].mxu0
      %v2929 = vadd.f32 0.0, %v2928
      %v2930 = vpop.f32.mrb[0].mxu0
      %v2931 = vpop.f32.mrb[0].mxu0
      %v2932 = vadd.f32 0.0, %v2931
      %v2933 = vpop.f32.mrb[0].mxu0
      %2934 = vmatprep.mubr.bf16.mxu0 0
      %2935 = vmatmul.mubr.bf16.gmra.mrb[0].mxu0 %v2809
      %v2936 = vpop.f32.mrb[0].mxu0
      %v2937 = vadd.f32 0.0, %v2936
      %v2938 = vpop.f32.mrb[0].mxu0
      %v2939 = vpop.f32.mrb[0].mxu0
      %v2940 = vadd.f32 0.0, %v2939
      %v2941 = vpop.f32.mrb[0].mxu0
      %2942 = vmatprep.mubr.bf16.mxu0 0
      %2943 = vmatmul.mubr.bf16.gmra.mrb[0].mxu0 %v2811
      %v2944 = vpop.f32.mrb[0].mxu0
      %v2945 = vadd.f32 0.0, %v2944
      %v2946 = vpop.f32.mrb[0].mxu0
      %v2947 = vpop.f32.mrb[0].mxu0
      %v2948 = vadd.f32 0.0, %v2947
      %v2949 = vpop.f32.mrb[0].mxu0
      %2950 = vmatprep.mubr.bf16.mxu0 0
      %2951 = vmatmul.mubr.bf16.gmra.mrb[0].mxu0 %v2813
      %v2952 = vpop.f32.mrb[0].mxu0
      %v2953 = vadd.f32 0.0, %v2952
      %v2954 = vpop.f32.mrb[0].mxu0
      %v2955 = vpop.f32.mrb[0].mxu0
      %v2956 = vadd.f32 0.0, %v2955
      %v2957 = vpop.f32.mrb[0].mxu0
      %2958 = vmatprep.mubr.bf16.mxu0 0
      %2959 = vmatmul.mubr.bf16.gmra.mrb[0].mxu0 %v2815
      %v2960 = vpop.f32.mrb[0].mxu0
      %v2961 = vadd.f32 0.0, %v2960
      %v2962 = vpop.f32.mrb[0].mxu0
      %v2963 = vpop.f32.mrb[0].mxu0
      %v2964 = vadd.f32 0.0, %v2963
      %v2965 = vpop.f32.mrb[0].mxu0
      %2966 = vmatprep.mubr.bf16.mxu0 0
      %2967 = vmatmul.mubr.bf16.gmra.mrb[0].mxu0 %v2817
      %v2968 = vpop.f32.mrb[0].mxu0
      %v2969 = vadd.f32 0.0, %v2968
      %v2970 = vpop.f32.mrb[0].mxu0
      %v2971 = vpop.f32.mrb[0].mxu0
      %v2972 = vadd.f32 0.0, %v2971
      %v2973 = vpop.f32.mrb[0].mxu0
      %2974 = vmatprep.mubr.bf16.mxu0 0
      %2975 = vmatmul.mubr.bf16.gmra.mrb[0].mxu0 %v2819
      %v2976 = vpop.f32.mrb[0].mxu0
      %v2977 = vadd.f32 0.0, %v2976
      %v2978 = vpop.f32.mrb[0].mxu0
      %v2979 = vpop.f32.mrb[0].mxu0
      %v2980 = vadd.f32 0.0, %v2979
      %v2981 = vpop.f32.mrb[0].mxu0
      %2982 = vmatprep.mubr.bf16.mxu0 0
      %2983 = vmatmul.mubr.bf16.gmra.mrb[0].mxu0 %v2821
      %v2984 = vpop.f32.mrb[0].mxu0
      %v2985 = vadd.f32 0.0, %v2984
      %v2986 = vpop.f32.mrb[0].mxu0
      %v2987 = vpop.f32.mrb[0].mxu0
      %v2988 = vadd.f32 0.0, %v2987
      %v2989 = vpop.f32.mrb[0].mxu0
      %2990 = vmatprep.mubr.bf16.mxu0 0
      %2991 = vmatmul.mubr.bf16.gmra.mrb[0].mxu0 %v2823
      %v2992 = vpop.f32.mrb[0].mxu0
      %v2993 = vadd.f32 0.0, %v2992
      %v2994 = vpop.f32.mrb[0].mxu0
      %v2995 = vpop.f32.mrb[0].mxu0
      %v2996 = vadd.f32 0.0, %v2995
      %v2997 = vpop.f32.mrb[0].mxu0
      %2998 = vmatprep.mubr.bf16.mxu0 0
      %2999 = vmatmul.mubr.bf16.gmra.mrb[0].mxu0 %v2825
      %v3000 = vpop.f32.mrb[0].mxu0
      %v3001 = vadd.f32 0.0, %v3000
      %v3002 = vpop.f32.mrb[0].mxu0
      %v3003 = vpop.f32.mrb[0].mxu0
      %v3004 = vadd.f32 0.0, %v3003
      %v3005 = vpop.f32.mrb[0].mxu0
      %3006 = vmatprep.mubr.bf16.mxu0 0
      %3007 = vmatmul.mubr.bf16.gmra.mrb[0].mxu0 %v2824
      %v3008 = vpop.f32.mrb[0].mxu0
      %v3009 = vadd.f32 0.0, %v3008
      %v3010 = vpop.f32.mrb[0].mxu0
      %v3011 = vpop.f32.mrb[0].mxu0
      %v3012 = vpop.f32.mrb[0].mxu0
      %3013 = vdwg.mxu0
      %v3014 = vadd.f32 %v2759, %v2921
      %v3015 = vadd.f32 %v2760, %v2924
      %v3016 = vadd.f32 %v2761, %v2929
      %v3017 = vadd.f32 %v2762, %v2932
      %v3018 = vadd.f32 %v2763, %v2937
      %v3019 = vadd.f32 %v2764, %v2940
      %v3020 = vadd.f32 %v2765, %v2945
      %v3021 = vadd.f32 %v2766, %v2948
      %v3022 = vadd.f32 %v2767, %v2953
      %v3023 = vadd.f32 %v2768, %v2956
      %v3024 = vadd.f32 %v2769, %v2961
      %v3025 = vadd.f32 %v2770, %v2964
      %v3026 = vadd.f32 %v2771, %v2969
      %v3027 = vadd.f32 %v2772, %v2972
      %v3028 = vadd.f32 %v2773, %v2977
      %v3029 = vadd.f32 %v2774, %v2980
      %v3030 = vadd.f32 %v2775, %v2985
      %v3031 = vadd.f32 %v2776, %v2988
      %v3032 = vadd.f32 %v2777, %v2993
      %v3033 = vadd.f32 %v2778, %v2996
      %v3034 = vadd.f32 %v2779, %v3001
      %v3035 = vadd.f32 %v2780, %v3004
      %v3036 = vadd.f32 %v2781, %v3009
      %v3037 = vld [vmem:[%s2] sm:$0x1]
      %v3039 = vlaneseq
      %v3040 = vshrl.u32 %v3039, 7
      %v3041 = vsub.s32 0, %v3040
      %v3042 = vrot.slane %v3037, %v3041
      %v3044 = vadd.f32 %v3014, %v3042
      %v3045 = vadd.f32 %v3015, %v3042
      %v3046 = vadd.f32 %v3016, %v3042
      %v3047 = vadd.f32 %v3017, %v3042
      %v3048 = vadd.f32 %v3018, %v3042
      %v3049 = vadd.f32 %v3019, %v3042
      %v3050 = vadd.f32 %v3020, %v3042
      %v3051 = vadd.f32 %v3021, %v3042
      %v3052 = vadd.f32 %v3022, %v3042
      %v3053 = vadd.f32 %v3023, %v3042
      %v3054 = vadd.f32 %v3024, %v3042
      %v3055 = vadd.f32 %v3025, %v3042
      %v3056 = vadd.f32 %v3026, %v3042
      %v3057 = vadd.f32 %v3027, %v3042
      %v3058 = vadd.f32 %v3028, %v3042
      %v3059 = vadd.f32 %v3029, %v3042
      %v3060 = vadd.f32 %v3030, %v3042
      %v3061 = vadd.f32 %v3031, %v3042
      %v3062 = vadd.f32 %v3032, %v3042
      %v3063 = vadd.f32 %v3033, %v3042
      %v3064 = vadd.f32 %v3034, %v3042
      %v3065 = vadd.f32 %v3035, %v3042
      %v3066 = vadd.f32 %v3036, %v3042
      %v3067 = vmax.f32 %v3044, 0.0
      %v3068 = vmax.f32 %v3045, 0.0
      %v3069 = vmax.f32 %v3046, 0.0
      %v3070 = vmax.f32 %v3047, 0.0
      %v3071 = vmax.f32 %v3048, 0.0
      %v3072 = vmax.f32 %v3049, 0.0
      %v3073 = vmax.f32 %v3050, 0.0
      %v3074 = vmax.f32 %v3051, 0.0
      %v3075 = vmax.f32 %v3052, 0.0
      %v3076 = vmax.f32 %v3053, 0.0
      %v3077 = vmax.f32 %v3054, 0.0
      %v3078 = vmax.f32 %v3055, 0.0
      %v3079 = vmax.f32 %v3056, 0.0
      %v3080 = vmax.f32 %v3057, 0.0
      %v3081 = vmax.f32 %v3058, 0.0
      %v3082 = vmax.f32 %v3059, 0.0
      %v3083 = vmax.f32 %v3060, 0.0
      %v3084 = vmax.f32 %v3061, 0.0
      %v3085 = vmax.f32 %v3062, 0.0
      %v3086 = vmax.f32 %v3063, 0.0
      %v3087 = vmax.f32 %v3064, 0.0
      %v3088 = vmax.f32 %v3065, 0.0
      %v3089 = vmax.f32 %v3066, 0.0
      %v3090 = vpack.c.bf16 %v3068, %v3067
      %v3091 = vpack.c.bf16 %v3070, %v3069
      %v3092 = vpack.c.bf16 %v3072, %v3071
      %v3093 = vpack.c.bf16 %v3074, %v3073
      %v3094 = vpack.c.bf16 %v3076, %v3075
      %v3095 = vpack.c.bf16 %v3078, %v3077
      %v3096 = vpack.c.bf16 %v3080, %v3079
      %v3097 = vpack.c.bf16 %v3082, %v3081
      %v3098 = vpack.c.bf16 %v3084, %v3083
      %v3099 = vpack.c.bf16 %v3086, %v3085
      %v3100 = vpack.c.bf16 %v3088, %v3087
      %v3101 = vpack.c.bf16 %v3089, %v3089
      %v3114 = vunpack.c.l.b16 %v3090
      %v3115 = vunpack.c.h.b16 %v3090
      %v3116 = vunpack.c.l.b16 %v3091
      %v3117 = vunpack.c.h.b16 %v3091
      %v3118 = vunpack.c.l.b16 %v3092
      %v3119 = vunpack.c.h.b16 %v3092
      %v3120 = vunpack.c.l.b16 %v3093
      %v3121 = vunpack.c.h.b16 %v3093
      %v3122 = vunpack.c.l.b16 %v3094
      %v3123 = vunpack.c.h.b16 %v3094
      %v3124 = vunpack.c.l.b16 %v3095
      %v3125 = vunpack.c.h.b16 %v3095
      %v3126 = vunpack.c.l.b16 %v3096
      %v3127 = vunpack.c.h.b16 %v3096
      %v3128 = vunpack.c.l.b16 %v3097
      %v3129 = vunpack.c.h.b16 %v3097
      %v3130 = vunpack.c.l.b16 %v3098
      %v3131 = vunpack.c.h.b16 %v3098
      %v3132 = vunpack.c.l.b16 %v3099
      %v3133 = vunpack.c.h.b16 %v3099
      %v3134 = vunpack.c.l.b16 %v3100
      %v3135 = vunpack.c.h.b16 %v3100
      %v3136 = vunpack.c.l.b16 %v3101
      %v3137 = vpack.c.b16 %v3114, %v3114
      %v3138 = vpack.c.b16 %v3115, %v3115
      %v3139 = vpack.c.b16 %v3116, %v3116
      %v3140 = vpack.c.b16 %v3117, %v3117
      %v3141 = vpack.c.b16 %v3118, %v3118
      %v3142 = vpack.c.b16 %v3119, %v3119
      %v3143 = vpack.c.b16 %v3120, %v3120
      %v3144 = vpack.c.b16 %v3121, %v3121
      %v3145 = vpack.c.b16 %v3122, %v3122
      %v3146 = vpack.c.b16 %v3123, %v3123
      %v3147 = vpack.c.b16 %v3124, %v3124
      %v3148 = vpack.c.b16 %v3125, %v3125
      %v3149 = vpack.c.b16 %v3126, %v3126
      %v3150 = vpack.c.b16 %v3127, %v3127
      %v3151 = vpack.c.b16 %v3128, %v3128
      %v3152 = vpack.c.b16 %v3129, %v3129
      %v3153 = vpack.c.b16 %v3130, %v3130
      %v3154 = vpack.c.b16 %v3131, %v3131
      %v3155 = vpack.c.b16 %v3132, %v3132
      %v3156 = vpack.c.b16 %v3133, %v3133
      %v3157 = vpack.c.b16 %v3134, %v3134
      %v3158 = vpack.c.b16 %v3135, %v3135
      %v3159 = vpack.c.b16 %v3136, %v3136
      %vm3183 = vcmask 519168
      %3184 = vst.msk [vmem:[#allocation2 + $0x4] sm:$0xf] %vm3183, %v3137
      %3185 = vst.msk [vmem:[#allocation2 + $0x8] sm:$0xf] %vm3183, %v3138
      %3186 = vst.msk [vmem:[#allocation2 + $0xc] sm:$0xf] %vm3183, %v3139
      %3187 = vst.msk [vmem:[#allocation2 + $0x10] sm:$0xf] %vm3183, %v3140
      %3188 = vst.msk [vmem:[#allocation2 + $0x14] sm:$0xf] %vm3183, %v3141
      %3189 = vst.msk [vmem:[#allocation2 + $0x18] sm:$0xf] %vm3183, %v3142
      %3190 = vst.msk [vmem:[#allocation2 + $0x1c] sm:$0xf] %vm3183, %v3143
      %3191 = vst.msk [vmem:[#allocation2 + $0x20] sm:$0xf] %vm3183, %v3144
      %3192 = vst.msk [vmem:[#allocation2 + $0x24] sm:$0xf] %vm3183, %v3145
      %3193 = vst.msk [vmem:[#allocation2 + $0x28] sm:$0xf] %vm3183, %v3146
      %3194 = vst.msk [vmem:[#allocation2 + $0x2c] sm:$0xf] %vm3183, %v3147
      %3195 = vst.msk [vmem:[#allocation2 + $0x30] sm:$0xf] %vm3183, %v3148
      %3196 = vst.msk [vmem:[#allocation2 + $0x34] sm:$0xf] %vm3183, %v3149
      %3197 = vst.msk [vmem:[#allocation2 + $0x38] sm:$0xf] %vm3183, %v3150
      %3198 = vst.msk [vmem:[#allocation2 + $0x3c] sm:$0xf] %vm3183, %v3151
      %3199 = vst.msk [vmem:[#allocation2 + $0x40] sm:$0xf] %vm3183, %v3152
      %3200 = vst.msk [vmem:[#allocation2 + $0x44] sm:$0xf] %vm3183, %v3153
      %3201 = vst.msk [vmem:[#allocation2 + $0x48] sm:$0xf] %vm3183, %v3154
      %3202 = vst.msk [vmem:[#allocation2 + $0x4c] sm:$0xf] %vm3183, %v3155
      %3203 = vst.msk [vmem:[#allocation2 + $0x50] sm:$0xf] %vm3183, %v3156
      %3204 = vst.msk [vmem:[#allocation2 + $0x54] sm:$0xf] %vm3183, %v3157
      %3205 = vst.msk [vmem:[#allocation2 + $0x58] sm:$0xf] %vm3183, %v3158
      %vm3206 = vcmask 517120
      %3207 = vst.msk [vmem:[#allocation2 + $0x5c] sm:$0x3] %vm3206, %v3159
      %vm3208 = vcmask 519171
      %vm3209 = vsmask.f32 7950
      %vm3210 = vmand %vm3208, %vm3209
      %v3211 = vld [vmem:[#allocation2] sm:$0x8]
      %v3212 = vsel %vm3210, 0, %v3211
      %3213 = vst [vmem:[#allocation2] sm:$0x8] %v3212
      %vm3214 = vcmask 516096
      %vm3215 = vsmask.f32 256
      %vm3216 = vmand %vm3214, %vm3215
      %v3217 = vld [vmem:[#allocation2 + $0x4] sm:$0x1]
      %v3218 = vsel %vm3216, 0, %v3217
      %3219 = vst [vmem:[#allocation2 + $0x4] sm:$0x1] %v3218
      %vm3220 = vcmask 517120
      %vm3221 = vsmask.f32 1282
      %vm3222 = vmand %vm3220, %vm3221
      %v3223 = vld [vmem:[#allocation2 + $0xc] sm:$0x3]
      %v3224 = vsel %vm3222, 0, %v3223
      %3225 = vst [vmem:[#allocation2 + $0xc] sm:$0x3] %v3224
      %vm3226 = vcmask 518145
      %vm3227 = vsmask.f32 2310
      %vm3228 = vmand %vm3226, %vm3227
      %v3229 = vld [vmem:[#allocation2 + $0x14] sm:$0x6]
      %v3230 = vsel %vm3228, 0, %v3229
      %3231 = vst [vmem:[#allocation2 + $0x14] sm:$0x6] %v3230
      %vm3232 = vcmask 519170
      %vm3233 = vsmask.f32 3338
      %vm3234 = vmand %vm3232, %vm3233
      %v3235 = vld [vmem:[#allocation2 + $0x1c] sm:$0xc]
      %v3236 = vsel %vm3234, 0, %v3235
      %3237 = vst [vmem:[#allocation2 + $0x1c] sm:$0xc] %v3236
      %v3238 = vld [vmem:[#allocation2 + $0x24] sm:$0x8]
      %v3239 = vsel %vm3210, 0, %v3238
      %3240 = vst [vmem:[#allocation2 + $0x24] sm:$0x8] %v3239
      %v3241 = vld [vmem:[#allocation2 + $0x28] sm:$0x1]
      %v3242 = vsel %vm3216, 0, %v3241
      %3243 = vst [vmem:[#allocation2 + $0x28] sm:$0x1] %v3242
      %v3244 = vld [vmem:[#allocation2 + $0x30] sm:$0x3]
      %v3245 = vsel %vm3222, 0, %v3244
      %3246 = vst [vmem:[#allocation2 + $0x30] sm:$0x3] %v3245
      %v3247 = vld [vmem:[#allocation2 + $0x38] sm:$0x6]
      %v3248 = vsel %vm3228, 0, %v3247
      %3249 = vst [vmem:[#allocation2 + $0x38] sm:$0x6] %v3248
      %v3250 = vld [vmem:[#allocation2 + $0x40] sm:$0xc]
      %v3251 = vsel %vm3234, 0, %v3250
      %3252 = vst [vmem:[#allocation2 + $0x40] sm:$0xc] %v3251
      %v3253 = vld [vmem:[#allocation2 + $0x48] sm:$0x8]
      %v3254 = vsel %vm3210, 0, %v3253
      %3255 = vst [vmem:[#allocation2 + $0x48] sm:$0x8] %v3254
      %v3256 = vld [vmem:[#allocation2 + $0x4c] sm:$0x1]
      %v3257 = vsel %vm3216, 0, %v3256
      %3258 = vst [vmem:[#allocation2 + $0x4c] sm:$0x1] %v3257
      %v3259 = vld [vmem:[#allocation2 + $0x54] sm:$0x3]
      %v3260 = vsel %vm3222, 0, %v3259
      %3261 = vst [vmem:[#allocation2 + $0x54] sm:$0x3] %v3260
      %v3262 = vld [vmem:[#allocation2 + $0x5c] sm:$0x6]
      %v3263 = vsel %vm3228, 0, %v3262
      %3264 = vst [vmem:[#allocation2 + $0x5c] sm:$0x6] %v3263
      %p3265 = scmp.eq.s32.totalorder %s21, 0
      // Predicated region
      $region41: #{up_forward.1} parent=39 // pred_check
        %p3266 = pneg %p3265
      $region42: #{up_forward.1} parent=39 // pred_check_branch
        %3268 = sbr.rel (%p3266) target = $region44
      $region43: #{up_forward.1} parent=39 // pred_region
        %3269 = vst.msk [vmem:[#allocation2 + $0x4] sm:$0xf] %vm3183, 0
        %3270 = vst.msk [vmem:[#allocation2 + $0x8] sm:$0xf] %vm3183, 0
        %vm3271 = vcmask 516096
        %3272 = vst.msk [vmem:[#allocation2 + $0xc] sm:$0x1] %vm3271, 0
      $region44: #{up_forward.1} parent=39 // pred_fallthru
        _
      %p3273 = scmp.eq.s32.totalorder %s21, 1
      // Predicated region
      $region45: #{up_forward.1} parent=39 // pred_check
        %p3274 = pneg %p3273
      $region46: #{up_forward.1} parent=39 // pred_check_branch
        %3276 = sbr.rel (%p3274) target = $region48
      $region47: #{up_forward.1} parent=39 // pred_region
        %vm3277 = vcmask 519169
        %3278 = vst.msk [vmem:[#allocation2 + $0x54] sm:$0xe] %vm3277, 0
        %3279 = vst.msk [vmem:[#allocation2 + $0x58] sm:$0xf] %vm3183, 0
        %3280 = vst.msk [vmem:[#allocation2 + $0x5c] sm:$0x3] %vm3206, 0
      $region48: #{up_forward.1} parent=39 // pred_fallthru
        _
      %v3281 = vld [vmem:[#allocation2] sm:$0x8]
      %v3282 = vld [vmem:[#allocation2 + $0x4] sm:$0xf]
      %v3283 = vld [vmem:[#allocation2 + $0x8] sm:$0xf]
      %v3284 = vld [vmem:[#allocation2 + $0xc] sm:$0xf]
      %v3285 = vld [vmem:[#allocation2 + $0x10] sm:$0xf]
      %v3286 = vld [vmem:[#allocation2 + $0x14] sm:$0xf]
      %v3287 = vld [vmem:[#allocation2 + $0x18] sm:$0xf]
      %v3288 = vld [vmem:[#allocation2 + $0x1c] sm:$0xf]
      %v3289 = vld [vmem:[#allocation2 + $0x20] sm:$0xf]
      %v3290 = vld [vmem:[#allocation2 + $0x24] sm:$0xf]
      %v3291 = vld [vmem:[#allocation2 + $0x28] sm:$0xf]
      %v3292 = vld [vmem:[#allocation2 + $0x2c] sm:$0xf]
      %v3293 = vld [vmem:[#allocation2 + $0x30] sm:$0xf]
      %v3294 = vld [vmem:[#allocation2 + $0x34] sm:$0xf]
      %v3295 = vld [vmem:[#allocation2 + $0x38] sm:$0xf]
      %v3296 = vld [vmem:[#allocation2 + $0x3c] sm:$0xf]
      %v3297 = vld [vmem:[#allocation2 + $0x40] sm:$0xf]
      %v3298 = vld [vmem:[#allocation2 + $0x44] sm:$0xf]
      %v3299 = vld [vmem:[#allocation2 + $0x48] sm:$0xf]
      %v3300 = vld [vmem:[%s3] sm:$0xf]
      %v3301 = vld [vmem:[%s3 + $0x4] sm:$0xf]
      %v3302 = vld [vmem:[%s3 + $0x8] sm:$0xf]
      %v3303 = vld [vmem:[%s3 + $0xc] sm:$0xf]
      %v3304 = vld [vmem:[%s3 + $0x10] sm:$0xf]
      %v3305 = vld [vmem:[%s3 + $0x14] sm:$0xf]
      %v3306 = vld [vmem:[%s3 + $0x18] sm:$0xf]
      %v3307 = vld [vmem:[%s3 + $0x1c] sm:$0xf]
      %v3308 = vld [vmem:[%s3 + $0x20] sm:$0xf]
      %v3309 = vld [vmem:[%s3 + $0x24] sm:$0xf]
      %v3310 = vld [vmem:[%s3 + $0x28] sm:$0xf]
      %v3311 = vld [vmem:[%s3 + $0x2c] sm:$0xf]
      %v3312 = vld [vmem:[%s3 + $0x30] sm:$0xf]
      %v3313 = vld [vmem:[%s3 + $0x34] sm:$0xf]
      %v3314 = vld [vmem:[%s3 + $0x38] sm:$0xf]
      %v3315 = vld [vmem:[%s3 + $0x3c] sm:$0xf]
      %v3334 = vunpack.c.l.b16 %v3282
      %v3335 = vunpack.c.l.b16 %v3283
      %v3336 = vunpack.c.l.b16 %v3284
      %v3337 = vunpack.c.l.b16 %v3285
      %v3338 = vunpack.c.l.b16 %v3286
      %v3339 = vunpack.c.l.b16 %v3287
      %v3340 = vunpack.c.l.b16 %v3288
      %v3341 = vunpack.c.l.b16 %v3289
      %v3342 = vunpack.c.l.b16 %v3290
      %v3343 = vunpack.c.l.b16 %v3291
      %v3344 = vunpack.c.l.b16 %v3292
      %v3345 = vunpack.c.l.b16 %v3293
      %v3346 = vunpack.c.l.b16 %v3294
      %v3347 = vunpack.c.l.b16 %v3295
      %v3348 = vunpack.c.l.b16 %v3296
      %v3349 = vunpack.c.l.b16 %v3297
      %v3350 = vunpack.c.l.b16 %v3298
      %v3351 = vunpack.c.l.b16 %v3299
      %v3352 = vpack.c.b16 %v3335, %v3334
      %v3353 = vpack.c.b16 %v3337, %v3336
      %v3354 = vpack.c.b16 %v3339, %v3338
      %v3355 = vpack.c.b16 %v3341, %v3340
      %v3356 = vpack.c.b16 %v3343, %v3342
      %v3357 = vpack.c.b16 %v3345, %v3344
      %v3358 = vpack.c.b16 %v3347, %v3346
      %v3359 = vpack.c.b16 %v3349, %v3348
      %v3360 = vpack.c.b16 %v3351, %v3350
      %v3369 = vunpack.c.l.b16 %v3308
      %v3370 = vunpack.c.l.b16 %v3309
      %v3371 = vunpack.c.l.b16 %v3310
      %v3372 = vunpack.c.l.b16 %v3311
      %v3373 = vunpack.c.l.b16 %v3312
      %v3374 = vunpack.c.l.b16 %v3313
      %v3375 = vunpack.c.l.b16 %v3314
      %v3376 = vunpack.c.l.b16 %v3315
      %v3377 = vpack.c.b16 %v3370, %v3369
      %v3378 = vpack.c.b16 %v3372, %v3371
      %v3379 = vpack.c.b16 %v3374, %v3373
      %v3380 = vpack.c.b16 %v3376, %v3375
      %vm3385 = vcmask 523264
      %v3387 = vsel %vm3385, %v3352, 0
      %v3390 = vsel %vm3385, %v3353, 0
      %v3393 = vsel %vm3385, %v3354, 0
      %v3396 = vsel %vm3385, %v3355, 0
      %v3399 = vsel %vm3385, %v3356, 0
      %v3402 = vsel %vm3385, %v3357, 0
      %v3405 = vsel %vm3385, %v3358, 0
      %v3408 = vsel %vm3385, %v3359, 0
      %v3411 = vsel %vm3385, %v3360, 0
      %3413 = vmatprep.subr.bf16.mxu0 0
      %3414 = vmatpush1.bf16.msra.mxu0 %v3377
      %3415 = vmatprep.subr.bf16.mxu0 0
      %3416 = vmatpush1.bf16.msra.mxu0 %v3378
      %3417 = vmatprep.subr.bf16.mxu0 0
      %3418 = vmatpush1.bf16.msra.mxu0 %v3379
      %3419 = vmatprep.subr.bf16.mxu0 0
      %3420 = vmatpush1.bf16.msra.mxu0 %v3380
      %3421 = vmatprep.subr.bf16.mxu0 0
      %3422 = vmatpush1.bf16.msra.mxu0 0
      %3423 = vmatprep.subr.bf16.mxu0 0
      %3424 = vmatpush1.bf16.msra.mxu0 0
      %3425 = vmatprep.subr.bf16.mxu0 0
      %3426 = vmatpush1.bf16.msra.mxu0 0
      %3427 = vmatprep.subr.bf16.mxu0 0
      %3428 = vmatpush1.bf16.msra.mxu0 0
      %3429 = vmatprep.subr.bf16.mxu0 0
      %3430 = vmatpush1.bf16.msra.mxu0 0
      %3431 = vmatprep.subr.bf16.mxu0 0
      %3432 = vmatpush1.bf16.msra.mxu0 0
      %3433 = vmatprep.subr.bf16.mxu0 0
      %3434 = vmatpush1.bf16.msra.mxu0 0
      %3435 = vmatprep.subr.bf16.mxu0 0
      %3436 = vmatpush1.bf16.msra.mxu0 0
      %3437 = vmatprep.subr.bf16.mxu0 0
      %3438 = vmatpush1.bf16.msra.mxu0 0
      %3439 = vmatprep.subr.bf16.mxu0 0
      %3440 = vmatpush1.bf16.msra.mxu0 0
      %3441 = vmatprep.subr.bf16.mxu0 0
      %3442 = vmatpush1.bf16.msra.mxu0 0
      %3443 = vmatprep.subr.bf16.mxu0 0
      %3444 = vmatpush1.bf16.msra.mxu0 0
      %3445 = vmatprep.mubr.bf16.mxu0 0
      %3446 = vmatmul.mubr.bf16.gmra.mrb[0].mxu0 %v3387
      %v3447 = vpop.f32.mrb[0].mxu0
      %v3448 = vadd.f32 0.0, %v3447
      %v3449 = vpop.f32.mrb[0].mxu0
      %v3450 = vpop.f32.mrb[0].mxu0
      %v3451 = vadd.f32 0.0, %v3450
      %v3452 = vpop.f32.mrb[0].mxu0
      %3453 = vmatprep.mubr.bf16.mxu0 0
      %3454 = vmatmul.mubr.bf16.gmra.mrb[0].mxu0 %v3390
      %v3455 = vpop.f32.mrb[0].mxu0
      %v3456 = vadd.f32 0.0, %v3455
      %v3457 = vpop.f32.mrb[0].mxu0
      %v3458 = vpop.f32.mrb[0].mxu0
      %v3459 = vadd.f32 0.0, %v3458
      %v3460 = vpop.f32.mrb[0].mxu0
      %3461 = vmatprep.mubr.bf16.mxu0 0
      %3462 = vmatmul.mubr.bf16.gmra.mrb[0].mxu0 %v3393
      %v3463 = vpop.f32.mrb[0].mxu0
      %v3464 = vadd.f32 0.0, %v3463
      %v3465 = vpop.f32.mrb[0].mxu0
      %v3466 = vpop.f32.mrb[0].mxu0
      %v3467 = vadd.f32 0.0, %v3466
      %v3468 = vpop.f32.mrb[0].mxu0
      %3469 = vmatprep.mubr.bf16.mxu0 0
      %3470 = vmatmul.mubr.bf16.gmra.mrb[0].mxu0 %v3396
      %v3471 = vpop.f32.mrb[0].mxu0
      %v3472 = vadd.f32 0.0, %v3471
      %v3473 = vpop.f32.mrb[0].mxu0
      %v3474 = vpop.f32.mrb[0].mxu0
      %v3475 = vadd.f32 0.0, %v3474
      %v3476 = vpop.f32.mrb[0].mxu0
      %3477 = vmatprep.mubr.bf16.mxu0 0
      %3478 = vmatmul.mubr.bf16.gmra.mrb[0].mxu0 %v3399
      %v3479 = vpop.f32.mrb[0].mxu0
      %v3480 = vadd.f32 0.0, %v3479
      %v3481 = vpop.f32.mrb[0].mxu0
      %v3482 = vpop.f32.mrb[0].mxu0
      %v3483 = vadd.f32 0.0, %v3482
      %v3484 = vpop.f32.mrb[0].mxu0
      %3485 = vmatprep.mubr.bf16.mxu0 0
      %3486 = vmatmul.mubr.bf16.gmra.mrb[0].mxu0 %v3402
      %v3487 = vpop.f32.mrb[0].mxu0
      %v3488 = vadd.f32 0.0, %v3487
      %v3489 = vpop.f32.mrb[0].mxu0
      %v3490 = vpop.f32.mrb[0].mxu0
      %v3491 = vadd.f32 0.0, %v3490
      %v3492 = vpop.f32.mrb[0].mxu0
      %3493 = vmatprep.mubr.bf16.mxu0 0
      %3494 = vmatmul.mubr.bf16.gmra.mrb[0].mxu0 %v3405
      %v3495 = vpop.f32.mrb[0].mxu0
      %v3496 = vadd.f32 0.0, %v3495
      %v3497 = vpop.f32.mrb[0].mxu0
      %v3498 = vpop.f32.mrb[0].mxu0
      %v3499 = vadd.f32 0.0, %v3498
      %v3500 = vpop.f32.mrb[0].mxu0
      %3501 = vmatprep.mubr.bf16.mxu0 0
      %3502 = vmatmul.mubr.bf16.gmra.mrb[0].mxu0 %v3408
      %v3503 = vpop.f32.mrb[0].mxu0
      %v3504 = vadd.f32 0.0, %v3503
      %v3505 = vpop.f32.mrb[0].mxu0
      %v3506 = vpop.f32.mrb[0].mxu0
      %v3507 = vadd.f32 0.0, %v3506
      %v3508 = vpop.f32.mrb[0].mxu0
      %3509 = vmatprep.mubr.bf16.mxu0 0
      %3510 = vmatmul.mubr.bf16.gmra.mrb[0].mxu0 %v3411
      %v3511 = vpop.f32.mrb[0].mxu0
      %v3512 = vadd.f32 0.0, %v3511
      %v3513 = vpop.f32.mrb[0].mxu0
      %v3514 = vpop.f32.mrb[0].mxu0
      %v3515 = vadd.f32 0.0, %v3514
      %v3516 = vpop.f32.mrb[0].mxu0
      %3517 = vdwg.mxu0
      %v3519 = vunpack.c.l.b16 %v3281
      %v3520 = vpack.c.b16 %v3334, %v3519
      %v3521 = vpack.c.b16 %v3336, %v3335
      %v3522 = vpack.c.b16 %v3338, %v3337
      %v3523 = vpack.c.b16 %v3340, %v3339
      %v3524 = vpack.c.b16 %v3342, %v3341
      %v3525 = vpack.c.b16 %v3344, %v3343
      %v3526 = vpack.c.b16 %v3346, %v3345
      %v3527 = vpack.c.b16 %v3348, %v3347
      %v3528 = vpack.c.b16 %v3350, %v3349
      %v3529 = vpack.c.b16 %v3351, %v3351
      %vm3530 = vsmask.f32 4352
      %v3532 = vshrl.u32 %v3520, 16
      %v3534 = vrot.slane %v3532, 3
      %v3535 = vshll.u32 %v3520, 16
      %v3537 = vrot.slane %v3535, 4
      %v3538 = vor.u32 %v3534, %v3537
      %v3540 = vshrl.u32 %v3521, 16
      %v3542 = vrot.slane %v3540, 3
      %v3543 = vshll.u32 %v3521, 16
      %v3545 = vrot.slane %v3543, 4
      %v3546 = vor.u32 %v3542, %v3545
      %v3547 = vsel %vm3530, %v3538, %v3546
      %v3549 = vshrl.u32 %v3522, 16
      %v3551 = vrot.slane %v3549, 3
      %v3552 = vshll.u32 %v3522, 16
      %v3554 = vrot.slane %v3552, 4
      %v3555 = vor.u32 %v3551, %v3554
      %v3556 = vsel %vm3530, %v3546, %v3555
      %v3558 = vshrl.u32 %v3523, 16
      %v3560 = vrot.slane %v3558, 3
      %v3561 = vshll.u32 %v3523, 16
      %v3563 = vrot.slane %v3561, 4
      %v3564 = vor.u32 %v3560, %v3563
      %v3565 = vsel %vm3530, %v3555, %v3564
      %v3567 = vshrl.u32 %v3524, 16
      %v3569 = vrot.slane %v3567, 3
      %v3570 = vshll.u32 %v3524, 16
      %v3572 = vrot.slane %v3570, 4
      %v3573 = vor.u32 %v3569, %v3572
      %v3574 = vsel %vm3530, %v3564, %v3573
      %v3576 = vshrl.u32 %v3525, 16
      %v3578 = vrot.slane %v3576, 3
      %v3579 = vshll.u32 %v3525, 16
      %v3581 = vrot.slane %v3579, 4
      %v3582 = vor.u32 %v3578, %v3581
      %v3583 = vsel %vm3530, %v3573, %v3582
      %v3585 = vshrl.u32 %v3526, 16
      %v3587 = vrot.slane %v3585, 3
      %v3588 = vshll.u32 %v3526, 16
      %v3590 = vrot.slane %v3588, 4
      %v3591 = vor.u32 %v3587, %v3590
      %v3592 = vsel %vm3530, %v3582, %v3591
      %v3594 = vshrl.u32 %v3527, 16
      %v3596 = vrot.slane %v3594, 3
      %v3597 = vshll.u32 %v3527, 16
      %v3599 = vrot.slane %v3597, 4
      %v3600 = vor.u32 %v3596, %v3599
      %v3601 = vsel %vm3530, %v3591, %v3600
      %v3603 = vshrl.u32 %v3528, 16
      %v3605 = vrot.slane %v3603, 3
      %v3606 = vshll.u32 %v3528, 16
      %v3608 = vrot.slane %v3606, 4
      %v3609 = vor.u32 %v3605, %v3608
      %v3610 = vsel %vm3530, %v3600, %v3609
      %v3612 = vshrl.u32 %v3529, 16
      %v3614 = vrot.slane %v3612, 3
      %v3615 = vshll.u32 %v3529, 16
      %v3617 = vrot.slane %v3615, 4
      %v3618 = vor.u32 %v3614, %v3617
      %v3619 = vsel %vm3530, %v3609, %v3618
      %v3628 = vunpack.c.l.b16 %v3300
      %v3629 = vunpack.c.l.b16 %v3301
      %v3630 = vunpack.c.l.b16 %v3302
      %v3631 = vunpack.c.l.b16 %v3303
      %v3632 = vunpack.c.l.b16 %v3304
      %v3633 = vunpack.c.l.b16 %v3305
      %v3634 = vunpack.c.l.b16 %v3306
      %v3635 = vunpack.c.l.b16 %v3307
      %v3636 = vpack.c.b16 %v3629, %v3628
      %v3637 = vpack.c.b16 %v3631, %v3630
      %v3638 = vpack.c.b16 %v3633, %v3632
      %v3639 = vpack.c.b16 %v3635, %v3634
      %v3645 = vsel %vm3385, %v3547, 0
      %v3648 = vsel %vm3385, %v3556, 0
      %v3651 = vsel %vm3385, %v3565, 0
      %v3654 = vsel %vm3385, %v3574, 0
      %v3657 = vsel %vm3385, %v3583, 0
      %v3660 = vsel %vm3385, %v3592, 0
      %v3663 = vsel %vm3385, %v3601, 0
      %v3666 = vsel %vm3385, %v3610, 0
      %v3669 = vsel %vm3385, %v3619, 0
      %3671 = vmatprep.subr.bf16.mxu0 0
      %3672 = vmatpush1.bf16.msra.mxu0 %v3636
      %3673 = vmatprep.subr.bf16.mxu0 0
      %3674 = vmatpush1.bf16.msra.mxu0 %v3637
      %3675 = vmatprep.subr.bf16.mxu0 0
      %3676 = vmatpush1.bf16.msra.mxu0 %v3638
      %3677 = vmatprep.subr.bf16.mxu0 0
      %3678 = vmatpush1.bf16.msra.mxu0 %v3639
      %3679 = vmatprep.subr.bf16.mxu0 0
      %3680 = vmatpush1.bf16.msra.mxu0 0
      %3681 = vmatprep.subr.bf16.mxu0 0
      %3682 = vmatpush1.bf16.msra.mxu0 0
      %3683 = vmatprep.subr.bf16.mxu0 0
      %3684 = vmatpush1.bf16.msra.mxu0 0
      %3685 = vmatprep.subr.bf16.mxu0 0
      %3686 = vmatpush1.bf16.msra.mxu0 0
      %3687 = vmatprep.subr.bf16.mxu0 0
      %3688 = vmatpush1.bf16.msra.mxu0 0
      %3689 = vmatprep.subr.bf16.mxu0 0
      %3690 = vmatpush1.bf16.msra.mxu0 0
      %3691 = vmatprep.subr.bf16.mxu0 0
      %3692 = vmatpush1.bf16.msra.mxu0 0
      %3693 = vmatprep.subr.bf16.mxu0 0
      %3694 = vmatpush1.bf16.msra.mxu0 0
      %3695 = vmatprep.subr.bf16.mxu0 0
      %3696 = vmatpush1.bf16.msra.mxu0 0
      %3697 = vmatprep.subr.bf16.mxu0 0
      %3698 = vmatpush1.bf16.msra.mxu0 0
      %3699 = vmatprep.subr.bf16.mxu0 0
      %3700 = vmatpush1.bf16.msra.mxu0 0
      %3701 = vmatprep.subr.bf16.mxu0 0
      %3702 = vmatpush1.bf16.msra.mxu0 0
      %3703 = vmatprep.mubr.bf16.mxu0 0
      %3704 = vmatmul.mubr.bf16.gmra.mrb[0].mxu0 %v3645
      %v3705 = vpop.f32.mrb[0].mxu0
      %v3706 = vadd.f32 %v3448, %v3705
      %v3707 = vpop.f32.mrb[0].mxu0
      %v3708 = vpop.f32.mrb[0].mxu0
      %v3709 = vadd.f32 %v3451, %v3708
      %v3710 = vpop.f32.mrb[0].mxu0
      %3711 = vmatprep.mubr.bf16.mxu0 0
      %3712 = vmatmul.mubr.bf16.gmra.mrb[0].mxu0 %v3648
      %v3713 = vpop.f32.mrb[0].mxu0
      %v3714 = vadd.f32 %v3456, %v3713
      %v3715 = vpop.f32.mrb[0].mxu0
      %v3716 = vpop.f32.mrb[0].mxu0
      %v3717 = vadd.f32 %v3459, %v3716
      %v3718 = vpop.f32.mrb[0].mxu0
      %3719 = vmatprep.mubr.bf16.mxu0 0
      %3720 = vmatmul.mubr.bf16.gmra.mrb[0].mxu0 %v3651
      %v3721 = vpop.f32.mrb[0].mxu0
      %v3722 = vadd.f32 %v3464, %v3721
      %v3723 = vpop.f32.mrb[0].mxu0
      %v3724 = vpop.f32.mrb[0].mxu0
      %v3725 = vadd.f32 %v3467, %v3724
      %v3726 = vpop.f32.mrb[0].mxu0
      %3727 = vmatprep.mubr.bf16.mxu0 0
      %3728 = vmatmul.mubr.bf16.gmra.mrb[0].mxu0 %v3654
      %v3729 = vpop.f32.mrb[0].mxu0
      %v3730 = vadd.f32 %v3472, %v3729
      %v3731 = vpop.f32.mrb[0].mxu0
      %v3732 = vpop.f32.mrb[0].mxu0
      %v3733 = vadd.f32 %v3475, %v3732
      %v3734 = vpop.f32.mrb[0].mxu0
      %3735 = vmatprep.mubr.bf16.mxu0 0
      %3736 = vmatmul.mubr.bf16.gmra.mrb[0].mxu0 %v3657
      %v3737 = vpop.f32.mrb[0].mxu0
      %v3738 = vadd.f32 %v3480, %v3737
      %v3739 = vpop.f32.mrb[0].mxu0
      %v3740 = vpop.f32.mrb[0].mxu0
      %v3741 = vadd.f32 %v3483, %v3740
      %v3742 = vpop.f32.mrb[0].mxu0
      %3743 = vmatprep.mubr.bf16.mxu0 0
      %3744 = vmatmul.mubr.bf16.gmra.mrb[0].mxu0 %v3660
      %v3745 = vpop.f32.mrb[0].mxu0
      %v3746 = vadd.f32 %v3488, %v3745
      %v3747 = vpop.f32.mrb[0].mxu0
      %v3748 = vpop.f32.mrb[0].mxu0
      %v3749 = vadd.f32 %v3491, %v3748
      %v3750 = vpop.f32.mrb[0].mxu0
      %3751 = vmatprep.mubr.bf16.mxu0 0
      %3752 = vmatmul.mubr.bf16.gmra.mrb[0].mxu0 %v3663
      %v3753 = vpop.f32.mrb[0].mxu0
      %v3754 = vadd.f32 %v3496, %v3753
      %v3755 = vpop.f32.mrb[0].mxu0
      %v3756 = vpop.f32.mrb[0].mxu0
      %v3757 = vadd.f32 %v3499, %v3756
      %v3758 = vpop.f32.mrb[0].mxu0
      %3759 = vmatprep.mubr.bf16.mxu0 0
      %3760 = vmatmul.mubr.bf16.gmra.mrb[0].mxu0 %v3666
      %v3761 = vpop.f32.mrb[0].mxu0
      %v3762 = vadd.f32 %v3504, %v3761
      %v3763 = vpop.f32.mrb[0].mxu0
      %v3764 = vpop.f32.mrb[0].mxu0
      %v3765 = vadd.f32 %v3507, %v3764
      %v3766 = vpop.f32.mrb[0].mxu0
      %3767 = vmatprep.mubr.bf16.mxu0 0
      %3768 = vmatmul.mubr.bf16.gmra.mrb[0].mxu0 %v3669
      %v3769 = vpop.f32.mrb[0].mxu0
      %v3770 = vadd.f32 %v3512, %v3769
      %v3771 = vpop.f32.mrb[0].mxu0
      %v3772 = vpop.f32.mrb[0].mxu0
      %v3773 = vadd.f32 %v3515, %v3772
      %v3774 = vpop.f32.mrb[0].mxu0
      %3775 = vdwg.mxu0
      %v3776 = vld [vmem:[#allocation2 + $0x4] sm:$0xf]
      %v3777 = vld [vmem:[#allocation2 + $0x8] sm:$0xf]
      %v3778 = vld [vmem:[#allocation2 + $0xc] sm:$0xf]
      %v3779 = vld [vmem:[#allocation2 + $0x10] sm:$0xf]
      %v3780 = vld [vmem:[#allocation2 + $0x14] sm:$0xf]
      %v3781 = vld [vmem:[#allocation2 + $0x18] sm:$0xf]
      %v3782 = vld [vmem:[#allocation2 + $0x1c] sm:$0xf]
      %v3783 = vld [vmem:[#allocation2 + $0x20] sm:$0xf]
      %v3784 = vld [vmem:[#allocation2 + $0x24] sm:$0xf]
      %v3785 = vld [vmem:[#allocation2 + $0x28] sm:$0xf]
      %v3786 = vld [vmem:[#allocation2 + $0x2c] sm:$0xf]
      %v3787 = vld [vmem:[#allocation2 + $0x30] sm:$0xf]
      %v3788 = vld [vmem:[#allocation2 + $0x34] sm:$0xf]
      %v3789 = vld [vmem:[#allocation2 + $0x38] sm:$0xf]
      %v3790 = vld [vmem:[#allocation2 + $0x3c] sm:$0xf]
      %v3791 = vld [vmem:[#allocation2 + $0x40] sm:$0xf]
      %v3792 = vld [vmem:[#allocation2 + $0x44] sm:$0xf]
      %v3793 = vld [vmem:[#allocation2 + $0x48] sm:$0xf]
      %v3794 = vld [vmem:[#allocation2 + $0x4c] sm:$0x1]
      %v3795 = vld [vmem:[%s3 + $0x40] sm:$0xf]
      %v3796 = vld [vmem:[%s3 + $0x44] sm:$0xf]
      %v3797 = vld [vmem:[%s3 + $0x48] sm:$0xf]
      %v3798 = vld [vmem:[%s3 + $0x4c] sm:$0xf]
      %v3799 = vld [vmem:[%s3 + $0x50] sm:$0xf]
      %v3800 = vld [vmem:[%s3 + $0x54] sm:$0xf]
      %v3801 = vld [vmem:[%s3 + $0x58] sm:$0xf]
      %v3802 = vld [vmem:[%s3 + $0x5c] sm:$0xf]
      %v3822 = vunpack.c.l.b16 %v3776
      %v3823 = vunpack.c.l.b16 %v3777
      %v3824 = vunpack.c.l.b16 %v3778
      %v3825 = vunpack.c.l.b16 %v3779
      %v3826 = vunpack.c.l.b16 %v3780
      %v3827 = vunpack.c.l.b16 %v3781
      %v3828 = vunpack.c.l.b16 %v3782
      %v3829 = vunpack.c.l.b16 %v3783
      %v3830 = vunpack.c.l.b16 %v3784
      %v3831 = vunpack.c.l.b16 %v3785
      %v3832 = vunpack.c.l.b16 %v3786
      %v3833 = vunpack.c.l.b16 %v3787
      %v3834 = vunpack.c.l.b16 %v3788
      %v3835 = vunpack.c.l.b16 %v3789
      %v3836 = vunpack.c.l.b16 %v3790
      %v3837 = vunpack.c.l.b16 %v3791
      %v3838 = vunpack.c.l.b16 %v3792
      %v3839 = vunpack.c.l.b16 %v3793
      %v3840 = vunpack.c.l.b16 %v3794
      %v3841 = vpack.c.b16 %v3823, %v3822
      %v3842 = vpack.c.b16 %v3825, %v3824
      %v3843 = vpack.c.b16 %v3827, %v3826
      %v3844 = vpack.c.b16 %v3829, %v3828
      %v3845 = vpack.c.b16 %v3831, %v3830
      %v3846 = vpack.c.b16 %v3833, %v3832
      %v3847 = vpack.c.b16 %v3835, %v3834
      %v3848 = vpack.c.b16 %v3837, %v3836
      %v3849 = vpack.c.b16 %v3839, %v3838
      %v3850 = vpack.c.b16 %v3840, %v3840
      %v3852 = vshrl.u32 %v3841, 16
      %v3854 = vshll.u32 %v3841, 16
      %v3856 = vrot.slane %v3854, 1
      %v3857 = vor.u32 %v3852, %v3856
      %v3859 = vshll.u32 %v3842, 16
      %v3861 = vrot.slane %v3859, 1
      %v3862 = vsel %vm377, %v3857, %v3861
      %v3863 = vshrl.u32 %v3842, 16
      %v3865 = vor.u32 %v3863, %v3861
      %v3867 = vshll.u32 %v3843, 16
      %v3869 = vrot.slane %v3867, 1
      %v3870 = vsel %vm377, %v3865, %v3869
      %v3871 = vshrl.u32 %v3843, 16
      %v3873 = vor.u32 %v3871, %v3869
      %v3875 = vshll.u32 %v3844, 16
      %v3877 = vrot.slane %v3875, 1
      %v3878 = vsel %vm377, %v3873, %v3877
      %v3879 = vshrl.u32 %v3844, 16
      %v3881 = vor.u32 %v3879, %v3877
      %v3883 = vshll.u32 %v3845, 16
      %v3885 = vrot.slane %v3883, 1
      %v3886 = vsel %vm377, %v3881, %v3885
      %v3887 = vshrl.u32 %v3845, 16
      %v3889 = vor.u32 %v3887, %v3885
      %v3891 = vshll.u32 %v3846, 16
      %v3893 = vrot.slane %v3891, 1
      %v3894 = vsel %vm377, %v3889, %v3893
      %v3895 = vshrl.u32 %v3846, 16
      %v3897 = vor.u32 %v3895, %v3893
      %v3899 = vshll.u32 %v3847, 16
      %v3901 = vrot.slane %v3899, 1
      %v3902 = vsel %vm377, %v3897, %v3901
      %v3903 = vshrl.u32 %v3847, 16
      %v3905 = vor.u32 %v3903, %v3901
      %v3907 = vshll.u32 %v3848, 16
      %v3909 = vrot.slane %v3907, 1
      %v3910 = vsel %vm377, %v3905, %v3909
      %v3911 = vshrl.u32 %v3848, 16
      %v3913 = vor.u32 %v3911, %v3909
      %v3915 = vshll.u32 %v3849, 16
      %v3917 = vrot.slane %v3915, 1
      %v3918 = vsel %vm377, %v3913, %v3917
      %v3919 = vshrl.u32 %v3849, 16
      %v3921 = vor.u32 %v3919, %v3917
      %v3923 = vshll.u32 %v3850, 16
      %v3925 = vrot.slane %v3923, 1
      %v3926 = vsel %vm377, %v3921, %v3925
      %v3935 = vunpack.c.l.b16 %v3795
      %v3936 = vunpack.c.l.b16 %v3796
      %v3937 = vunpack.c.l.b16 %v3797
      %v3938 = vunpack.c.l.b16 %v3798
      %v3939 = vunpack.c.l.b16 %v3799
      %v3940 = vunpack.c.l.b16 %v3800
      %v3941 = vunpack.c.l.b16 %v3801
      %v3942 = vunpack.c.l.b16 %v3802
      %v3943 = vpack.c.b16 %v3936, %v3935
      %v3944 = vpack.c.b16 %v3938, %v3937
      %v3945 = vpack.c.b16 %v3940, %v3939
      %v3946 = vpack.c.b16 %v3942, %v3941
      %v3952 = vsel %vm3385, %v3862, 0
      %v3955 = vsel %vm3385, %v3870, 0
      %v3958 = vsel %vm3385, %v3878, 0
      %v3961 = vsel %vm3385, %v3886, 0
      %v3964 = vsel %vm3385, %v3894, 0
      %v3967 = vsel %vm3385, %v3902, 0
      %v3970 = vsel %vm3385, %v3910, 0
      %v3973 = vsel %vm3385, %v3918, 0
      %v3976 = vsel %vm3385, %v3926, 0
      %3978 = vmatprep.subr.bf16.mxu0 0
      %3979 = vmatpush1.bf16.msra.mxu0 %v3943
      %3980 = vmatprep.subr.bf16.mxu0 0
      %3981 = vmatpush1.bf16.msra.mxu0 %v3944
      %3982 = vmatprep.subr.bf16.mxu0 0
      %3983 = vmatpush1.bf16.msra.mxu0 %v3945
      %3984 = vmatprep.subr.bf16.mxu0 0
      %3985 = vmatpush1.bf16.msra.mxu0 %v3946
      %3986 = vmatprep.subr.bf16.mxu0 0
      %3987 = vmatpush1.bf16.msra.mxu0 0
      %3988 = vmatprep.subr.bf16.mxu0 0
      %3989 = vmatpush1.bf16.msra.mxu0 0
      %3990 = vmatprep.subr.bf16.mxu0 0
      %3991 = vmatpush1.bf16.msra.mxu0 0
      %3992 = vmatprep.subr.bf16.mxu0 0
      %3993 = vmatpush1.bf16.msra.mxu0 0
      %3994 = vmatprep.subr.bf16.mxu0 0
      %3995 = vmatpush1.bf16.msra.mxu0 0
      %3996 = vmatprep.subr.bf16.mxu0 0
      %3997 = vmatpush1.bf16.msra.mxu0 0
      %3998 = vmatprep.subr.bf16.mxu0 0
      %3999 = vmatpush1.bf16.msra.mxu0 0
      %4000 = vmatprep.subr.bf16.mxu0 0
      %4001 = vmatpush1.bf16.msra.mxu0 0
      %4002 = vmatprep.subr.bf16.mxu0 0
      %4003 = vmatpush1.bf16.msra.mxu0 0
      %4004 = vmatprep.subr.bf16.mxu0 0
      %4005 = vmatpush1.bf16.msra.mxu0 0
      %4006 = vmatprep.subr.bf16.mxu0 0
      %4007 = vmatpush1.bf16.msra.mxu0 0
      %4008 = vmatprep.subr.bf16.mxu0 0
      %4009 = vmatpush1.bf16.msra.mxu0 0
      %4010 = vmatprep.mubr.bf16.mxu0 0
      %4011 = vmatmul.mubr.bf16.gmra.mrb[0].mxu0 %v3952
      %v4012 = vpop.f32.mrb[0].mxu0
      %v4013 = vadd.f32 0.0, %v4012
      %v4014 = vpop.f32.mrb[0].mxu0
      %v4015 = vpop.f32.mrb[0].mxu0
      %v4016 = vadd.f32 0.0, %v4015
      %v4017 = vpop.f32.mrb[0].mxu0
      %4018 = vmatprep.mubr.bf16.mxu0 0
      %4019 = vmatmul.mubr.bf16.gmra.mrb[0].mxu0 %v3955
      %v4020 = vpop.f32.mrb[0].mxu0
      %v4021 = vadd.f32 0.0, %v4020
      %v4022 = vpop.f32.mrb[0].mxu0
      %v4023 = vpop.f32.mrb[0].mxu0
      %v4024 = vadd.f32 0.0, %v4023
      %v4025 = vpop.f32.mrb[0].mxu0
      %4026 = vmatprep.mubr.bf16.mxu0 0
      %4027 = vmatmul.mubr.bf16.gmra.mrb[0].mxu0 %v3958
      %v4028 = vpop.f32.mrb[0].mxu0
      %v4029 = vadd.f32 0.0, %v4028
      %v4030 = vpop.f32.mrb[0].mxu0
      %v4031 = vpop.f32.mrb[0].mxu0
      %v4032 = vadd.f32 0.0, %v4031
      %v4033 = vpop.f32.mrb[0].mxu0
      %4034 = vmatprep.mubr.bf16.mxu0 0
      %4035 = vmatmul.mubr.bf16.gmra.mrb[0].mxu0 %v3961
      %v4036 = vpop.f32.mrb[0].mxu0
      %v4037 = vadd.f32 0.0, %v4036
      %v4038 = vpop.f32.mrb[0].mxu0
      %v4039 = vpop.f32.mrb[0].mxu0
      %v4040 = vadd.f32 0.0, %v4039
      %v4041 = vpop.f32.mrb[0].mxu0
      %4042 = vmatprep.mubr.bf16.mxu0 0
      %4043 = vmatmul.mubr.bf16.gmra.mrb[0].mxu0 %v3964
      %v4044 = vpop.f32.mrb[0].mxu0
      %v4045 = vadd.f32 0.0, %v4044
      %v4046 = vpop.f32.mrb[0].mxu0
      %v4047 = vpop.f32.mrb[0].mxu0
      %v4048 = vadd.f32 0.0, %v4047
      %v4049 = vpop.f32.mrb[0].mxu0
      %4050 = vmatprep.mubr.bf16.mxu0 0
      %4051 = vmatmul.mubr.bf16.gmra.mrb[0].mxu0 %v3967
      %v4052 = vpop.f32.mrb[0].mxu0
      %v4053 = vadd.f32 0.0, %v4052
      %v4054 = vpop.f32.mrb[0].mxu0
      %v4055 = vpop.f32.mrb[0].mxu0
      %v4056 = vadd.f32 0.0, %v4055
      %v4057 = vpop.f32.mrb[0].mxu0
      %4058 = vmatprep.mubr.bf16.mxu0 0
      %4059 = vmatmul.mubr.bf16.gmra.mrb[0].mxu0 %v3970
      %v4060 = vpop.f32.mrb[0].mxu0
      %v4061 = vadd.f32 0.0, %v4060
      %v4062 = vpop.f32.mrb[0].mxu0
      %v4063 = vpop.f32.mrb[0].mxu0
      %v4064 = vadd.f32 0.0, %v4063
      %v4065 = vpop.f32.mrb[0].mxu0
      %4066 = vmatprep.mubr.bf16.mxu0 0
      %4067 = vmatmul.mubr.bf16.gmra.mrb[0].mxu0 %v3973
      %v4068 = vpop.f32.mrb[0].mxu0
      %v4069 = vadd.f32 0.0, %v4068
      %v4070 = vpop.f32.mrb[0].mxu0
      %v4071 = vpop.f32.mrb[0].mxu0
      %v4072 = vadd.f32 0.0, %v4071
      %v4073 = vpop.f32.mrb[0].mxu0
      %4074 = vmatprep.mubr.bf16.mxu0 0
      %4075 = vmatmul.mubr.bf16.gmra.mrb[0].mxu0 %v3976
      %v4076 = vpop.f32.mrb[0].mxu0
      %v4077 = vadd.f32 0.0, %v4076
      %v4078 = vpop.f32.mrb[0].mxu0
      %v4079 = vpop.f32.mrb[0].mxu0
      %v4080 = vadd.f32 0.0, %v4079
      %v4081 = vpop.f32.mrb[0].mxu0
      %4082 = vdwg.mxu0
      %v4083 = vadd.f32 %v3706, %v4013
      %v4084 = vadd.f32 %v3709, %v4016
      %v4085 = vadd.f32 %v3714, %v4021
      %v4086 = vadd.f32 %v3717, %v4024
      %v4087 = vadd.f32 %v3722, %v4029
      %v4088 = vadd.f32 %v3725, %v4032
      %v4089 = vadd.f32 %v3730, %v4037
      %v4090 = vadd.f32 %v3733, %v4040
      %v4091 = vadd.f32 %v3738, %v4045
      %v4092 = vadd.f32 %v3741, %v4048
      %v4093 = vadd.f32 %v3746, %v4053
      %v4094 = vadd.f32 %v3749, %v4056
      %v4095 = vadd.f32 %v3754, %v4061
      %v4096 = vadd.f32 %v3757, %v4064
      %v4097 = vadd.f32 %v3762, %v4069
      %v4098 = vadd.f32 %v3765, %v4072
      %v4099 = vadd.f32 %v3770, %v4077
      %v4100 = vadd.f32 %v3773, %v4080
      %v4101 = vld [vmem:[#allocation2 + $0xc] sm:$0xf]
      %v4102 = vld [vmem:[#allocation2 + $0x10] sm:$0xf]
      %v4103 = vld [vmem:[#allocation2 + $0x14] sm:$0xf]
      %v4104 = vld [vmem:[#allocation2 + $0x18] sm:$0xf]
      %v4105 = vld [vmem:[#allocation2 + $0x1c] sm:$0xf]
      %v4106 = vld [vmem:[#allocation2 + $0x20] sm:$0xf]
      %v4107 = vld [vmem:[#allocation2 + $0x24] sm:$0xf]
      %v4108 = vld [vmem:[#allocation2 + $0x28] sm:$0xf]
      %v4109 = vld [vmem:[#allocation2 + $0x2c] sm:$0xf]
      %v4110 = vld [vmem:[#allocation2 + $0x30] sm:$0xf]
      %v4111 = vld [vmem:[#allocation2 + $0x34] sm:$0xf]
      %v4112 = vld [vmem:[#allocation2 + $0x38] sm:$0xf]
      %v4113 = vld [vmem:[#allocation2 + $0x3c] sm:$0xf]
      %v4114 = vld [vmem:[#allocation2 + $0x40] sm:$0xf]
      %v4115 = vld [vmem:[#allocation2 + $0x44] sm:$0xf]
      %v4116 = vld [vmem:[#allocation2 + $0x48] sm:$0xf]
      %v4117 = vld [vmem:[#allocation2 + $0x4c] sm:$0xf]
      %v4118 = vld [vmem:[#allocation2 + $0x50] sm:$0xf]
      %v4119 = vld [vmem:[#allocation2 + $0x54] sm:$0x1]
      %v4120 = vld [vmem:[%s3 + $0x60] sm:$0xf]
      %v4121 = vld [vmem:[%s3 + $0x64] sm:$0xf]
      %v4122 = vld [vmem:[%s3 + $0x68] sm:$0xf]
      %v4123 = vld [vmem:[%s3 + $0x6c] sm:$0xf]
      %v4124 = vld [vmem:[%s3 + $0x70] sm:$0xf]
      %v4125 = vld [vmem:[%s3 + $0x74] sm:$0xf]
      %v4126 = vld [vmem:[%s3 + $0x78] sm:$0xf]
      %v4127 = vld [vmem:[%s3 + $0x7c] sm:$0xf]
      %v4147 = vunpack.c.l.b16 %v4101
      %v4148 = vunpack.c.l.b16 %v4102
      %v4149 = vunpack.c.l.b16 %v4103
      %v4150 = vunpack.c.l.b16 %v4104
      %v4151 = vunpack.c.l.b16 %v4105
      %v4152 = vunpack.c.l.b16 %v4106
      %v4153 = vunpack.c.l.b16 %v4107
      %v4154 = vunpack.c.l.b16 %v4108
      %v4155 = vunpack.c.l.b16 %v4109
      %v4156 = vunpack.c.l.b16 %v4110
      %v4157 = vunpack.c.l.b16 %v4111
      %v4158 = vunpack.c.l.b16 %v4112
      %v4159 = vunpack.c.l.b16 %v4113
      %v4160 = vunpack.c.l.b16 %v4114
      %v4161 = vunpack.c.l.b16 %v4115
      %v4162 = vunpack.c.l.b16 %v4116
      %v4163 = vunpack.c.l.b16 %v4117
      %v4164 = vunpack.c.l.b16 %v4118
      %v4165 = vunpack.c.l.b16 %v4119
      %v4166 = vpack.c.b16 %v4148, %v4147
      %v4167 = vpack.c.b16 %v4150, %v4149
      %v4168 = vpack.c.b16 %v4152, %v4151
      %v4169 = vpack.c.b16 %v4154, %v4153
      %v4170 = vpack.c.b16 %v4156, %v4155
      %v4171 = vpack.c.b16 %v4158, %v4157
      %v4172 = vpack.c.b16 %v4160, %v4159
      %v4173 = vpack.c.b16 %v4162, %v4161
      %v4174 = vpack.c.b16 %v4164, %v4163
      %v4175 = vpack.c.b16 %v4165, %v4165
      %v4177 = vshrl.u32 %v4166, 16
      %v4179 = vshll.u32 %v4166, 16
      %v4181 = vrot.slane %v4179, 1
      %v4182 = vor.u32 %v4177, %v4181
      %v4184 = vshll.u32 %v4167, 16
      %v4186 = vrot.slane %v4184, 1
      %v4187 = vsel %vm377, %v4182, %v4186
      %v4188 = vshrl.u32 %v4167, 16
      %v4190 = vor.u32 %v4188, %v4186
      %v4192 = vshll.u32 %v4168, 16
      %v4194 = vrot.slane %v4192, 1
      %v4195 = vsel %vm377, %v4190, %v4194
      %v4196 = vshrl.u32 %v4168, 16
      %v4198 = vor.u32 %v4196, %v4194
      %v4200 = vshll.u32 %v4169, 16
      %v4202 = vrot.slane %v4200, 1
      %v4203 = vsel %vm377, %v4198, %v4202
      %v4204 = vshrl.u32 %v4169, 16
      %v4206 = vor.u32 %v4204, %v4202
      %v4208 = vshll.u32 %v4170, 16
      %v4210 = vrot.slane %v4208, 1
      %v4211 = vsel %vm377, %v4206, %v4210
      %v4212 = vshrl.u32 %v4170, 16
      %v4214 = vor.u32 %v4212, %v4210
      %v4216 = vshll.u32 %v4171, 16
      %v4218 = vrot.slane %v4216, 1
      %v4219 = vsel %vm377, %v4214, %v4218
      %v4220 = vshrl.u32 %v4171, 16
      %v4222 = vor.u32 %v4220, %v4218
      %v4224 = vshll.u32 %v4172, 16
      %v4226 = vrot.slane %v4224, 1
      %v4227 = vsel %vm377, %v4222, %v4226
      %v4228 = vshrl.u32 %v4172, 16
      %v4230 = vor.u32 %v4228, %v4226
      %v4232 = vshll.u32 %v4173, 16
      %v4234 = vrot.slane %v4232, 1
      %v4235 = vsel %vm377, %v4230, %v4234
      %v4236 = vshrl.u32 %v4173, 16
      %v4238 = vor.u32 %v4236, %v4234
      %v4240 = vshll.u32 %v4174, 16
      %v4242 = vrot.slane %v4240, 1
      %v4243 = vsel %vm377, %v4238, %v4242
      %v4244 = vshrl.u32 %v4174, 16
      %v4246 = vor.u32 %v4244, %v4242
      %v4248 = vshll.u32 %v4175, 16
      %v4250 = vrot.slane %v4248, 1
      %v4251 = vsel %vm377, %v4246, %v4250
      %v4260 = vunpack.c.l.b16 %v4120
      %v4261 = vunpack.c.l.b16 %v4121
      %v4262 = vunpack.c.l.b16 %v4122
      %v4263 = vunpack.c.l.b16 %v4123
      %v4264 = vunpack.c.l.b16 %v4124
      %v4265 = vunpack.c.l.b16 %v4125
      %v4266 = vunpack.c.l.b16 %v4126
      %v4267 = vunpack.c.l.b16 %v4127
      %v4268 = vpack.c.b16 %v4261, %v4260
      %v4269 = vpack.c.b16 %v4263, %v4262
      %v4270 = vpack.c.b16 %v4265, %v4264
      %v4271 = vpack.c.b16 %v4267, %v4266
      %v4277 = vsel %vm3385, %v4187, 0
      %v4280 = vsel %vm3385, %v4195, 0
      %v4283 = vsel %vm3385, %v4203, 0
      %v4286 = vsel %vm3385, %v4211, 0
      %v4289 = vsel %vm3385, %v4219, 0
      %v4292 = vsel %vm3385, %v4227, 0
      %v4295 = vsel %vm3385, %v4235, 0
      %v4298 = vsel %vm3385, %v4243, 0
      %v4301 = vsel %vm3385, %v4251, 0
      %4303 = vmatprep.subr.bf16.mxu0 0
      %4304 = vmatpush1.bf16.msra.mxu0 %v4268
      %4305 = vmatprep.subr.bf16.mxu0 0
      %4306 = vmatpush1.bf16.msra.mxu0 %v4269
      %4307 = vmatprep.subr.bf16.mxu0 0
      %4308 = vmatpush1.bf16.msra.mxu0 %v4270
      %4309 = vmatprep.subr.bf16.mxu0 0
      %4310 = vmatpush1.bf16.msra.mxu0 %v4271
      %4311 = vmatprep.subr.bf16.mxu0 0
      %4312 = vmatpush1.bf16.msra.mxu0 0
      %4313 = vmatprep.subr.bf16.mxu0 0
      %4314 = vmatpush1.bf16.msra.mxu0 0
      %4315 = vmatprep.subr.bf16.mxu0 0
      %4316 = vmatpush1.bf16.msra.mxu0 0
      %4317 = vmatprep.subr.bf16.mxu0 0
      %4318 = vmatpush1.bf16.msra.mxu0 0
      %4319 = vmatprep.subr.bf16.mxu0 0
      %4320 = vmatpush1.bf16.msra.mxu0 0
      %4321 = vmatprep.subr.bf16.mxu0 0
      %4322 = vmatpush1.bf16.msra.mxu0 0
      %4323 = vmatprep.subr.bf16.mxu0 0
      %4324 = vmatpush1.bf16.msra.mxu0 0
      %4325 = vmatprep.subr.bf16.mxu0 0
      %4326 = vmatpush1.bf16.msra.mxu0 0
      %4327 = vmatprep.subr.bf16.mxu0 0
      %4328 = vmatpush1.bf16.msra.mxu0 0
      %4329 = vmatprep.subr.bf16.mxu0 0
      %4330 = vmatpush1.bf16.msra.mxu0 0
      %4331 = vmatprep.subr.bf16.mxu0 0
      %4332 = vmatpush1.bf16.msra.mxu0 0
      %4333 = vmatprep.subr.bf16.mxu0 0
      %4334 = vmatpush1.bf16.msra.mxu0 0
      %4335 = vmatprep.mubr.bf16.mxu0 0
      %4336 = vmatmul.mubr.bf16.gmra.mrb[0].mxu0 %v4277
      %v4337 = vpop.f32.mrb[0].mxu0
      %v4338 = vadd.f32 0.0, %v4337
      %v4339 = vpop.f32.mrb[0].mxu0
      %v4340 = vpop.f32.mrb[0].mxu0
      %v4341 = vadd.f32 0.0, %v4340
      %v4342 = vpop.f32.mrb[0].mxu0
      %4343 = vmatprep.mubr.bf16.mxu0 0
      %4344 = vmatmul.mubr.bf16.gmra.mrb[0].mxu0 %v4280
      %v4345 = vpop.f32.mrb[0].mxu0
      %v4346 = vadd.f32 0.0, %v4345
      %v4347 = vpop.f32.mrb[0].mxu0
      %v4348 = vpop.f32.mrb[0].mxu0
      %v4349 = vadd.f32 0.0, %v4348
      %v4350 = vpop.f32.mrb[0].mxu0
      %4351 = vmatprep.mubr.bf16.mxu0 0
      %4352 = vmatmul.mubr.bf16.gmra.mrb[0].mxu0 %v4283
      %v4353 = vpop.f32.mrb[0].mxu0
      %v4354 = vadd.f32 0.0, %v4353
      %v4355 = vpop.f32.mrb[0].mxu0
      %v4356 = vpop.f32.mrb[0].mxu0
      %v4357 = vadd.f32 0.0, %v4356
      %v4358 = vpop.f32.mrb[0].mxu0
      %4359 = vmatprep.mubr.bf16.mxu0 0
      %4360 = vmatmul.mubr.bf16.gmra.mrb[0].mxu0 %v4286
      %v4361 = vpop.f32.mrb[0].mxu0
      %v4362 = vadd.f32 0.0, %v4361
      %v4363 = vpop.f32.mrb[0].mxu0
      %v4364 = vpop.f32.mrb[0].mxu0
      %v4365 = vadd.f32 0.0, %v4364
      %v4366 = vpop.f32.mrb[0].mxu0
      %4367 = vmatprep.mubr.bf16.mxu0 0
      %4368 = vmatmul.mubr.bf16.gmra.mrb[0].mxu0 %v4289
      %v4369 = vpop.f32.mrb[0].mxu0
      %v4370 = vadd.f32 0.0, %v4369
      %v4371 = vpop.f32.mrb[0].mxu0
      %v4372 = vpop.f32.mrb[0].mxu0
      %v4373 = vadd.f32 0.0, %v4372
      %v4374 = vpop.f32.mrb[0].mxu0
      %4375 = vmatprep.mubr.bf16.mxu0 0
      %4376 = vmatmul.mubr.bf16.gmra.mrb[0].mxu0 %v4292
      %v4377 = vpop.f32.mrb[0].mxu0
      %v4378 = vadd.f32 0.0, %v4377
      %v4379 = vpop.f32.mrb[0].mxu0
      %v4380 = vpop.f32.mrb[0].mxu0
      %v4381 = vadd.f32 0.0, %v4380
      %v4382 = vpop.f32.mrb[0].mxu0
      %4383 = vmatprep.mubr.bf16.mxu0 0
      %4384 = vmatmul.mubr.bf16.gmra.mrb[0].mxu0 %v4295
      %v4385 = vpop.f32.mrb[0].mxu0
      %v4386 = vadd.f32 0.0, %v4385
      %v4387 = vpop.f32.mrb[0].mxu0
      %v4388 = vpop.f32.mrb[0].mxu0
      %v4389 = vadd.f32 0.0, %v4388
      %v4390 = vpop.f32.mrb[0].mxu0
      %4391 = vmatprep.mubr.bf16.mxu0 0
      %4392 = vmatmul.mubr.bf16.gmra.mrb[0].mxu0 %v4298
      %v4393 = vpop.f32.mrb[0].mxu0
      %v4394 = vadd.f32 0.0, %v4393
      %v4395 = vpop.f32.mrb[0].mxu0
      %v4396 = vpop.f32.mrb[0].mxu0
      %v4397 = vadd.f32 0.0, %v4396
      %v4398 = vpop.f32.mrb[0].mxu0
      %4399 = vmatprep.mubr.bf16.mxu0 0
      %4400 = vmatmul.mubr.bf16.gmra.mrb[0].mxu0 %v4301
      %v4401 = vpop.f32.mrb[0].mxu0
      %v4402 = vadd.f32 0.0, %v4401
      %v4403 = vpop.f32.mrb[0].mxu0
      %v4404 = vpop.f32.mrb[0].mxu0
      %v4405 = vadd.f32 0.0, %v4404
      %v4406 = vpop.f32.mrb[0].mxu0
      %4407 = vdwg.mxu0
      %v4408 = vadd.f32 %v4083, %v4338
      %v4409 = vadd.f32 %v4084, %v4341
      %v4410 = vadd.f32 %v4085, %v4346
      %v4411 = vadd.f32 %v4086, %v4349
      %v4412 = vadd.f32 %v4087, %v4354
      %v4413 = vadd.f32 %v4088, %v4357
      %v4414 = vadd.f32 %v4089, %v4362
      %v4415 = vadd.f32 %v4090, %v4365
      %v4416 = vadd.f32 %v4091, %v4370
      %v4417 = vadd.f32 %v4092, %v4373
      %v4418 = vadd.f32 %v4093, %v4378
      %v4419 = vadd.f32 %v4094, %v4381
      %v4420 = vadd.f32 %v4095, %v4386
      %v4421 = vadd.f32 %v4096, %v4389
      %v4422 = vadd.f32 %v4097, %v4394
      %v4423 = vadd.f32 %v4098, %v4397
      %v4424 = vadd.f32 %v4099, %v4402
      %v4425 = vadd.f32 %v4100, %v4405
      %v4426 = vld [vmem:[#allocation2 + $0xc] sm:$0xe]
      %v4427 = vld [vmem:[%s3 + $0x80] sm:$0xf]
      %v4428 = vld [vmem:[%s3 + $0x84] sm:$0xf]
      %v4429 = vld [vmem:[%s3 + $0x88] sm:$0xf]
      %v4430 = vld [vmem:[%s3 + $0x8c] sm:$0xf]
      %v4431 = vld [vmem:[%s3 + $0x90] sm:$0xf]
      %v4432 = vld [vmem:[%s3 + $0x94] sm:$0xf]
      %v4433 = vld [vmem:[%s3 + $0x98] sm:$0xf]
      %v4434 = vld [vmem:[%s3 + $0x9c] sm:$0xf]
      %v4436 = vunpack.c.l.b16 %v4426
      %v4437 = vpack.c.b16 %v4148, %v4436
      %v4438 = vrot.slane %v4437, 1
      %v4439 = vrot.slane %v4167, 1
      %v4440 = vsel %vm872, %v4438, %v4439
      %v4441 = vrot.slane %v4168, 1
      %v4442 = vsel %vm872, %v4439, %v4441
      %v4443 = vrot.slane %v4169, 1
      %v4444 = vsel %vm872, %v4441, %v4443
      %v4445 = vrot.slane %v4170, 1
      %v4446 = vsel %vm872, %v4443, %v4445
      %v4447 = vrot.slane %v4171, 1
      %v4448 = vsel %vm872, %v4445, %v4447
      %v4449 = vrot.slane %v4172, 1
      %v4450 = vsel %vm872, %v4447, %v4449
      %v4451 = vrot.slane %v4173, 1
      %v4452 = vsel %vm872, %v4449, %v4451
      %v4453 = vrot.slane %v4174, 1
      %v4454 = vsel %vm872, %v4451, %v4453
      %v4455 = vrot.slane %v4175, 1
      %v4456 = vsel %vm872, %v4453, %v4455
      %v4465 = vunpack.c.l.b16 %v4427
      %v4466 = vunpack.c.l.b16 %v4428
      %v4467 = vunpack.c.l.b16 %v4429
      %v4468 = vunpack.c.l.b16 %v4430
      %v4469 = vunpack.c.l.b16 %v4431
      %v4470 = vunpack.c.l.b16 %v4432
      %v4471 = vunpack.c.l.b16 %v4433
      %v4472 = vunpack.c.l.b16 %v4434
      %v4473 = vpack.c.b16 %v4466, %v4465
      %v4474 = vpack.c.b16 %v4468, %v4467
      %v4475 = vpack.c.b16 %v4470, %v4469
      %v4476 = vpack.c.b16 %v4472, %v4471
      %v4482 = vsel %vm3385, %v4440, 0
      %v4485 = vsel %vm3385, %v4442, 0
      %v4488 = vsel %vm3385, %v4444, 0
      %v4491 = vsel %vm3385, %v4446, 0
      %v4494 = vsel %vm3385, %v4448, 0
      %v4497 = vsel %vm3385, %v4450, 0
      %v4500 = vsel %vm3385, %v4452, 0
      %v4503 = vsel %vm3385, %v4454, 0
      %v4506 = vsel %vm3385, %v4456, 0
      %4508 = vmatprep.subr.bf16.mxu0 0
      %4509 = vmatpush1.bf16.msra.mxu0 %v4473
      %4510 = vmatprep.subr.bf16.mxu0 0
      %4511 = vmatpush1.bf16.msra.mxu0 %v4474
      %4512 = vmatprep.subr.bf16.mxu0 0
      %4513 = vmatpush1.bf16.msra.mxu0 %v4475
      %4514 = vmatprep.subr.bf16.mxu0 0
      %4515 = vmatpush1.bf16.msra.mxu0 %v4476
      %4516 = vmatprep.subr.bf16.mxu0 0
      %4517 = vmatpush1.bf16.msra.mxu0 0
      %4518 = vmatprep.subr.bf16.mxu0 0
      %4519 = vmatpush1.bf16.msra.mxu0 0
      %4520 = vmatprep.subr.bf16.mxu0 0
      %4521 = vmatpush1.bf16.msra.mxu0 0
      %4522 = vmatprep.subr.bf16.mxu0 0
      %4523 = vmatpush1.bf16.msra.mxu0 0
      %4524 = vmatprep.subr.bf16.mxu0 0
      %4525 = vmatpush1.bf16.msra.mxu0 0
      %4526 = vmatprep.subr.bf16.mxu0 0
      %4527 = vmatpush1.bf16.msra.mxu0 0
      %4528 = vmatprep.subr.bf16.mxu0 0
      %4529 = vmatpush1.bf16.msra.mxu0 0
      %4530 = vmatprep.subr.bf16.mxu0 0
      %4531 = vmatpush1.bf16.msra.mxu0 0
      %4532 = vmatprep.subr.bf16.mxu0 0
      %4533 = vmatpush1.bf16.msra.mxu0 0
      %4534 = vmatprep.subr.bf16.mxu0 0
      %4535 = vmatpush1.bf16.msra.mxu0 0
      %4536 = vmatprep.subr.bf16.mxu0 0
      %4537 = vmatpush1.bf16.msra.mxu0 0
      %4538 = vmatprep.subr.bf16.mxu0 0
      %4539 = vmatpush1.bf16.msra.mxu0 0
      %4540 = vmatprep.mubr.bf16.mxu0 0
      %4541 = vmatmul.mubr.bf16.gmra.mrb[0].mxu0 %v4482
      %v4542 = vpop.f32.mrb[0].mxu0
      %v4543 = vadd.f32 0.0, %v4542
      %v4544 = vpop.f32.mrb[0].mxu0
      %v4545 = vpop.f32.mrb[0].mxu0
      %v4546 = vadd.f32 0.0, %v4545
      %v4547 = vpop.f32.mrb[0].mxu0
      %4548 = vmatprep.mubr.bf16.mxu0 0
      %4549 = vmatmul.mubr.bf16.gmra.mrb[0].mxu0 %v4485
      %v4550 = vpop.f32.mrb[0].mxu0
      %v4551 = vadd.f32 0.0, %v4550
      %v4552 = vpop.f32.mrb[0].mxu0
      %v4553 = vpop.f32.mrb[0].mxu0
      %v4554 = vadd.f32 0.0, %v4553
      %v4555 = vpop.f32.mrb[0].mxu0
      %4556 = vmatprep.mubr.bf16.mxu0 0
      %4557 = vmatmul.mubr.bf16.gmra.mrb[0].mxu0 %v4488
      %v4558 = vpop.f32.mrb[0].mxu0
      %v4559 = vadd.f32 0.0, %v4558
      %v4560 = vpop.f32.mrb[0].mxu0
      %v4561 = vpop.f32.mrb[0].mxu0
      %v4562 = vadd.f32 0.0, %v4561
      %v4563 = vpop.f32.mrb[0].mxu0
      %4564 = vmatprep.mubr.bf16.mxu0 0
      %4565 = vmatmul.mubr.bf16.gmra.mrb[0].mxu0 %v4491
      %v4566 = vpop.f32.mrb[0].mxu0
      %v4567 = vadd.f32 0.0, %v4566
      %v4568 = vpop.f32.mrb[0].mxu0
      %v4569 = vpop.f32.mrb[0].mxu0
      %v4570 = vadd.f32 0.0, %v4569
      %v4571 = vpop.f32.mrb[0].mxu0
      %4572 = vmatprep.mubr.bf16.mxu0 0
      %4573 = vmatmul.mubr.bf16.gmra.mrb[0].mxu0 %v4494
      %v4574 = vpop.f32.mrb[0].mxu0
      %v4575 = vadd.f32 0.0, %v4574
      %v4576 = vpop.f32.mrb[0].mxu0
      %v4577 = vpop.f32.mrb[0].mxu0
      %v4578 = vadd.f32 0.0, %v4577
      %v4579 = vpop.f32.mrb[0].mxu0
      %4580 = vmatprep.mubr.bf16.mxu0 0
      %4581 = vmatmul.mubr.bf16.gmra.mrb[0].mxu0 %v4497
      %v4582 = vpop.f32.mrb[0].mxu0
      %v4583 = vadd.f32 0.0, %v4582
      %v4584 = vpop.f32.mrb[0].mxu0
      %v4585 = vpop.f32.mrb[0].mxu0
      %v4586 = vadd.f32 0.0, %v4585
      %v4587 = vpop.f32.mrb[0].mxu0
      %4588 = vmatprep.mubr.bf16.mxu0 0
      %4589 = vmatmul.mubr.bf16.gmra.mrb[0].mxu0 %v4500
      %v4590 = vpop.f32.mrb[0].mxu0
      %v4591 = vadd.f32 0.0, %v4590
      %v4592 = vpop.f32.mrb[0].mxu0
      %v4593 = vpop.f32.mrb[0].mxu0
      %v4594 = vadd.f32 0.0, %v4593
      %v4595 = vpop.f32.mrb[0].mxu0
      %4596 = vmatprep.mubr.bf16.mxu0 0
      %4597 = vmatmul.mubr.bf16.gmra.mrb[0].mxu0 %v4503
      %v4598 = vpop.f32.mrb[0].mxu0
      %v4599 = vadd.f32 0.0, %v4598
      %v4600 = vpop.f32.mrb[0].mxu0
      %v4601 = vpop.f32.mrb[0].mxu0
      %v4602 = vadd.f32 0.0, %v4601
      %v4603 = vpop.f32.mrb[0].mxu0
      %4604 = vmatprep.mubr.bf16.mxu0 0
      %4605 = vmatmul.mubr.bf16.gmra.mrb[0].mxu0 %v4506
      %v4606 = vpop.f32.mrb[0].mxu0
      %v4607 = vadd.f32 0.0, %v4606
      %v4608 = vpop.f32.mrb[0].mxu0
      %v4609 = vpop.f32.mrb[0].mxu0
      %v4610 = vadd.f32 0.0, %v4609
      %v4611 = vpop.f32.mrb[0].mxu0
      %4612 = vdwg.mxu0
      %v4613 = vadd.f32 %v4408, %v4543
      %v4614 = vadd.f32 %v4409, %v4546
      %v4615 = vadd.f32 %v4410, %v4551
      %v4616 = vadd.f32 %v4411, %v4554
      %v4617 = vadd.f32 %v4412, %v4559
      %v4618 = vadd.f32 %v4413, %v4562
      %v4619 = vadd.f32 %v4414, %v4567
      %v4620 = vadd.f32 %v4415, %v4570
      %v4621 = vadd.f32 %v4416, %v4575
      %v4622 = vadd.f32 %v4417, %v4578
      %v4623 = vadd.f32 %v4418, %v4583
      %v4624 = vadd.f32 %v4419, %v4586
      %v4625 = vadd.f32 %v4420, %v4591
      %v4626 = vadd.f32 %v4421, %v4594
      %v4627 = vadd.f32 %v4422, %v4599
      %v4628 = vadd.f32 %v4423, %v4602
      %v4629 = vadd.f32 %v4424, %v4607
      %v4630 = vadd.f32 %v4425, %v4610
      %v4631 = vld [vmem:[#allocation2 + $0x54] sm:$0x3]
      %v4632 = vld [vmem:[%s3 + $0xa0] sm:$0xf]
      %v4633 = vld [vmem:[%s3 + $0xa4] sm:$0xf]
      %v4634 = vld [vmem:[%s3 + $0xa8] sm:$0xf]
      %v4635 = vld [vmem:[%s3 + $0xac] sm:$0xf]
      %v4636 = vld [vmem:[%s3 + $0xb0] sm:$0xf]
      %v4637 = vld [vmem:[%s3 + $0xb4] sm:$0xf]
      %v4638 = vld [vmem:[%s3 + $0xb8] sm:$0xf]
      %v4639 = vld [vmem:[%s3 + $0xbc] sm:$0xf]
      %v4641 = vunpack.c.l.b16 %v4631
      %v4642 = vpack.c.b16 %v4641, %v4641
      %v4644 = vshrl.u32 %v4437, 16
      %v4646 = vrot.slane %v4644, 1
      %v4647 = vshll.u32 %v4437, 16
      %v4649 = vrot.slane %v4647, 2
      %v4650 = vor.u32 %v4646, %v4649
      %v4651 = vrot.slane %v4188, 1
      %v4652 = vrot.slane %v4184, 2
      %v4653 = vor.u32 %v4651, %v4652
      %v4654 = vsel %vm1458, %v4650, %v4653
      %v4655 = vrot.slane %v4196, 1
      %v4656 = vrot.slane %v4192, 2
      %v4657 = vor.u32 %v4655, %v4656
      %v4658 = vsel %vm1458, %v4653, %v4657
      %v4659 = vrot.slane %v4204, 1
      %v4660 = vrot.slane %v4200, 2
      %v4661 = vor.u32 %v4659, %v4660
      %v4662 = vsel %vm1458, %v4657, %v4661
      %v4663 = vrot.slane %v4212, 1
      %v4664 = vrot.slane %v4208, 2
      %v4665 = vor.u32 %v4663, %v4664
      %v4666 = vsel %vm1458, %v4661, %v4665
      %v4667 = vrot.slane %v4220, 1
      %v4668 = vrot.slane %v4216, 2
      %v4669 = vor.u32 %v4667, %v4668
      %v4670 = vsel %vm1458, %v4665, %v4669
      %v4671 = vrot.slane %v4228, 1
      %v4672 = vrot.slane %v4224, 2
      %v4673 = vor.u32 %v4671, %v4672
      %v4674 = vsel %vm1458, %v4669, %v4673
      %v4675 = vrot.slane %v4236, 1
      %v4676 = vrot.slane %v4232, 2
      %v4677 = vor.u32 %v4675, %v4676
      %v4678 = vsel %vm1458, %v4673, %v4677
      %v4679 = vrot.slane %v4244, 1
      %v4680 = vrot.slane %v4240, 2
      %v4681 = vor.u32 %v4679, %v4680
      %v4682 = vsel %vm1458, %v4677, %v4681
      %v4684 = vshrl.u32 %v4642, 16
      %v4686 = vrot.slane %v4684, 1
      %v4687 = vshll.u32 %v4642, 16
      %v4689 = vrot.slane %v4687, 2
      %v4690 = vor.u32 %v4686, %v4689
      %v4691 = vsel %vm1458, %v4681, %v4690
      %v4700 = vunpack.c.l.b16 %v4632
      %v4701 = vunpack.c.l.b16 %v4633
      %v4702 = vunpack.c.l.b16 %v4634
      %v4703 = vunpack.c.l.b16 %v4635
      %v4704 = vunpack.c.l.b16 %v4636
      %v4705 = vunpack.c.l.b16 %v4637
      %v4706 = vunpack.c.l.b16 %v4638
      %v4707 = vunpack.c.l.b16 %v4639
      %v4708 = vpack.c.b16 %v4701, %v4700
      %v4709 = vpack.c.b16 %v4703, %v4702
      %v4710 = vpack.c.b16 %v4705, %v4704
      %v4711 = vpack.c.b16 %v4707, %v4706
      %v4717 = vsel %vm3385, %v4654, 0
      %v4720 = vsel %vm3385, %v4658, 0
      %v4723 = vsel %vm3385, %v4662, 0
      %v4726 = vsel %vm3385, %v4666, 0
      %v4729 = vsel %vm3385, %v4670, 0
      %v4732 = vsel %vm3385, %v4674, 0
      %v4735 = vsel %vm3385, %v4678, 0
      %v4738 = vsel %vm3385, %v4682, 0
      %v4741 = vsel %vm3385, %v4691, 0
      %4743 = vmatprep.subr.bf16.mxu0 0
      %4744 = vmatpush1.bf16.msra.mxu0 %v4708
      %4745 = vmatprep.subr.bf16.mxu0 0
      %4746 = vmatpush1.bf16.msra.mxu0 %v4709
      %4747 = vmatprep.subr.bf16.mxu0 0
      %4748 = vmatpush1.bf16.msra.mxu0 %v4710
      %4749 = vmatprep.subr.bf16.mxu0 0
      %4750 = vmatpush1.bf16.msra.mxu0 %v4711
      %4751 = vmatprep.subr.bf16.mxu0 0
      %4752 = vmatpush1.bf16.msra.mxu0 0
      %4753 = vmatprep.subr.bf16.mxu0 0
      %4754 = vmatpush1.bf16.msra.mxu0 0
      %4755 = vmatprep.subr.bf16.mxu0 0
      %4756 = vmatpush1.bf16.msra.mxu0 0
      %4757 = vmatprep.subr.bf16.mxu0 0
      %4758 = vmatpush1.bf16.msra.mxu0 0
      %4759 = vmatprep.subr.bf16.mxu0 0
      %4760 = vmatpush1.bf16.msra.mxu0 0
      %4761 = vmatprep.subr.bf16.mxu0 0
      %4762 = vmatpush1.bf16.msra.mxu0 0
      %4763 = vmatprep.subr.bf16.mxu0 0
      %4764 = vmatpush1.bf16.msra.mxu0 0
      %4765 = vmatprep.subr.bf16.mxu0 0
      %4766 = vmatpush1.bf16.msra.mxu0 0
      %4767 = vmatprep.subr.bf16.mxu0 0
      %4768 = vmatpush1.bf16.msra.mxu0 0
      %4769 = vmatprep.subr.bf16.mxu0 0
      %4770 = vmatpush1.bf16.msra.mxu0 0
      %4771 = vmatprep.subr.bf16.mxu0 0
      %4772 = vmatpush1.bf16.msra.mxu0 0
      %4773 = vmatprep.subr.bf16.mxu0 0
      %4774 = vmatpush1.bf16.msra.mxu0 0
      %4775 = vmatprep.mubr.bf16.mxu0 0
      %4776 = vmatmul.mubr.bf16.gmra.mrb[0].mxu0 %v4717
      %v4777 = vpop.f32.mrb[0].mxu0
      %v4778 = vadd.f32 0.0, %v4777
      %v4779 = vpop.f32.mrb[0].mxu0
      %v4780 = vpop.f32.mrb[0].mxu0
      %v4781 = vadd.f32 0.0, %v4780
      %v4782 = vpop.f32.mrb[0].mxu0
      %4783 = vmatprep.mubr.bf16.mxu0 0
      %4784 = vmatmul.mubr.bf16.gmra.mrb[0].mxu0 %v4720
      %v4785 = vpop.f32.mrb[0].mxu0
      %v4786 = vadd.f32 0.0, %v4785
      %v4787 = vpop.f32.mrb[0].mxu0
      %v4788 = vpop.f32.mrb[0].mxu0
      %v4789 = vadd.f32 0.0, %v4788
      %v4790 = vpop.f32.mrb[0].mxu0
      %4791 = vmatprep.mubr.bf16.mxu0 0
      %4792 = vmatmul.mubr.bf16.gmra.mrb[0].mxu0 %v4723
      %v4793 = vpop.f32.mrb[0].mxu0
      %v4794 = vadd.f32 0.0, %v4793
      %v4795 = vpop.f32.mrb[0].mxu0
      %v4796 = vpop.f32.mrb[0].mxu0
      %v4797 = vadd.f32 0.0, %v4796
      %v4798 = vpop.f32.mrb[0].mxu0
      %4799 = vmatprep.mubr.bf16.mxu0 0
      %4800 = vmatmul.mubr.bf16.gmra.mrb[0].mxu0 %v4726
      %v4801 = vpop.f32.mrb[0].mxu0
      %v4802 = vadd.f32 0.0, %v4801
      %v4803 = vpop.f32.mrb[0].mxu0
      %v4804 = vpop.f32.mrb[0].mxu0
      %v4805 = vadd.f32 0.0, %v4804
      %v4806 = vpop.f32.mrb[0].mxu0
      %4807 = vmatprep.mubr.bf16.mxu0 0
      %4808 = vmatmul.mubr.bf16.gmra.mrb[0].mxu0 %v4729
      %v4809 = vpop.f32.mrb[0].mxu0
      %v4810 = vadd.f32 0.0, %v4809
      %v4811 = vpop.f32.mrb[0].mxu0
      %v4812 = vpop.f32.mrb[0].mxu0
      %v4813 = vadd.f32 0.0, %v4812
      %v4814 = vpop.f32.mrb[0].mxu0
      %4815 = vmatprep.mubr.bf16.mxu0 0
      %4816 = vmatmul.mubr.bf16.gmra.mrb[0].mxu0 %v4732
      %v4817 = vpop.f32.mrb[0].mxu0
      %v4818 = vadd.f32 0.0, %v4817
      %v4819 = vpop.f32.mrb[0].mxu0
      %v4820 = vpop.f32.mrb[0].mxu0
      %v4821 = vadd.f32 0.0, %v4820
      %v4822 = vpop.f32.mrb[0].mxu0
      %4823 = vmatprep.mubr.bf16.mxu0 0
      %4824 = vmatmul.mubr.bf16.gmra.mrb[0].mxu0 %v4735
      %v4825 = vpop.f32.mrb[0].mxu0
      %v4826 = vadd.f32 0.0, %v4825
      %v4827 = vpop.f32.mrb[0].mxu0
      %v4828 = vpop.f32.mrb[0].mxu0
      %v4829 = vadd.f32 0.0, %v4828
      %v4830 = vpop.f32.mrb[0].mxu0
      %4831 = vmatprep.mubr.bf16.mxu0 0
      %4832 = vmatmul.mubr.bf16.gmra.mrb[0].mxu0 %v4738
      %v4833 = vpop.f32.mrb[0].mxu0
      %v4834 = vadd.f32 0.0, %v4833
      %v4835 = vpop.f32.mrb[0].mxu0
      %v4836 = vpop.f32.mrb[0].mxu0
      %v4837 = vadd.f32 0.0, %v4836
      %v4838 = vpop.f32.mrb[0].mxu0
      %4839 = vmatprep.mubr.bf16.mxu0 0
      %4840 = vmatmul.mubr.bf16.gmra.mrb[0].mxu0 %v4741
      %v4841 = vpop.f32.mrb[0].mxu0
      %v4842 = vadd.f32 0.0, %v4841
      %v4843 = vpop.f32.mrb[0].mxu0
      %v4844 = vpop.f32.mrb[0].mxu0
      %v4845 = vadd.f32 0.0, %v4844
      %v4846 = vpop.f32.mrb[0].mxu0
      %4847 = vdwg.mxu0
      %v4848 = vadd.f32 %v4613, %v4778
      %v4849 = vadd.f32 %v4614, %v4781
      %v4850 = vadd.f32 %v4615, %v4786
      %v4851 = vadd.f32 %v4616, %v4789
      %v4852 = vadd.f32 %v4617, %v4794
      %v4853 = vadd.f32 %v4618, %v4797
      %v4854 = vadd.f32 %v4619, %v4802
      %v4855 = vadd.f32 %v4620, %v4805
      %v4856 = vadd.f32 %v4621, %v4810
      %v4857 = vadd.f32 %v4622, %v4813
      %v4858 = vadd.f32 %v4623, %v4818
      %v4859 = vadd.f32 %v4624, %v4821
      %v4860 = vadd.f32 %v4625, %v4826
      %v4861 = vadd.f32 %v4626, %v4829
      %v4862 = vadd.f32 %v4627, %v4834
      %v4863 = vadd.f32 %v4628, %v4837
      %v4864 = vadd.f32 %v4629, %v4842
      %v4865 = vadd.f32 %v4630, %v4845
      %v4866 = vld [vmem:[#allocation2 + $0x14] sm:$0xe]
      %v4867 = vld [vmem:[#allocation2 + $0x18] sm:$0xf]
      %v4868 = vld [vmem:[#allocation2 + $0x1c] sm:$0xf]
      %v4869 = vld [vmem:[#allocation2 + $0x20] sm:$0xf]
      %v4870 = vld [vmem:[#allocation2 + $0x24] sm:$0xf]
      %v4871 = vld [vmem:[#allocation2 + $0x28] sm:$0xf]
      %v4872 = vld [vmem:[#allocation2 + $0x2c] sm:$0xf]
      %v4873 = vld [vmem:[#allocation2 + $0x30] sm:$0xf]
      %v4874 = vld [vmem:[#allocation2 + $0x34] sm:$0xf]
      %v4875 = vld [vmem:[#allocation2 + $0x38] sm:$0xf]
      %v4876 = vld [vmem:[#allocation2 + $0x3c] sm:$0xf]
      %v4877 = vld [vmem:[#allocation2 + $0x40] sm:$0xf]
      %v4878 = vld [vmem:[#allocation2 + $0x44] sm:$0xf]
      %v4879 = vld [vmem:[#allocation2 + $0x48] sm:$0xf]
      %v4880 = vld [vmem:[#allocation2 + $0x4c] sm:$0xf]
      %v4881 = vld [vmem:[#allocation2 + $0x50] sm:$0xf]
      %v4882 = vld [vmem:[#allocation2 + $0x54] sm:$0xf]
      %v4883 = vld [vmem:[#allocation2 + $0x58] sm:$0xf]
      %v4884 = vld [vmem:[#allocation2 + $0x5c] sm:$0x3]
      %v4885 = vld [vmem:[%s3 + $0xc0] sm:$0xf]
      %v4886 = vld [vmem:[%s3 + $0xc4] sm:$0xf]
      %v4887 = vld [vmem:[%s3 + $0xc8] sm:$0xf]
      %v4888 = vld [vmem:[%s3 + $0xcc] sm:$0xf]
      %v4889 = vld [vmem:[%s3 + $0xd0] sm:$0xf]
      %v4890 = vld [vmem:[%s3 + $0xd4] sm:$0xf]
      %v4891 = vld [vmem:[%s3 + $0xd8] sm:$0xf]
      %v4892 = vld [vmem:[%s3 + $0xdc] sm:$0xf]
      %v4912 = vunpack.c.l.b16 %v4866
      %v4913 = vunpack.c.l.b16 %v4867
      %v4914 = vunpack.c.l.b16 %v4868
      %v4915 = vunpack.c.l.b16 %v4869
      %v4916 = vunpack.c.l.b16 %v4870
      %v4917 = vunpack.c.l.b16 %v4871
      %v4918 = vunpack.c.l.b16 %v4872
      %v4919 = vunpack.c.l.b16 %v4873
      %v4920 = vunpack.c.l.b16 %v4874
      %v4921 = vunpack.c.l.b16 %v4875
      %v4922 = vunpack.c.l.b16 %v4876
      %v4923 = vunpack.c.l.b16 %v4877
      %v4924 = vunpack.c.l.b16 %v4878
      %v4925 = vunpack.c.l.b16 %v4879
      %v4926 = vunpack.c.l.b16 %v4880
      %v4927 = vunpack.c.l.b16 %v4881
      %v4928 = vunpack.c.l.b16 %v4882
      %v4929 = vunpack.c.l.b16 %v4883
      %v4930 = vunpack.c.l.b16 %v4884
      %v4931 = vpack.c.b16 %v4913, %v4912
      %v4932 = vpack.c.b16 %v4915, %v4914
      %v4933 = vpack.c.b16 %v4917, %v4916
      %v4934 = vpack.c.b16 %v4919, %v4918
      %v4935 = vpack.c.b16 %v4921, %v4920
      %v4936 = vpack.c.b16 %v4923, %v4922
      %v4937 = vpack.c.b16 %v4925, %v4924
      %v4938 = vpack.c.b16 %v4927, %v4926
      %v4939 = vpack.c.b16 %v4929, %v4928
      %v4940 = vpack.c.b16 %v4930, %v4930
      %v4942 = vshrl.u32 %v4931, 16
      %v4944 = vrot.slane %v4942, 1
      %v4945 = vshll.u32 %v4931, 16
      %v4947 = vrot.slane %v4945, 2
      %v4948 = vor.u32 %v4944, %v4947
      %v4950 = vshrl.u32 %v4932, 16
      %v4952 = vrot.slane %v4950, 1
      %v4953 = vshll.u32 %v4932, 16
      %v4955 = vrot.slane %v4953, 2
      %v4956 = vor.u32 %v4952, %v4955
      %v4957 = vsel %vm1458, %v4948, %v4956
      %v4959 = vshrl.u32 %v4933, 16
      %v4961 = vrot.slane %v4959, 1
      %v4962 = vshll.u32 %v4933, 16
      %v4964 = vrot.slane %v4962, 2
      %v4965 = vor.u32 %v4961, %v4964
      %v4966 = vsel %vm1458, %v4956, %v4965
      %v4968 = vshrl.u32 %v4934, 16
      %v4970 = vrot.slane %v4968, 1
      %v4971 = vshll.u32 %v4934, 16
      %v4973 = vrot.slane %v4971, 2
      %v4974 = vor.u32 %v4970, %v4973
      %v4975 = vsel %vm1458, %v4965, %v4974
      %v4977 = vshrl.u32 %v4935, 16
      %v4979 = vrot.slane %v4977, 1
      %v4980 = vshll.u32 %v4935, 16
      %v4982 = vrot.slane %v4980, 2
      %v4983 = vor.u32 %v4979, %v4982
      %v4984 = vsel %vm1458, %v4974, %v4983
      %v4986 = vshrl.u32 %v4936, 16
      %v4988 = vrot.slane %v4986, 1
      %v4989 = vshll.u32 %v4936, 16
      %v4991 = vrot.slane %v4989, 2
      %v4992 = vor.u32 %v4988, %v4991
      %v4993 = vsel %vm1458, %v4983, %v4992
      %v4995 = vshrl.u32 %v4937, 16
      %v4997 = vrot.slane %v4995, 1
      %v4998 = vshll.u32 %v4937, 16
      %v5000 = vrot.slane %v4998, 2
      %v5001 = vor.u32 %v4997, %v5000
      %v5002 = vsel %vm1458, %v4992, %v5001
      %v5004 = vshrl.u32 %v4938, 16
      %v5006 = vrot.slane %v5004, 1
      %v5007 = vshll.u32 %v4938, 16
      %v5009 = vrot.slane %v5007, 2
      %v5010 = vor.u32 %v5006, %v5009
      %v5011 = vsel %vm1458, %v5001, %v5010
      %v5013 = vshrl.u32 %v4939, 16
      %v5015 = vrot.slane %v5013, 1
      %v5016 = vshll.u32 %v4939, 16
      %v5018 = vrot.slane %v5016, 2
      %v5019 = vor.u32 %v5015, %v5018
      %v5020 = vsel %vm1458, %v5010, %v5019
      %v5022 = vshrl.u32 %v4940, 16
      %v5024 = vrot.slane %v5022, 1
      %v5025 = vshll.u32 %v4940, 16
      %v5027 = vrot.slane %v5025, 2
      %v5028 = vor.u32 %v5024, %v5027
      %v5029 = vsel %vm1458, %v5019, %v5028
      %v5038 = vunpack.c.l.b16 %v4885
      %v5039 = vunpack.c.l.b16 %v4886
      %v5040 = vunpack.c.l.b16 %v4887
      %v5041 = vunpack.c.l.b16 %v4888
      %v5042 = vunpack.c.l.b16 %v4889
      %v5043 = vunpack.c.l.b16 %v4890
      %v5044 = vunpack.c.l.b16 %v4891
      %v5045 = vunpack.c.l.b16 %v4892
      %v5046 = vpack.c.b16 %v5039, %v5038
      %v5047 = vpack.c.b16 %v5041, %v5040
      %v5048 = vpack.c.b16 %v5043, %v5042
      %v5049 = vpack.c.b16 %v5045, %v5044
      %v5055 = vsel %vm3385, %v4957, 0
      %v5058 = vsel %vm3385, %v4966, 0
      %v5061 = vsel %vm3385, %v4975, 0
      %v5064 = vsel %vm3385, %v4984, 0
      %v5067 = vsel %vm3385, %v4993, 0
      %v5070 = vsel %vm3385, %v5002, 0
      %v5073 = vsel %vm3385, %v5011, 0
      %v5076 = vsel %vm3385, %v5020, 0
      %v5079 = vsel %vm3385, %v5029, 0
      %5081 = vmatprep.subr.bf16.mxu0 0
      %5082 = vmatpush1.bf16.msra.mxu0 %v5046
      %5083 = vmatprep.subr.bf16.mxu0 0
      %5084 = vmatpush1.bf16.msra.mxu0 %v5047
      %5085 = vmatprep.subr.bf16.mxu0 0
      %5086 = vmatpush1.bf16.msra.mxu0 %v5048
      %5087 = vmatprep.subr.bf16.mxu0 0
      %5088 = vmatpush1.bf16.msra.mxu0 %v5049
      %5089 = vmatprep.subr.bf16.mxu0 0
      %5090 = vmatpush1.bf16.msra.mxu0 0
      %5091 = vmatprep.subr.bf16.mxu0 0
      %5092 = vmatpush1.bf16.msra.mxu0 0
      %5093 = vmatprep.subr.bf16.mxu0 0
      %5094 = vmatpush1.bf16.msra.mxu0 0
      %5095 = vmatprep.subr.bf16.mxu0 0
      %5096 = vmatpush1.bf16.msra.mxu0 0
      %5097 = vmatprep.subr.bf16.mxu0 0
      %5098 = vmatpush1.bf16.msra.mxu0 0
      %5099 = vmatprep.subr.bf16.mxu0 0
      %5100 = vmatpush1.bf16.msra.mxu0 0
      %5101 = vmatprep.subr.bf16.mxu0 0
      %5102 = vmatpush1.bf16.msra.mxu0 0
      %5103 = vmatprep.subr.bf16.mxu0 0
      %5104 = vmatpush1.bf16.msra.mxu0 0
      %5105 = vmatprep.subr.bf16.mxu0 0
      %5106 = vmatpush1.bf16.msra.mxu0 0
      %5107 = vmatprep.subr.bf16.mxu0 0
      %5108 = vmatpush1.bf16.msra.mxu0 0
      %5109 = vmatprep.subr.bf16.mxu0 0
      %5110 = vmatpush1.bf16.msra.mxu0 0
      %5111 = vmatprep.subr.bf16.mxu0 0
      %5112 = vmatpush1.bf16.msra.mxu0 0
      %5113 = vmatprep.mubr.bf16.mxu0 0
      %5114 = vmatmul.mubr.bf16.gmra.mrb[0].mxu0 %v5055
      %v5115 = vpop.f32.mrb[0].mxu0
      %v5116 = vadd.f32 0.0, %v5115
      %v5117 = vpop.f32.mrb[0].mxu0
      %v5118 = vpop.f32.mrb[0].mxu0
      %v5119 = vadd.f32 0.0, %v5118
      %v5120 = vpop.f32.mrb[0].mxu0
      %5121 = vmatprep.mubr.bf16.mxu0 0
      %5122 = vmatmul.mubr.bf16.gmra.mrb[0].mxu0 %v5058
      %v5123 = vpop.f32.mrb[0].mxu0
      %v5124 = vadd.f32 0.0, %v5123
      %v5125 = vpop.f32.mrb[0].mxu0
      %v5126 = vpop.f32.mrb[0].mxu0
      %v5127 = vadd.f32 0.0, %v5126
      %v5128 = vpop.f32.mrb[0].mxu0
      %5129 = vmatprep.mubr.bf16.mxu0 0
      %5130 = vmatmul.mubr.bf16.gmra.mrb[0].mxu0 %v5061
      %v5131 = vpop.f32.mrb[0].mxu0
      %v5132 = vadd.f32 0.0, %v5131
      %v5133 = vpop.f32.mrb[0].mxu0
      %v5134 = vpop.f32.mrb[0].mxu0
      %v5135 = vadd.f32 0.0, %v5134
      %v5136 = vpop.f32.mrb[0].mxu0
      %5137 = vmatprep.mubr.bf16.mxu0 0
      %5138 = vmatmul.mubr.bf16.gmra.mrb[0].mxu0 %v5064
      %v5139 = vpop.f32.mrb[0].mxu0
      %v5140 = vadd.f32 0.0, %v5139
      %v5141 = vpop.f32.mrb[0].mxu0
      %v5142 = vpop.f32.mrb[0].mxu0
      %v5143 = vadd.f32 0.0, %v5142
      %v5144 = vpop.f32.mrb[0].mxu0
      %5145 = vmatprep.mubr.bf16.mxu0 0
      %5146 = vmatmul.mubr.bf16.gmra.mrb[0].mxu0 %v5067
      %v5147 = vpop.f32.mrb[0].mxu0
      %v5148 = vadd.f32 0.0, %v5147
      %v5149 = vpop.f32.mrb[0].mxu0
      %v5150 = vpop.f32.mrb[0].mxu0
      %v5151 = vadd.f32 0.0, %v5150
      %v5152 = vpop.f32.mrb[0].mxu0
      %5153 = vmatprep.mubr.bf16.mxu0 0
      %5154 = vmatmul.mubr.bf16.gmra.mrb[0].mxu0 %v5070
      %v5155 = vpop.f32.mrb[0].mxu0
      %v5156 = vadd.f32 0.0, %v5155
      %v5157 = vpop.f32.mrb[0].mxu0
      %v5158 = vpop.f32.mrb[0].mxu0
      %v5159 = vadd.f32 0.0, %v5158
      %v5160 = vpop.f32.mrb[0].mxu0
      %5161 = vmatprep.mubr.bf16.mxu0 0
      %5162 = vmatmul.mubr.bf16.gmra.mrb[0].mxu0 %v5073
      %v5163 = vpop.f32.mrb[0].mxu0
      %v5164 = vadd.f32 0.0, %v5163
      %v5165 = vpop.f32.mrb[0].mxu0
      %v5166 = vpop.f32.mrb[0].mxu0
      %v5167 = vadd.f32 0.0, %v5166
      %v5168 = vpop.f32.mrb[0].mxu0
      %5169 = vmatprep.mubr.bf16.mxu0 0
      %5170 = vmatmul.mubr.bf16.gmra.mrb[0].mxu0 %v5076
      %v5171 = vpop.f32.mrb[0].mxu0
      %v5172 = vadd.f32 0.0, %v5171
      %v5173 = vpop.f32.mrb[0].mxu0
      %v5174 = vpop.f32.mrb[0].mxu0
      %v5175 = vadd.f32 0.0, %v5174
      %v5176 = vpop.f32.mrb[0].mxu0
      %5177 = vmatprep.mubr.bf16.mxu0 0
      %5178 = vmatmul.mubr.bf16.gmra.mrb[0].mxu0 %v5079
      %v5179 = vpop.f32.mrb[0].mxu0
      %v5180 = vadd.f32 0.0, %v5179
      %v5181 = vpop.f32.mrb[0].mxu0
      %v5182 = vpop.f32.mrb[0].mxu0
      %v5183 = vadd.f32 0.0, %v5182
      %v5184 = vpop.f32.mrb[0].mxu0
      %5185 = vdwg.mxu0
      %v5186 = vadd.f32 %v4848, %v5116
      %v5187 = vadd.f32 %v4849, %v5119
      %v5188 = vadd.f32 %v4850, %v5124
      %v5189 = vadd.f32 %v4851, %v5127
      %v5190 = vadd.f32 %v4852, %v5132
      %v5191 = vadd.f32 %v4853, %v5135
      %v5192 = vadd.f32 %v4854, %v5140
      %v5193 = vadd.f32 %v4855, %v5143
      %v5194 = vadd.f32 %v4856, %v5148
      %v5195 = vadd.f32 %v4857, %v5151
      %v5196 = vadd.f32 %v4858, %v5156
      %v5197 = vadd.f32 %v4859, %v5159
      %v5198 = vadd.f32 %v4860, %v5164
      %v5199 = vadd.f32 %v4861, %v5167
      %v5200 = vadd.f32 %v4862, %v5172
      %v5201 = vadd.f32 %v4863, %v5175
      %v5202 = vadd.f32 %v4864, %v5180
      %v5203 = vadd.f32 %v4865, %v5183
      %v5204 = vld [vmem:[#allocation2 + $0x14] sm:$0xc]
      %v5205 = vld [vmem:[%s3 + $0xe0] sm:$0xf]
      %v5206 = vld [vmem:[%s3 + $0xe4] sm:$0xf]
      %v5207 = vld [vmem:[%s3 + $0xe8] sm:$0xf]
      %v5208 = vld [vmem:[%s3 + $0xec] sm:$0xf]
      %v5209 = vld [vmem:[%s3 + $0xf0] sm:$0xf]
      %v5210 = vld [vmem:[%s3 + $0xf4] sm:$0xf]
      %v5211 = vld [vmem:[%s3 + $0xf8] sm:$0xf]
      %v5212 = vld [vmem:[%s3 + $0xfc] sm:$0xf]
      %v5214 = vunpack.c.l.b16 %v5204
      %v5215 = vpack.c.b16 %v4913, %v5214
      %v5216 = vrot.slane %v5215, 2
      %v5217 = vrot.slane %v4932, 2
      %v5218 = vsel %vm1797, %v5216, %v5217
      %v5219 = vrot.slane %v4933, 2
      %v5220 = vsel %vm1797, %v5217, %v5219
      %v5221 = vrot.slane %v4934, 2
      %v5222 = vsel %vm1797, %v5219, %v5221
      %v5223 = vrot.slane %v4935, 2
      %v5224 = vsel %vm1797, %v5221, %v5223
      %v5225 = vrot.slane %v4936, 2
      %v5226 = vsel %vm1797, %v5223, %v5225
      %v5227 = vrot.slane %v4937, 2
      %v5228 = vsel %vm1797, %v5225, %v5227
      %v5229 = vrot.slane %v4938, 2
      %v5230 = vsel %vm1797, %v5227, %v5229
      %v5231 = vrot.slane %v4939, 2
      %v5232 = vsel %vm1797, %v5229, %v5231
      %v5233 = vrot.slane %v4940, 2
      %v5234 = vsel %vm1797, %v5231, %v5233
      %v5243 = vunpack.c.l.b16 %v5205
      %v5244 = vunpack.c.l.b16 %v5206
      %v5245 = vunpack.c.l.b16 %v5207
      %v5246 = vunpack.c.l.b16 %v5208
      %v5247 = vunpack.c.l.b16 %v5209
      %v5248 = vunpack.c.l.b16 %v5210
      %v5249 = vunpack.c.l.b16 %v5211
      %v5250 = vunpack.c.l.b16 %v5212
      %v5251 = vpack.c.b16 %v5244, %v5243
      %v5252 = vpack.c.b16 %v5246, %v5245
      %v5253 = vpack.c.b16 %v5248, %v5247
      %v5254 = vpack.c.b16 %v5250, %v5249
      %v5260 = vsel %vm3385, %v5218, 0
      %v5263 = vsel %vm3385, %v5220, 0
      %v5266 = vsel %vm3385, %v5222, 0
      %v5269 = vsel %vm3385, %v5224, 0
      %v5272 = vsel %vm3385, %v5226, 0
      %v5275 = vsel %vm3385, %v5228, 0
      %v5278 = vsel %vm3385, %v5230, 0
      %v5281 = vsel %vm3385, %v5232, 0
      %v5284 = vsel %vm3385, %v5234, 0
      %5286 = vmatprep.subr.bf16.mxu0 0
      %5287 = vmatpush1.bf16.msra.mxu0 %v5251
      %5288 = vmatprep.subr.bf16.mxu0 0
      %5289 = vmatpush1.bf16.msra.mxu0 %v5252
      %5290 = vmatprep.subr.bf16.mxu0 0
      %5291 = vmatpush1.bf16.msra.mxu0 %v5253
      %5292 = vmatprep.subr.bf16.mxu0 0
      %5293 = vmatpush1.bf16.msra.mxu0 %v5254
      %5294 = vmatprep.subr.bf16.mxu0 0
      %5295 = vmatpush1.bf16.msra.mxu0 0
      %5296 = vmatprep.subr.bf16.mxu0 0
      %5297 = vmatpush1.bf16.msra.mxu0 0
      %5298 = vmatprep.subr.bf16.mxu0 0
      %5299 = vmatpush1.bf16.msra.mxu0 0
      %5300 = vmatprep.subr.bf16.mxu0 0
      %5301 = vmatpush1.bf16.msra.mxu0 0
      %5302 = vmatprep.subr.bf16.mxu0 0
      %5303 = vmatpush1.bf16.msra.mxu0 0
      %5304 = vmatprep.subr.bf16.mxu0 0
      %5305 = vmatpush1.bf16.msra.mxu0 0
      %5306 = vmatprep.subr.bf16.mxu0 0
      %5307 = vmatpush1.bf16.msra.mxu0 0
      %5308 = vmatprep.subr.bf16.mxu0 0
      %5309 = vmatpush1.bf16.msra.mxu0 0
      %5310 = vmatprep.subr.bf16.mxu0 0
      %5311 = vmatpush1.bf16.msra.mxu0 0
      %5312 = vmatprep.subr.bf16.mxu0 0
      %5313 = vmatpush1.bf16.msra.mxu0 0
      %5314 = vmatprep.subr.bf16.mxu0 0
      %5315 = vmatpush1.bf16.msra.mxu0 0
      %5316 = vmatprep.subr.bf16.mxu0 0
      %5317 = vmatpush1.bf16.msra.mxu0 0
      %5318 = vmatprep.mubr.bf16.mxu0 0
      %5319 = vmatmul.mubr.bf16.gmra.mrb[0].mxu0 %v5260
      %v5320 = vpop.f32.mrb[0].mxu0
      %v5321 = vadd.f32 0.0, %v5320
      %v5322 = vpop.f32.mrb[0].mxu0
      %v5323 = vpop.f32.mrb[0].mxu0
      %v5324 = vadd.f32 0.0, %v5323
      %v5325 = vpop.f32.mrb[0].mxu0
      %5326 = vmatprep.mubr.bf16.mxu0 0
      %5327 = vmatmul.mubr.bf16.gmra.mrb[0].mxu0 %v5263
      %v5328 = vpop.f32.mrb[0].mxu0
      %v5329 = vadd.f32 0.0, %v5328
      %v5330 = vpop.f32.mrb[0].mxu0
      %v5331 = vpop.f32.mrb[0].mxu0
      %v5332 = vadd.f32 0.0, %v5331
      %v5333 = vpop.f32.mrb[0].mxu0
      %5334 = vmatprep.mubr.bf16.mxu0 0
      %5335 = vmatmul.mubr.bf16.gmra.mrb[0].mxu0 %v5266
      %v5336 = vpop.f32.mrb[0].mxu0
      %v5337 = vadd.f32 0.0, %v5336
      %v5338 = vpop.f32.mrb[0].mxu0
      %v5339 = vpop.f32.mrb[0].mxu0
      %v5340 = vadd.f32 0.0, %v5339
      %v5341 = vpop.f32.mrb[0].mxu0
      %5342 = vmatprep.mubr.bf16.mxu0 0
      %5343 = vmatmul.mubr.bf16.gmra.mrb[0].mxu0 %v5269
      %v5344 = vpop.f32.mrb[0].mxu0
      %v5345 = vadd.f32 0.0, %v5344
      %v5346 = vpop.f32.mrb[0].mxu0
      %v5347 = vpop.f32.mrb[0].mxu0
      %v5348 = vadd.f32 0.0, %v5347
      %v5349 = vpop.f32.mrb[0].mxu0
      %5350 = vmatprep.mubr.bf16.mxu0 0
      %5351 = vmatmul.mubr.bf16.gmra.mrb[0].mxu0 %v5272
      %v5352 = vpop.f32.mrb[0].mxu0
      %v5353 = vadd.f32 0.0, %v5352
      %v5354 = vpop.f32.mrb[0].mxu0
      %v5355 = vpop.f32.mrb[0].mxu0
      %v5356 = vadd.f32 0.0, %v5355
      %v5357 = vpop.f32.mrb[0].mxu0
      %5358 = vmatprep.mubr.bf16.mxu0 0
      %5359 = vmatmul.mubr.bf16.gmra.mrb[0].mxu0 %v5275
      %v5360 = vpop.f32.mrb[0].mxu0
      %v5361 = vadd.f32 0.0, %v5360
      %v5362 = vpop.f32.mrb[0].mxu0
      %v5363 = vpop.f32.mrb[0].mxu0
      %v5364 = vadd.f32 0.0, %v5363
      %v5365 = vpop.f32.mrb[0].mxu0
      %5366 = vmatprep.mubr.bf16.mxu0 0
      %5367 = vmatmul.mubr.bf16.gmra.mrb[0].mxu0 %v5278
      %v5368 = vpop.f32.mrb[0].mxu0
      %v5369 = vadd.f32 0.0, %v5368
      %v5370 = vpop.f32.mrb[0].mxu0
      %v5371 = vpop.f32.mrb[0].mxu0
      %v5372 = vadd.f32 0.0, %v5371
      %v5373 = vpop.f32.mrb[0].mxu0
      %5374 = vmatprep.mubr.bf16.mxu0 0
      %5375 = vmatmul.mubr.bf16.gmra.mrb[0].mxu0 %v5281
      %v5376 = vpop.f32.mrb[0].mxu0
      %v5377 = vadd.f32 0.0, %v5376
      %v5378 = vpop.f32.mrb[0].mxu0
      %v5379 = vpop.f32.mrb[0].mxu0
      %v5380 = vadd.f32 0.0, %v5379
      %v5381 = vpop.f32.mrb[0].mxu0
      %5382 = vmatprep.mubr.bf16.mxu0 0
      %5383 = vmatmul.mubr.bf16.gmra.mrb[0].mxu0 %v5284
      %v5384 = vpop.f32.mrb[0].mxu0
      %v5385 = vadd.f32 0.0, %v5384
      %v5386 = vpop.f32.mrb[0].mxu0
      %v5387 = vpop.f32.mrb[0].mxu0
      %v5388 = vadd.f32 0.0, %v5387
      %v5389 = vpop.f32.mrb[0].mxu0
      %5390 = vdwg.mxu0
      %v5391 = vadd.f32 %v5186, %v5321
      %v5392 = vadd.f32 %v5187, %v5324
      %v5393 = vadd.f32 %v5188, %v5329
      %v5394 = vadd.f32 %v5189, %v5332
      %v5395 = vadd.f32 %v5190, %v5337
      %v5396 = vadd.f32 %v5191, %v5340
      %v5397 = vadd.f32 %v5192, %v5345
      %v5398 = vadd.f32 %v5193, %v5348
      %v5399 = vadd.f32 %v5194, %v5353
      %v5400 = vadd.f32 %v5195, %v5356
      %v5401 = vadd.f32 %v5196, %v5361
      %v5402 = vadd.f32 %v5197, %v5364
      %v5403 = vadd.f32 %v5198, %v5369
      %v5404 = vadd.f32 %v5199, %v5372
      %v5405 = vadd.f32 %v5200, %v5377
      %v5406 = vadd.f32 %v5201, %v5380
      %v5407 = vadd.f32 %v5202, %v5385
      %v5408 = vadd.f32 %v5203, %v5388
      %v5409 = vld [vmem:[#allocation2 + $0x5c] sm:$0x7]
      %v5410 = vld [vmem:[%s3 + $0x100] sm:$0xf]
      %v5411 = vld [vmem:[%s3 + $0x104] sm:$0xf]
      %v5412 = vld [vmem:[%s3 + $0x108] sm:$0xf]
      %v5413 = vld [vmem:[%s3 + $0x10c] sm:$0xf]
      %v5414 = vld [vmem:[%s3 + $0x110] sm:$0xf]
      %v5415 = vld [vmem:[%s3 + $0x114] sm:$0xf]
      %v5416 = vld [vmem:[%s3 + $0x118] sm:$0xf]
      %v5417 = vld [vmem:[%s3 + $0x11c] sm:$0xf]
      %v5419 = vunpack.c.l.b16 %v5409
      %v5420 = vpack.c.b16 %v5419, %v5419
      %v5422 = vshrl.u32 %v5215, 16
      %v5424 = vrot.slane %v5422, 2
      %v5425 = vshll.u32 %v5215, 16
      %v5427 = vrot.slane %v5425, 3
      %v5428 = vor.u32 %v5424, %v5427
      %v5429 = vrot.slane %v4950, 2
      %v5430 = vrot.slane %v4953, 3
      %v5431 = vor.u32 %v5429, %v5430
      %v5432 = vsel %vm2463, %v5428, %v5431
      %v5433 = vrot.slane %v4959, 2
      %v5434 = vrot.slane %v4962, 3
      %v5435 = vor.u32 %v5433, %v5434
      %v5436 = vsel %vm2463, %v5431, %v5435
      %v5437 = vrot.slane %v4968, 2
      %v5438 = vrot.slane %v4971, 3
      %v5439 = vor.u32 %v5437, %v5438
      %v5440 = vsel %vm2463, %v5435, %v5439
      %v5441 = vrot.slane %v4977, 2
      %v5442 = vrot.slane %v4980, 3
      %v5443 = vor.u32 %v5441, %v5442
      %v5444 = vsel %vm2463, %v5439, %v5443
      %v5445 = vrot.slane %v4986, 2
      %v5446 = vrot.slane %v4989, 3
      %v5447 = vor.u32 %v5445, %v5446
      %v5448 = vsel %vm2463, %v5443, %v5447
      %v5449 = vrot.slane %v4995, 2
      %v5450 = vrot.slane %v4998, 3
      %v5451 = vor.u32 %v5449, %v5450
      %v5452 = vsel %vm2463, %v5447, %v5451
      %v5453 = vrot.slane %v5004, 2
      %v5454 = vrot.slane %v5007, 3
      %v5455 = vor.u32 %v5453, %v5454
      %v5456 = vsel %vm2463, %v5451, %v5455
      %v5457 = vrot.slane %v5013, 2
      %v5458 = vrot.slane %v5016, 3
      %v5459 = vor.u32 %v5457, %v5458
      %v5460 = vsel %vm2463, %v5455, %v5459
      %v5462 = vshrl.u32 %v5420, 16
      %v5464 = vrot.slane %v5462, 2
      %v5465 = vshll.u32 %v5420, 16
      %v5467 = vrot.slane %v5465, 3
      %v5468 = vor.u32 %v5464, %v5467
      %v5469 = vsel %vm2463, %v5459, %v5468
      %v5478 = vunpack.c.l.b16 %v5410
      %v5479 = vunpack.c.l.b16 %v5411
      %v5480 = vunpack.c.l.b16 %v5412
      %v5481 = vunpack.c.l.b16 %v5413
      %v5482 = vunpack.c.l.b16 %v5414
      %v5483 = vunpack.c.l.b16 %v5415
      %v5484 = vunpack.c.l.b16 %v5416
      %v5485 = vunpack.c.l.b16 %v5417
      %v5486 = vpack.c.b16 %v5479, %v5478
      %v5487 = vpack.c.b16 %v5481, %v5480
      %v5488 = vpack.c.b16 %v5483, %v5482
      %v5489 = vpack.c.b16 %v5485, %v5484
      %v5495 = vsel %vm3385, %v5432, 0
      %v5498 = vsel %vm3385, %v5436, 0
      %v5501 = vsel %vm3385, %v5440, 0
      %v5504 = vsel %vm3385, %v5444, 0
      %v5507 = vsel %vm3385, %v5448, 0
      %v5510 = vsel %vm3385, %v5452, 0
      %v5513 = vsel %vm3385, %v5456, 0
      %v5516 = vsel %vm3385, %v5460, 0
      %v5519 = vsel %vm3385, %v5469, 0
      %5521 = vmatprep.subr.bf16.mxu0 0
      %5522 = vmatpush1.bf16.msra.mxu0 %v5486
      %5523 = vmatprep.subr.bf16.mxu0 0
      %5524 = vmatpush1.bf16.msra.mxu0 %v5487
      %5525 = vmatprep.subr.bf16.mxu0 0
      %5526 = vmatpush1.bf16.msra.mxu0 %v5488
      %5527 = vmatprep.subr.bf16.mxu0 0
      %5528 = vmatpush1.bf16.msra.mxu0 %v5489
      %5529 = vmatprep.subr.bf16.mxu0 0
      %5530 = vmatpush1.bf16.msra.mxu0 0
      %5531 = vmatprep.subr.bf16.mxu0 0
      %5532 = vmatpush1.bf16.msra.mxu0 0
      %5533 = vmatprep.subr.bf16.mxu0 0
      %5534 = vmatpush1.bf16.msra.mxu0 0
      %5535 = vmatprep.subr.bf16.mxu0 0
      %5536 = vmatpush1.bf16.msra.mxu0 0
      %5537 = vmatprep.subr.bf16.mxu0 0
      %5538 = vmatpush1.bf16.msra.mxu0 0
      %5539 = vmatprep.subr.bf16.mxu0 0
      %5540 = vmatpush1.bf16.msra.mxu0 0
      %5541 = vmatprep.subr.bf16.mxu0 0
      %5542 = vmatpush1.bf16.msra.mxu0 0
      %5543 = vmatprep.subr.bf16.mxu0 0
      %5544 = vmatpush1.bf16.msra.mxu0 0
      %5545 = vmatprep.subr.bf16.mxu0 0
      %5546 = vmatpush1.bf16.msra.mxu0 0
      %5547 = vmatprep.subr.bf16.mxu0 0
      %5548 = vmatpush1.bf16.msra.mxu0 0
      %5549 = vmatprep.subr.bf16.mxu0 0
      %5550 = vmatpush1.bf16.msra.mxu0 0
      %5551 = vmatprep.subr.bf16.mxu0 0
      %5552 = vmatpush1.bf16.msra.mxu0 0
      %5553 = vmatprep.mubr.bf16.mxu0 0
      %5554 = vmatmul.mubr.bf16.gmra.mrb[0].mxu0 %v5495
      %v5555 = vpop.f32.mrb[0].mxu0
      %v5556 = vadd.f32 0.0, %v5555
      %v5557 = vpop.f32.mrb[0].mxu0
      %v5558 = vpop.f32.mrb[0].mxu0
      %v5559 = vadd.f32 0.0, %v5558
      %v5560 = vpop.f32.mrb[0].mxu0
      %5561 = vmatprep.mubr.bf16.mxu0 0
      %5562 = vmatmul.mubr.bf16.gmra.mrb[0].mxu0 %v5498
      %v5563 = vpop.f32.mrb[0].mxu0
      %v5564 = vadd.f32 0.0, %v5563
      %v5565 = vpop.f32.mrb[0].mxu0
      %v5566 = vpop.f32.mrb[0].mxu0
      %v5567 = vadd.f32 0.0, %v5566
      %v5568 = vpop.f32.mrb[0].mxu0
      %5569 = vmatprep.mubr.bf16.mxu0 0
      %5570 = vmatmul.mubr.bf16.gmra.mrb[0].mxu0 %v5501
      %v5571 = vpop.f32.mrb[0].mxu0
      %v5572 = vadd.f32 0.0, %v5571
      %v5573 = vpop.f32.mrb[0].mxu0
      %v5574 = vpop.f32.mrb[0].mxu0
      %v5575 = vadd.f32 0.0, %v5574
      %v5576 = vpop.f32.mrb[0].mxu0
      %5577 = vmatprep.mubr.bf16.mxu0 0
      %5578 = vmatmul.mubr.bf16.gmra.mrb[0].mxu0 %v5504
      %v5579 = vpop.f32.mrb[0].mxu0
      %v5580 = vadd.f32 0.0, %v5579
      %v5581 = vpop.f32.mrb[0].mxu0
      %v5582 = vpop.f32.mrb[0].mxu0
      %v5583 = vadd.f32 0.0, %v5582
      %v5584 = vpop.f32.mrb[0].mxu0
      %5585 = vmatprep.mubr.bf16.mxu0 0
      %5586 = vmatmul.mubr.bf16.gmra.mrb[0].mxu0 %v5507
      %v5587 = vpop.f32.mrb[0].mxu0
      %v5588 = vadd.f32 0.0, %v5587
      %v5589 = vpop.f32.mrb[0].mxu0
      %v5590 = vpop.f32.mrb[0].mxu0
      %v5591 = vadd.f32 0.0, %v5590
      %v5592 = vpop.f32.mrb[0].mxu0
      %5593 = vmatprep.mubr.bf16.mxu0 0
      %5594 = vmatmul.mubr.bf16.gmra.mrb[0].mxu0 %v5510
      %v5595 = vpop.f32.mrb[0].mxu0
      %v5596 = vadd.f32 0.0, %v5595
      %v5597 = vpop.f32.mrb[0].mxu0
      %v5598 = vpop.f32.mrb[0].mxu0
      %v5599 = vadd.f32 0.0, %v5598
      %v5600 = vpop.f32.mrb[0].mxu0
      %5601 = vmatprep.mubr.bf16.mxu0 0
      %5602 = vmatmul.mubr.bf16.gmra.mrb[0].mxu0 %v5513
      %v5603 = vpop.f32.mrb[0].mxu0
      %v5604 = vadd.f32 0.0, %v5603
      %v5605 = vpop.f32.mrb[0].mxu0
      %v5606 = vpop.f32.mrb[0].mxu0
      %v5607 = vadd.f32 0.0, %v5606
      %v5608 = vpop.f32.mrb[0].mxu0
      %5609 = vmatprep.mubr.bf16.mxu0 0
      %5610 = vmatmul.mubr.bf16.gmra.mrb[0].mxu0 %v5516
      %v5611 = vpop.f32.mrb[0].mxu0
      %v5612 = vadd.f32 0.0, %v5611
      %v5613 = vpop.f32.mrb[0].mxu0
      %v5614 = vpop.f32.mrb[0].mxu0
      %v5615 = vadd.f32 0.0, %v5614
      %v5616 = vpop.f32.mrb[0].mxu0
      %5617 = vmatprep.mubr.bf16.mxu0 0
      %5618 = vmatmul.mubr.bf16.gmra.mrb[0].mxu0 %v5519
      %v5619 = vpop.f32.mrb[0].mxu0
      %v5620 = vadd.f32 0.0, %v5619
      %v5621 = vpop.f32.mrb[0].mxu0
      %v5622 = vpop.f32.mrb[0].mxu0
      %v5623 = vadd.f32 0.0, %v5622
      %v5624 = vpop.f32.mrb[0].mxu0
      %5625 = vdwg.mxu0
      %v5626 = vadd.f32 %v5391, %v5556
      %v5627 = vadd.f32 %v5392, %v5559
      %v5628 = vadd.f32 %v5393, %v5564
      %v5629 = vadd.f32 %v5394, %v5567
      %v5630 = vadd.f32 %v5395, %v5572
      %v5631 = vadd.f32 %v5396, %v5575
      %v5632 = vadd.f32 %v5397, %v5580
      %v5633 = vadd.f32 %v5398, %v5583
      %v5634 = vadd.f32 %v5399, %v5588
      %v5635 = vadd.f32 %v5400, %v5591
      %v5636 = vadd.f32 %v5401, %v5596
      %v5637 = vadd.f32 %v5402, %v5599
      %v5638 = vadd.f32 %v5403, %v5604
      %v5639 = vadd.f32 %v5404, %v5607
      %v5640 = vadd.f32 %v5405, %v5612
      %v5641 = vadd.f32 %v5406, %v5615
      %v5642 = vadd.f32 %v5407, %v5620
      %v5643 = vadd.f32 %v5408, %v5623
      %v5644 = vld [vmem:[%s4] sm:$0x1]
      %v5646 = vlaneseq
      %v5647 = vshrl.u32 %v5646, 7
      %v5648 = vsub.s32 0, %v5647
      %v5649 = vrot.slane %v5644, %v5648
      %v5651 = vadd.f32 %v5626, %v5649
      %v5652 = vadd.f32 %v5627, %v5649
      %v5653 = vadd.f32 %v5628, %v5649
      %v5654 = vadd.f32 %v5629, %v5649
      %v5655 = vadd.f32 %v5630, %v5649
      %v5656 = vadd.f32 %v5631, %v5649
      %v5657 = vadd.f32 %v5632, %v5649
      %v5658 = vadd.f32 %v5633, %v5649
      %v5659 = vadd.f32 %v5634, %v5649
      %v5660 = vadd.f32 %v5635, %v5649
      %v5661 = vadd.f32 %v5636, %v5649
      %v5662 = vadd.f32 %v5637, %v5649
      %v5663 = vadd.f32 %v5638, %v5649
      %v5664 = vadd.f32 %v5639, %v5649
      %v5665 = vadd.f32 %v5640, %v5649
      %v5666 = vadd.f32 %v5641, %v5649
      %v5667 = vadd.f32 %v5642, %v5649
      %v5668 = vadd.f32 %v5643, %v5649
      %v5669 = vmax.f32 %v5651, 0.0
      %v5670 = vmax.f32 %v5652, 0.0
      %v5671 = vmax.f32 %v5653, 0.0
      %v5672 = vmax.f32 %v5654, 0.0
      %v5673 = vmax.f32 %v5655, 0.0
      %v5674 = vmax.f32 %v5656, 0.0
      %v5675 = vmax.f32 %v5657, 0.0
      %v5676 = vmax.f32 %v5658, 0.0
      %v5677 = vmax.f32 %v5659, 0.0
      %v5678 = vmax.f32 %v5660, 0.0
      %v5679 = vmax.f32 %v5661, 0.0
      %v5680 = vmax.f32 %v5662, 0.0
      %v5681 = vmax.f32 %v5663, 0.0
      %v5682 = vmax.f32 %v5664, 0.0
      %v5683 = vmax.f32 %v5665, 0.0
      %v5684 = vmax.f32 %v5666, 0.0
      %v5685 = vmax.f32 %v5667, 0.0
      %v5686 = vmax.f32 %v5668, 0.0
      %v5687 = vpack.c.bf16 %v5670, %v5669
      %v5688 = vpack.c.bf16 %v5672, %v5671
      %v5689 = vpack.c.bf16 %v5674, %v5673
      %v5690 = vpack.c.bf16 %v5676, %v5675
      %v5691 = vpack.c.bf16 %v5678, %v5677
      %v5692 = vpack.c.bf16 %v5680, %v5679
      %v5693 = vpack.c.bf16 %v5682, %v5681
      %v5694 = vpack.c.bf16 %v5684, %v5683
      %v5695 = vpack.c.bf16 %v5686, %v5685
      %v5705 = vunpack.c.l.b16 %v5687
      %v5706 = vunpack.c.h.b16 %v5687
      %v5707 = vunpack.c.l.b16 %v5688
      %v5708 = vunpack.c.h.b16 %v5688
      %v5709 = vunpack.c.l.b16 %v5689
      %v5710 = vunpack.c.h.b16 %v5689
      %v5711 = vunpack.c.l.b16 %v5690
      %v5712 = vunpack.c.h.b16 %v5690
      %v5713 = vunpack.c.l.b16 %v5691
      %v5714 = vunpack.c.h.b16 %v5691
      %v5715 = vunpack.c.l.b16 %v5692
      %v5716 = vunpack.c.h.b16 %v5692
      %v5717 = vunpack.c.l.b16 %v5693
      %v5718 = vunpack.c.h.b16 %v5693
      %v5719 = vunpack.c.l.b16 %v5694
      %v5720 = vunpack.c.h.b16 %v5694
      %v5721 = vunpack.c.l.b16 %v5695
      %v5722 = vunpack.c.h.b16 %v5695
      %v5723 = vpack.c.b16 %v5705, %v5705
      %v5724 = vpack.c.b16 %v5706, %v5706
      %v5725 = vpack.c.b16 %v5707, %v5707
      %v5726 = vpack.c.b16 %v5708, %v5708
      %v5727 = vpack.c.b16 %v5709, %v5709
      %v5728 = vpack.c.b16 %v5710, %v5710
      %v5729 = vpack.c.b16 %v5711, %v5711
      %v5730 = vpack.c.b16 %v5712, %v5712
      %v5731 = vpack.c.b16 %v5713, %v5713
      %v5732 = vpack.c.b16 %v5714, %v5714
      %v5733 = vpack.c.b16 %v5715, %v5715
      %v5734 = vpack.c.b16 %v5716, %v5716
      %v5735 = vpack.c.b16 %v5717, %v5717
      %v5736 = vpack.c.b16 %v5718, %v5718
      %v5737 = vpack.c.b16 %v5719, %v5719
      %v5738 = vpack.c.b16 %v5720, %v5720
      %v5739 = vpack.c.b16 %v5721, %v5721
      %v5740 = vpack.c.b16 %v5722, %v5722
      %5759 = vst.msk [vmem:[%s260] sm:$0xf] %vm3183, %v5723
      %5760 = vst.msk [vmem:[%s260 + $0x4] sm:$0xf] %vm3183, %v5724
      %5761 = vst.msk [vmem:[%s260 + $0x8] sm:$0xf] %vm3183, %v5725
      %5762 = vst.msk [vmem:[%s260 + $0xc] sm:$0xf] %vm3183, %v5726
      %5763 = vst.msk [vmem:[%s260 + $0x10] sm:$0xf] %vm3183, %v5727
      %5764 = vst.msk [vmem:[%s260 + $0x14] sm:$0xf] %vm3183, %v5728
      %5765 = vst.msk [vmem:[%s260 + $0x18] sm:$0xf] %vm3183, %v5729
      %5766 = vst.msk [vmem:[%s260 + $0x1c] sm:$0xf] %vm3183, %v5730
      %5767 = vst.msk [vmem:[%s260 + $0x20] sm:$0xf] %vm3183, %v5731
      %5768 = vst.msk [vmem:[%s260 + $0x24] sm:$0xf] %vm3183, %v5732
      %5769 = vst.msk [vmem:[%s260 + $0x28] sm:$0xf] %vm3183, %v5733
      %5770 = vst.msk [vmem:[%s260 + $0x2c] sm:$0xf] %vm3183, %v5734
      %5771 = vst.msk [vmem:[%s260 + $0x30] sm:$0xf] %vm3183, %v5735
      %5772 = vst.msk [vmem:[%s260 + $0x34] sm:$0xf] %vm3183, %v5736
      %5773 = vst.msk [vmem:[%s260 + $0x38] sm:$0xf] %vm3183, %v5737
      %5774 = vst.msk [vmem:[%s260 + $0x3c] sm:$0xf] %vm3183, %v5738
      %5775 = vst.msk [vmem:[%s260 + $0x40] sm:$0xf] %vm3183, %v5739
      %5776 = vst.msk [vmem:[%s260 + $0x44] sm:$0xf] %vm3183, %v5740
      %s5777 = smul.u32 18, %s21
      %p5778 = scmp.lt.s32.totalorder %s20, 1
      %s5779 = scalar_select %p5778, %s20, 1
      %p5780 = scmp.lt.s32.totalorder %s5777, 35
      %s5781 = scalar_select %p5780, %s5777, 35
      %s5782 = smul.addr %s5779, 36
      %s5783 = sadd.s32 %s5781, %s5782
      %s5784 = smul.addr %s5783, 4
      %s5785 = scalar_lea.vmem %s5, %s5784
      // Predicated region
      $region49: #{up_forward.1} parent=39 // pred_check
        %p5786 = pneg %p160
      $region50: #{up_forward.1} parent=39 // pred_check_branch
        %5788 = sbr.rel (%p5786) target = $region52
      $region51: #{up_forward.1} parent=39 // pred_region
        %s5789 = smul.u32 18, %s21
      $region52: #{up_forward.1} parent=39 // pred_fallthru
        _
    $region40: #{up_forward.1} parent=5 // pred_fallthru
      _
    %p5790 = scmp.le.s32.totalorder 2, %s11
    // Predicated region
    $region53: #{up_forward.1} parent=5 // pred_check
      %p5791 = pneg %p5790
    $region54: #{up_forward.1} parent=5 // pred_check_branch
      %5793 = sbr.rel (%p5791) target = $region56
    $region55: #{up_forward.1} parent=5 // pred_region
      %s5794 = ssub.s32 %s11, 2
      // Predicated region
      $region57: #{up_forward.1} parent=55 // pred_check
        %p5795 = pneg %p166
      $region58: #{up_forward.1} parent=55 // pred_check_branch
        %5797 = sbr.rel (%p5795) target = $region60
      $region59: #{up_forward.1} parent=55 // pred_region
        %s5798 = smul.u32 18, %s23
        %p5799 = scmp.lt.s32.totalorder %s22, 1
        %s5800 = scalar_select %p5799, %s22, 1
        %p5801 = scmp.lt.s32.totalorder %s5798, 35
        %s5802 = scalar_select %p5801, %s5798, 35
        %s5803 = smul.addr %s5800, 36
        %s5804 = sadd.s32 %s5802, %s5803
        %s5805 = smul.addr %s5804, 4
        %s5806 = scalar_lea.vmem %s5, %s5805
      $region60: #{up_forward.1} parent=55 // pred_fallthru
        _
    $region56: #{up_forward.1} parent=5 // pred_fallthru
      _
  $region6: #{up_forward.1} parent=0 // loop_footer
    %s15 = sadd.s32 1, %s11
  $region7: #{up_forward.1} parent=0 // loop_footer_branch
    %10 = sbr.rel target = $region3
  $region8: #{up_forward.1} parent=0 // loop_exit
    _

</llo_original>
